<compile_context>
chip_gen: v7x
topology: tpu7x:2x2x1
jax: 0.10.0
libtpu: 0.0.40
codegen_flags: <defaults>
</compile_context>

<pallas_src>
import jax
import jax.numpy as jnp
from jax import lax
from jax.experimental import pallas as pl
from jax.experimental.pallas import tpu as pltpu

# ---------------- static config (small synthetic DY_Block) ----------------
# DynamicInvertedResidualConfig(input=8, kernel=3, expanded=16, out=8,
#                               use_dy_block=True, activation='HS',
#                               stride=1, dilation=1, width_mult=1.0)
B = 2
C_IN = 8
C_EXP = 16
C_OUT = 8
F = 16
T = 16
FT = F * T
KS = 3
CD = 32          # context_dim = clip(make_divisible(16//4, 8)=8, 32, 128) = 32
K = 4            # dyconv_k
M = 2            # dyrelu_k
TEMP = 30.0      # temperature T_max for the kernel-attention softmax
EPS = 1e-3       # BatchNorm eps
USE_RES = True   # stride == 1 and C_IN == C_OUT

# ---- packed-operand row offsets (shared by the host packer and the kernel) ----
# expander / mask bundle `emm` : rows x FT
EMP_OFF = 0                      # mean-pool expanders (1/T, 1/F folded in)
EMB_OFF = F + T                  # 0/1 broadcast expanders for CoordAtt
DWM_OFF = 2 * (F + T)            # 9 depthwise halo masks
EMM_ROWS = 80                    # 2*(F+T) + 9 = 73, padded to a multiple of 8

# weight matrix bundle `wmat` : rows x WMAT_COLS
WMAT_COLS = 64
WJBLK_OFF = 0                                 # block-diag joint conv   (B*CD, B*C_IN)
WFTBLK_OFF = WJBLK_OFF + B * CD               # block-diag [w_f;w_t]    (B*2*C_EXP, B*CD)
WAC_OFF = WFTBLK_OFF + B * 2 * C_EXP          # att(4K pad) + coef rows (NAC, CD)
NAC = 4 * K + 2 * M * C_EXP
BEXP_OFF = WAC_OFF + NAC                      # expansion bank  (K*C_EXP, C_IN)
BDW_OFF = BEXP_OFF + K * C_EXP                # depthwise bank  (K*C_EXP, 9)
BPJ_OFF = BDW_OFF + K * C_EXP                 # projection bank (K*C_OUT, C_EXP)
WMAT_ROWS = BPJ_OFF + K * C_OUT               # 368

# column-bias bundle `colb` : rows x 1
TJ2_OFF = 0                                   # joint BN bias, tiled xB
BFT2_OFF = TJ2_OFF + B * CD                   # [b_f; b_t], tiled xB
ACB_OFF = BFT2_OFF + B * 2 * C_EXP            # att bias (4K pad) + coef bias
TEXP_OFF = ACB_OFF + NAC                      # expansion BN bias
TDW2_OFF = TEXP_OFF + C_EXP                   # depthwise BN bias, tiled xB
TPJ_OFF = TDW2_OFF + B * C_EXP                # projection BN bias
COLB_ROWS = TPJ_OFF + C_OUT                   # 264


def hardswish(x):
    return x * jnp.clip(x + 3.0, 0.0, 6.0) * (1.0 / 6.0)


# ------------------------------ Pallas kernel -------------------------------
def dy_block_kernel(x_ref, emm_ref, wmat_ref, colb_ref, o_ref):
    f32 = jnp.float32
    x_all = x_ref[...]                                          # (B*C_IN, FT)

    # ---- ContextGen pooling for both batches in ONE MXU contraction ----
    emp = emm_ref[EMP_OFF:EMP_OFF + F + T, :]                   # scaled expanders
    g_cat = lax.dot_general(x_all, emp, (((1,), (1,)), ((), ())),
                            preferred_element_type=f32)         # (B*C_IN, F+T)

    # ---- joint 1x1 conv (batch-block-diag, BN folded) + Hardswish ----
    g1 = jnp.dot(wmat_ref[WJBLK_OFF:WJBLK_OFF + B * CD, 0:B * C_IN], g_cat,
                 preferred_element_type=f32)
    g1 = hardswish(g1 + colb_ref[TJ2_OFF:TJ2_OFF + B * CD, :])  # (B*CD, F+T)

    # ---- coord-attention heads: ONE matmul + ONE sigmoid (f/t heads x batches) ----
    aft = jnp.dot(wmat_ref[WFTBLK_OFF:WFTBLK_OFF + 2 * B * C_EXP, 0:B * CD], g1,
                  preferred_element_type=f32)
    aft = jax.nn.sigmoid(aft + colb_ref[BFT2_OFF:BFT2_OFF + 2 * B * C_EXP, :])
    a_f = jnp.concatenate(
        [aft[b * 2 * C_EXP:b * 2 * C_EXP + C_EXP, 0:F] for b in range(B)], axis=0)
    a_t = jnp.concatenate(
        [aft[b * 2 * C_EXP + C_EXP:(b + 1) * 2 * C_EXP, F:F + T] for b in range(B)],
        axis=0)
    # broadcast to the flattened (B*C_EXP, F*T) layout via 0/1 expanders (MXU)
    att_map = (jnp.dot(a_f, emm_ref[EMB_OFF:EMB_OFF + F, :],
                       preferred_element_type=f32)
               * jnp.dot(a_t, emm_ref[EMB_OFF + F:EMB_OFF + F + T, :],
                         preferred_element_type=f32))           # (B*C_EXP, FT)

    # ---- global context h_c, batches as matmul columns ----
    h_all = jnp.mean(g1, axis=1, keepdims=True)                 # (B*CD, 1)
    h_c = jnp.concatenate([h_all[b * CD:(b + 1) * CD, :] for b in range(B)], axis=1)

    # ---- ONE merged MXU op: kernel-attention logits + DyReLU-B coefficients ----
    acth = (jnp.dot(wmat_ref[WAC_OFF:WAC_OFF + NAC, 0:CD], h_c,
                    preferred_element_type=f32)
            + colb_ref[ACB_OFF:ACB_OFF + NAC, :])               # (NAC, B)

    logits = acth[0:3 * K, :] * (1.0 / TEMP)

    def group_softmax(v):                                       # softmax over K rows
        e = jnp.exp(v - jnp.max(v, axis=0, keepdims=True))
        return e / jnp.sum(e, axis=0, keepdims=True)

    att_exp = group_softmax(logits[0 * K:1 * K, :])             # (K, B)
    att_dw = group_softmax(logits[1 * K:2 * K, :])
    att_pj = group_softmax(logits[2 * K:3 * K, :])

    # DyReLU-B coefficients (weights were pre-reordered j-major on the host)
    theta = 2.0 * jax.nn.sigmoid(acth[4 * K:4 * K + 2 * M * C_EXP, :]) - 1.0

    def stack_cols(v):                                          # (R, B) -> (B*R, 1)
        return jnp.concatenate([v[:, b:b + 1] for b in range(B)], axis=0)

    a1 = stack_cols(theta[0 * C_EXP:1 * C_EXP, :]) + 1.0        # lambdas=[1,1,.5,.5]
    a2 = stack_cols(theta[1 * C_EXP:2 * C_EXP, :])              # init_v =[1,0,0,0]
    b1 = 0.5 * stack_cols(theta[2 * C_EXP:3 * C_EXP, :])
    b2 = 0.5 * stack_cols(theta[3 * C_EXP:4 * C_EXP, :])

    # ---- kernel-attention aggregation over the k=4 weight banks ----
    def agg(att_col, bank_off, rows, cols):                     # sum_k att[k]*bank[k]
        bank = wmat_ref[bank_off:bank_off + K * rows, 0:cols]
        w = att_col[0:1, :] * bank[0:rows]
        for k in range(1, K):
            w = w + att_col[k:k + 1, :] * bank[k * rows:(k + 1) * rows]
        return w

    # ---- expansion: dynamic 1x1 conv + BN + Hardswish (per batch, then stack) ----
    t_exp_b = colb_ref[TEXP_OFF:TEXP_OFF + C_EXP, :]
    y_parts, wdw_parts = [], []
    for b in range(B):
        w_exp = agg(att_exp[:, b:b + 1], BEXP_OFF, C_EXP, C_IN)
        yb = jnp.dot(w_exp, x_all[b * C_IN:(b + 1) * C_IN, :],
                     preferred_element_type=f32) + t_exp_b
        y_parts.append(hardswish(yb))
        wdw_parts.append(agg(att_dw[:, b:b + 1], BDW_OFF, C_EXP, KS * KS))
    y_all = jnp.concatenate(y_parts, axis=0)                    # (B*C_EXP, FT)
    w_dw = jnp.concatenate(wdw_parts, axis=0)                   # (B*C_EXP, 9)

    # ---- depthwise 3x3, both batches at once: lane rolls + precomputed masks ----
    acc = w_dw[:, 4:5] * y_all                                  # center tap (df=dt=0)
    for df in (-1, 0, 1):
        for dt in (-1, 0, 1):
            off = df * T + dt
            if off == 0:
                continue
            idx = (df + 1) * KS + (dt + 1)
            shifted = pltpu.roll(y_all, (-off) % FT, axis=1)
            mask = emm_ref[DWM_OFF + idx:DWM_OFF + idx + 1, :]  # 0/1 halo mask
            acc = acc + (w_dw[:, idx:idx + 1] * mask) * shifted
    acc = acc + colb_ref[TDW2_OFF:TDW2_OFF + B * C_EXP, :]      # depthwise BN bias

    # ---- DyReLU-B + coordinate attention ----
    z = jnp.maximum(acc * a1 + b1, acc * a2 + b2) * att_map     # (B*C_EXP, FT)

    # ---- projection: dynamic 1x1 conv + BN + residual ----
    t_pj_b = colb_ref[TPJ_OFF:TPJ_OFF + C_OUT, :]
    outs = []
    for b in range(B):
        w_pj = agg(att_pj[:, b:b + 1], BPJ_OFF, C_OUT, C_EXP)
        ob = jnp.dot(w_pj, z[b * C_EXP:(b + 1) * C_EXP, :],
                     preferred_element_type=f32) + t_pj_b
        if USE_RES:
            ob = ob + x_all[b * C_IN:(b + 1) * C_IN, :]
        outs.append(ob)
    o_ref[...] = jnp.concatenate(outs, axis=0)                  # (B*C_OUT, FT)


# ------------------------------ parameters ---------------------------------
def bn_params(key, c):
    k1, k2, k3, k4 = jax.random.split(key, 4)
    gamma = 1.0 + 0.1 * jax.random.normal(k1, (c,), jnp.float32)
    beta = 0.1 * jax.random.normal(k2, (c,), jnp.float32)
    mean = 0.1 * jax.random.normal(k3, (c,), jnp.float32)
    var = 1.0 + 0.1 * jax.random.uniform(k4, (c,), jnp.float32)
    return gamma, beta, mean, var


def bn_fold(bn):
    gamma, beta, mean, var = bn
    s = gamma / jnp.sqrt(var + EPS)
    t = beta - mean * s
    return s, t


def init_params(key):
    keys = jax.random.split(key, 20)
    it = iter(keys)

    def nrm(shape, scale=0.2):
        return scale * jax.random.normal(next(it), shape, dtype=jnp.float32)

    p = {}
    # ContextGen
    p["w_joint"] = nrm((CD, C_IN))
    p["bn_j"] = bn_params(next(it), CD)
    p["w_f"] = nrm((C_EXP, CD))
    p["b_f"] = nrm((C_EXP,), 0.1)
    p["w_t"] = nrm((C_EXP, CD))
    p["b_t"] = nrm((C_EXP,), 0.1)
    # DynamicConv: expansion (1x1, k=4 kernel bank)
    p["dyn_exp"] = (nrm((K, CD)), nrm((K,), 0.1), nrm((K, C_EXP * C_IN)))
    p["bn_exp"] = bn_params(next(it), C_EXP)
    # DynamicConv: depthwise 3x3
    p["dyn_dw"] = (nrm((K, CD)), nrm((K,), 0.1), nrm((K, C_EXP * KS * KS)))
    p["bn_dw"] = bn_params(next(it), C_EXP)
    # DyReLU-B coefficient net
    p["w_coef"] = nrm((2 * M * C_EXP, CD))
    p["b_coef"] = nrm((2 * M * C_EXP,), 0.1)
    # DynamicConv: projection (1x1)
    p["dyn_pj"] = (nrm((K, CD)), nrm((K,), 0.1), nrm((K, C_OUT * C_EXP)))
    p["bn_pj"] = bn_params(next(it), C_OUT)
    return p


def block_diag_rep(m, n):
    r, c = m.shape
    out = jnp.zeros((n * r, n * c), m.dtype)
    for i in range(n):
        out = out.at[i * r:(i + 1) * r, i * c:(i + 1) * c].set(m)
    return out


def pack_params(params):
    """Fold BatchNorms and pack all constants into three bundles (4 streams total)."""
    s_j, t_j = bn_fold(params["bn_j"])
    s_exp, t_exp = bn_fold(params["bn_exp"])
    s_dw, t_dw = bn_fold(params["bn_dw"])
    s_pj, t_pj = bn_fold(params["bn_pj"])

    # block-diag (over batch) joint conv & coord-att head weights
    wj = params["w_joint"] * s_j[:, None]                           # (CD, C_IN)
    wjblk = block_diag_rep(wj, B)                                   # (B*CD, B*C_IN)
    w_ft = jnp.concatenate([params["w_f"], params["w_t"]], axis=0)  # (2*C_EXP, CD)
    wftblk = block_diag_rep(w_ft, B)                                # (B*2*C_EXP, B*CD)

    # merged kernel-attention (padded 3K->4K rows) + DyReLU-coef (j-major) weights
    attw = jnp.concatenate([params["dyn_exp"][0], params["dyn_dw"][0],
                            params["dyn_pj"][0],
                            jnp.zeros((K, CD), jnp.float32)], axis=0)
    wc = params["w_coef"].reshape(C_EXP, 2 * M, CD)
    wc = jnp.transpose(wc, (1, 0, 2)).reshape(2 * M * C_EXP, CD)
    wac = jnp.concatenate([attw, wc], axis=0)                       # (NAC, CD)

    # k=4 dynamic weight banks with the following BatchNorm scale folded in
    bank_exp = (params["dyn_exp"][2].reshape(K, C_EXP, C_IN)
                * s_exp[None, :, None]).reshape(K * C_EXP, C_IN)
    bank_dw = (params["dyn_dw"][2].reshape(K, C_EXP, KS * KS)
               * s_dw[None, :, None]).reshape(K * C_EXP, KS * KS)
    bank_pj = (params["dyn_pj"][2].reshape(K, C_OUT, C_EXP)
               * s_pj[None, :, None]).reshape(K * C_OUT, C_EXP)

    def padc(m):
        return jnp.pad(m, ((0, 0), (0, WMAT_COLS - m.shape[1])))

    wmat = jnp.concatenate([padc(wjblk), padc(wftblk), padc(wac),
                            padc(bank_exp), padc(bank_dw), padc(bank_pj)], axis=0)
    assert wmat.shape == (WMAT_ROWS, WMAT_COLS)

    # column-bias bundle
    attb = jnp.concatenate([params["dyn_exp"][1], params["dyn_dw"][1],
                            params["dyn_pj"][1], jnp.zeros((K,), jnp.float32)])
    bc = jnp.transpose(params["b_coef"].reshape(C_EXP, 2 * M), (1, 0)).reshape(-1)
    bft = jnp.concatenate([params["b_f"], params["b_t"]])
    colb = jnp.concatenate([jnp.tile(t_j, B), jnp.tile(bft, B), attb, bc,
                            t_exp, jnp.tile(t_dw, B), t_pj])[:, None]
    assert colb.shape == (COLB_ROWS, 1)

    # expander / mask bundle
    p_idx = jnp.arange(FT)
    ef = (p_idx[None, :] // T == jnp.arange(F)[:, None]).astype(jnp.float32)
    et = (p_idx[None, :] % T == jnp.arange(T)[:, None]).astype(jnp.float32)
    emp = jnp.concatenate([ef / T, et / F], axis=0)                 # mean-pool weights
    emb = jnp.concatenate([ef, et], axis=0)                         # 0/1 broadcast
    fpos, tpos = p_idx // T, p_idx % T
    mrows = []
    for df in (-1, 0, 1):
        for dt in (-1, 0, 1):
            valid = ((fpos + df >= 0) & (fpos + df < F)
                     & (tpos + dt >= 0) & (tpos + dt < T))
            mrows.append(valid.astype(jnp.float32)[None, :])
    dwmask = jnp.concatenate(mrows, axis=0)                         # (9, FT)
    pad_rows = EMM_ROWS - 2 * (F + T) - KS * KS
    emm = jnp.concatenate([emp, emb, dwmask,
                           jnp.zeros((pad_rows, FT), jnp.float32)], axis=0)
    assert emm.shape == (EMM_ROWS, FT)

    return dict(emm=emm, wmat=wmat, colb=colb)


# ------------------------------ forward pass --------------------------------
def dy_block_forward(packed, x):
    x2d = x.reshape(B * C_IN, FT)                       # lane-dense (rows, 256)
    out2d = pl.pallas_call(
        dy_block_kernel,
        in_specs=[pl.BlockSpec(memory_space=pltpu.MemorySpace.VMEM)] * 4,
        out_specs=pl.BlockSpec(memory_space=pltpu.MemorySpace.VMEM),
        out_shape=jax.ShapeDtypeStruct((B * C_OUT, FT), jnp.float32),
    )(x2d, packed["emm"], packed["wmat"], packed["colb"])
    return out2d.reshape(B, C_OUT, F, T)


# ----------------------- pure-JAX reference (for checking) ------------------
def dy_block_reference(params, x):
    hp = jax.lax.Precision.HIGHEST

    def bn(v, p):
        gamma, beta, mean, var = p
        s = gamma / jnp.sqrt(var + EPS)
        t = beta - mean * s
        shape = (1, -1) + (1,) * (v.ndim - 2)
        return v * s.reshape(shape) + t.reshape(shape)

    # ContextGen
    cf = jnp.mean(x, axis=3)                                        # (B, C_IN, F)
    ct = jnp.mean(x, axis=2)                                        # (B, C_IN, T)
    g_cat = jnp.concatenate([cf, ct], axis=2)                       # (B, C_IN, F+T)
    g_cat = jnp.einsum('oc,bcp->bop', params["w_joint"], g_cat, precision=hp)
    g_cat = hardswish(bn(g_cat, params["bn_j"]))                    # (B, CD, F+T)
    h_cf, h_ct = g_cat[:, :, :F], g_cat[:, :, F:]
    h_c = jnp.mean(g_cat, axis=2)                                   # (B, CD)
    g_cf = (jnp.einsum('oc,bcf->bof', params["w_f"], h_cf, precision=hp)
            + params["b_f"][None, :, None])
    g_ct = (jnp.einsum('oc,bct->bot', params["w_t"], h_ct, precision=hp)
            + params["b_t"][None, :, None])
    a_f, a_t = jax.nn.sigmoid(g_cf), jax.nn.sigmoid(g_ct)

    def dyn_weight(dyn, out_c, in_c):
        rw, rb, bank = dyn
        logits = (jnp.einsum('bc,kc->bk', h_c, rw, precision=hp) + rb) / TEMP
        att = jax.nn.softmax(logits, axis=-1)                       # (B, K)
        w = jnp.einsum('bk,kn->bn', att, bank, precision=hp)
        return w.reshape(B, out_c, in_c, -1)

    # expansion
    w_exp = dyn_weight(params["dyn_exp"], C_EXP, C_IN)[..., 0]
    y = jnp.einsum('boc,bcft->boft', w_exp, x, precision=hp)
    y = hardswish(bn(y, params["bn_exp"]))

    # depthwise 3x3 ('same' zero padding)
    w_dw = dyn_weight(params["dyn_dw"], C_EXP, 1).reshape(B, C_EXP, KS, KS)
    yp = jnp.pad(y, ((0, 0), (0, 0), (1, 1), (1, 1)))
    acc = jnp.zeros_like(y)
    for i in range(KS):
        for j in range(KS):
            acc = acc + w_dw[:, :, i, j][:, :, None, None] * yp[:, :, i:i + F, j:j + T]
    acc = bn(acc, params["bn_dw"])

    # DyReLU-B
    theta = (jnp.einsum('bc,nc->bn', h_c, params["w_coef"], precision=hp)
             + params["b_coef"])
    theta = 2.0 * jax.nn.sigmoid(theta) - 1.0
    lambdas = jnp.array([1.0, 1.0, 0.5, 0.5], jnp.float32)
    init_v = jnp.array([1.0, 0.0, 0.0, 0.0], jnp.float32)
    rc = theta.reshape(B, C_EXP, 2 * M) * lambdas + init_v
    a1 = rc[:, :, 0][:, :, None, None]
    a2 = rc[:, :, 1][:, :, None, None]
    b1 = rc[:, :, 2][:, :, None, None]
    b2 = rc[:, :, 3][:, :, None, None]
    z = jnp.maximum(acc * a1 + b1, acc * a2 + b2)

    # CoordAtt
    z = z * a_f[:, :, :, None] * a_t[:, :, None, :]

    # projection + residual
    w_pj = dyn_weight(params["dyn_pj"], C_OUT, C_EXP)[..., 0]
    out = jnp.einsum('boc,bcft->boft', w_pj, z, precision=hp)
    out = bn(out, params["bn_pj"])
    if USE_RES:
        out = out + x
    return out


if __name__ == "__main__":
    root = jax.random.PRNGKey(0)
    kx, kp = jax.random.split(root)
    x = jax.random.normal(kx, (B, C_IN, F, T), dtype=jnp.float32)
    params = init_params(kp)
    packed = pack_params(params)

    out = jax.jit(dy_block_forward)(packed, x)
    out = jax.block_until_ready(out)
    assert out.shape == (B, C_OUT, F, T)
    assert out.dtype == jnp.float32
    assert bool(jnp.all(jnp.isfinite(out)))

    # pure-JAX reference check (locks in packing, depthwise halo handling, etc.)
    ref = jax.jit(dy_block_reference)(params, x)
    ref = jax.block_until_ready(ref)
    err = float(jnp.max(jnp.abs(out - ref)))
    assert err < 1e-2, f"max abs error vs pure-JAX reference: {err}"

    print("KERNEL_OK")
</pallas_src>

<mosaic_0001>
module attributes {stable_mosaic.version = 11 : i64} {
  func.func @dy_block_kernel(%arg0: memref<16x256xf32, #tpu.memory_space<vmem>>, %arg1: memref<80x256xf32, #tpu.memory_space<vmem>>, %arg2: memref<368x64xf32, #tpu.memory_space<vmem>>, %arg3: memref<264x1xf32, #tpu.memory_space<vmem>>, %arg4: memref<16x256xf32, #tpu.memory_space<vmem>>) attributes {dimension_semantics = [], scalar_prefetch = 0 : i64, scratch_operands = 0 : i64, tpu.core_type = #tpu.core_type<tc>} {
    %c0 = arith.constant 0 : index
    %c0_0 = arith.constant 0 : index
    %0 = vector.load %arg0[%c0, %c0_0] : memref<16x256xf32, #tpu.memory_space<vmem>>, vector<16x256xf32>
    %c0_1 = arith.constant 0 : index
    %c0_2 = arith.constant 0 : index
    %1 = vector.load %arg1[%c0_1, %c0_2] : memref<80x256xf32, #tpu.memory_space<vmem>>, vector<32x256xf32>
    %cst = arith.constant dense<0.000000e+00> : vector<16x32xf32>
    %2 = tpu.matmul %0, %1, %cst {dimension_numbers = #tpu.dot_dimension_numbers<[1], [1], [0], [0], [0, 0, 1, 0], [], []>} : vector<16x256xf32>, vector<32x256xf32>, vector<16x32xf32> -> vector<16x32xf32>
    %c0_3 = arith.constant 0 : index
    %c0_4 = arith.constant 0 : index
    %3 = vector.load %arg2[%c0_3, %c0_4] : memref<368x64xf32, #tpu.memory_space<vmem>>, vector<64x16xf32>
    %cst_5 = arith.constant dense<0.000000e+00> : vector<64x32xf32>
    %4 = tpu.matmul %3, %2, %cst_5 {dimension_numbers = #tpu.dot_dimension_numbers<[1], [0], [0], [1], [0, 0, 1, 1], [], []>} : vector<64x16xf32>, vector<16x32xf32>, vector<64x32xf32> -> vector<64x32xf32>
    %c0_6 = arith.constant 0 : index
    %c0_7 = arith.constant 0 : index
    %5 = vector.load %arg3[%c0_6, %c0_7] : memref<264x1xf32, #tpu.memory_space<vmem>>, vector<64x1xf32>
    %6 = vector.broadcast %5 : vector<64x1xf32> to vector<64x32xf32>
    %7 = arith.addf %4, %6 : vector<64x32xf32>
    %cst_8 = arith.constant 3.000000e+00 : f32
    %8 = vector.broadcast %cst_8 : f32 to vector<64x32xf32>
    %9 = arith.addf %7, %8 : vector<64x32xf32>
    %cst_9 = arith.constant 0.000000e+00 : f32
    %cst_10 = arith.constant 6.000000e+00 : f32
    %10 = vector.broadcast %cst_9 : f32 to vector<64x32xf32>
    %11 = arith.maximumf %10, %9 : vector<64x32xf32>
    %12 = vector.broadcast %cst_10 : f32 to vector<64x32xf32>
    %13 = arith.minimumf %12, %11 : vector<64x32xf32>
    %14 = arith.mulf %7, %13 : vector<64x32xf32>
    %cst_11 = arith.constant 0.166666672 : f32
    %15 = vector.broadcast %cst_11 : f32 to vector<64x32xf32>
    %16 = arith.mulf %14, %15 : vector<64x32xf32>
    %c64 = arith.constant 64 : index
    %c0_12 = arith.constant 0 : index
    %17 = vector.load %arg2[%c64, %c0_12] : memref<368x64xf32, #tpu.memory_space<vmem>>, vector<64x64xf32>
    %cst_13 = arith.constant dense<0.000000e+00> : vector<64x32xf32>
    %18 = tpu.matmul %17, %16, %cst_13 {dimension_numbers = #tpu.dot_dimension_numbers<[1], [0], [0], [1], [0, 0, 1, 1], [], []>} : vector<64x64xf32>, vector<64x32xf32>, vector<64x32xf32> -> vector<64x32xf32>
    %c64_14 = arith.constant 64 : index
    %c0_15 = arith.constant 0 : index
    %19 = vector.load %arg3[%c64_14, %c0_15] : memref<264x1xf32, #tpu.memory_space<vmem>>, vector<64x1xf32>
    %20 = vector.broadcast %19 : vector<64x1xf32> to vector<64x32xf32>
    %21 = arith.addf %18, %20 : vector<64x32xf32>
    %22 = arith.negf %21 : vector<64x32xf32>
    %23 = math.exp %22 : vector<64x32xf32>
    %cst_16 = arith.constant 1.000000e+00 : f32
    %24 = vector.broadcast %cst_16 : f32 to vector<64x32xf32>
    %25 = arith.addf %24, %23 : vector<64x32xf32>
    %26 = arith.divf %24, %25 : vector<64x32xf32>
    %27 = vector.extract_strided_slice %26 {offsets = [0, 0], sizes = [16, 16], strides = [1, 1]} : vector<64x32xf32> to vector<16x16xf32>
    %28 = vector.extract_strided_slice %26 {offsets = [32, 0], sizes = [16, 16], strides = [1, 1]} : vector<64x32xf32> to vector<16x16xf32>
    %29 = tpu.concatenate %27, %28 in 0 : vector<16x16xf32>, vector<16x16xf32> -> vector<32x16xf32>
    %30 = vector.extract_strided_slice %26 {offsets = [16, 16], sizes = [16, 16], strides = [1, 1]} : vector<64x32xf32> to vector<16x16xf32>
    %31 = vector.extract_strided_slice %26 {offsets = [48, 16], sizes = [16, 16], strides = [1, 1]} : vector<64x32xf32> to vector<16x16xf32>
    %32 = tpu.concatenate %30, %31 in 0 : vector<16x16xf32>, vector<16x16xf32> -> vector<32x16xf32>
    %c32 = arith.constant 32 : index
    %c0_17 = arith.constant 0 : index
    %33 = vector.load %arg1[%c32, %c0_17] : memref<80x256xf32, #tpu.memory_space<vmem>>, vector<16x256xf32>
    %cst_18 = arith.constant dense<0.000000e+00> : vector<32x256xf32>
    %34 = tpu.matmul %29, %33, %cst_18 {dimension_numbers = #tpu.dot_dimension_numbers<[1], [0], [0], [1], [0, 0, 1, 1], [], []>} : vector<32x16xf32>, vector<16x256xf32>, vector<32x256xf32> -> vector<32x256xf32>
    %c48 = arith.constant 48 : index
    %c0_19 = arith.constant 0 : index
    %35 = vector.load %arg1[%c48, %c0_19] : memref<80x256xf32, #tpu.memory_space<vmem>>, vector<16x256xf32>
    %cst_20 = arith.constant dense<0.000000e+00> : vector<32x256xf32>
    %36 = tpu.matmul %32, %35, %cst_20 {dimension_numbers = #tpu.dot_dimension_numbers<[1], [0], [0], [1], [0, 0, 1, 1], [], []>} : vector<32x16xf32>, vector<16x256xf32>, vector<32x256xf32> -> vector<32x256xf32>
    %37 = arith.mulf %34, %36 : vector<32x256xf32>
    %cst_21 = arith.constant dense<0.000000e+00> : vector<64xf32>
    %38 = vector.multi_reduction <add>, %16, %cst_21 [1] : vector<64x32xf32> to vector<64xf32>
    %39 = vector.shape_cast %38 : vector<64xf32> to vector<64x1xf32>
    %cst_22 = arith.constant 3.200000e+01 : f32
    %40 = vector.broadcast %cst_22 : f32 to vector<64x1xf32>
    %41 = arith.divf %39, %40 : vector<64x1xf32>
    %42 = vector.extract_strided_slice %41 {offsets = [0, 0], sizes = [32, 1], strides = [1, 1]} : vector<64x1xf32> to vector<32x1xf32>
    %43 = vector.extract_strided_slice %41 {offsets = [32, 0], sizes = [32, 1], strides = [1, 1]} : vector<64x1xf32> to vector<32x1xf32>
    %44 = tpu.concatenate %42, %43 in 1 : vector<32x1xf32>, vector<32x1xf32> -> vector<32x2xf32>
    %c128 = arith.constant 128 : index
    %c0_23 = arith.constant 0 : index
    %45 = vector.load %arg2[%c128, %c0_23] : memref<368x64xf32, #tpu.memory_space<vmem>>, vector<80x32xf32>
    %cst_24 = arith.constant dense<0.000000e+00> : vector<80x2xf32>
    %46 = tpu.matmul %45, %44, %cst_24 {dimension_numbers = #tpu.dot_dimension_numbers<[1], [0], [0], [1], [0, 0, 1, 1], [], []>} : vector<80x32xf32>, vector<32x2xf32>, vector<80x2xf32> -> vector<80x2xf32>
    %c128_25 = arith.constant 128 : index
    %c0_26 = arith.constant 0 : index
    %47 = vector.load %arg3[%c128_25, %c0_26] : memref<264x1xf32, #tpu.memory_space<vmem>>, vector<80x1xf32>
    %48 = vector.broadcast %47 : vector<80x1xf32> to vector<80x2xf32>
    %49 = arith.addf %46, %48 : vector<80x2xf32>
    %50 = vector.extract_strided_slice %49 {offsets = [0, 0], sizes = [12, 2], strides = [1, 1]} : vector<80x2xf32> to vector<12x2xf32>
    %cst_27 = arith.constant 0.0333333351 : f32
    %51 = vector.broadcast %cst_27 : f32 to vector<12x2xf32>
    %52 = arith.mulf %50, %51 : vector<12x2xf32>
    %53 = vector.extract_strided_slice %52 {offsets = [0, 0], sizes = [4, 2], strides = [1, 1]} : vector<12x2xf32> to vector<4x2xf32>
    %cst_28 = arith.constant dense<0xFF800000> : vector<2xf32>
    %54 = vector.multi_reduction <maximumf>, %53, %cst_28 [0] : vector<4x2xf32> to vector<2xf32>
    %55 = vector.shape_cast %54 : vector<2xf32> to vector<1x2xf32>
    %56 = vector.broadcast %55 : vector<1x2xf32> to vector<4x2xf32>
    %57 = arith.subf %53, %56 : vector<4x2xf32>
    %58 = math.exp %57 : vector<4x2xf32>
    %cst_29 = arith.constant dense<0.000000e+00> : vector<2xf32>
    %59 = vector.multi_reduction <add>, %58, %cst_29 [0] : vector<4x2xf32> to vector<2xf32>
    %60 = vector.shape_cast %59 : vector<2xf32> to vector<1x2xf32>
    %61 = vector.broadcast %60 : vector<1x2xf32> to vector<4x2xf32>
    %62 = arith.divf %58, %61 : vector<4x2xf32>
    %63 = vector.extract_strided_slice %52 {offsets = [4, 0], sizes = [4, 2], strides = [1, 1]} : vector<12x2xf32> to vector<4x2xf32>
    %cst_30 = arith.constant dense<0xFF800000> : vector<2xf32>
    %64 = vector.multi_reduction <maximumf>, %63, %cst_30 [0] : vector<4x2xf32> to vector<2xf32>
    %65 = vector.shape_cast %64 : vector<2xf32> to vector<1x2xf32>
    %66 = vector.broadcast %65 : vector<1x2xf32> to vector<4x2xf32>
    %67 = arith.subf %63, %66 : vector<4x2xf32>
    %68 = math.exp %67 : vector<4x2xf32>
    %cst_31 = arith.constant dense<0.000000e+00> : vector<2xf32>
    %69 = vector.multi_reduction <add>, %68, %cst_31 [0] : vector<4x2xf32> to vector<2xf32>
    %70 = vector.shape_cast %69 : vector<2xf32> to vector<1x2xf32>
    %71 = vector.broadcast %70 : vector<1x2xf32> to vector<4x2xf32>
    %72 = arith.divf %68, %71 : vector<4x2xf32>
    %73 = vector.extract_strided_slice %52 {offsets = [8, 0], sizes = [4, 2], strides = [1, 1]} : vector<12x2xf32> to vector<4x2xf32>
    %cst_32 = arith.constant dense<0xFF800000> : vector<2xf32>
    %74 = vector.multi_reduction <maximumf>, %73, %cst_32 [0] : vector<4x2xf32> to vector<2xf32>
    %75 = vector.shape_cast %74 : vector<2xf32> to vector<1x2xf32>
    %76 = vector.broadcast %75 : vector<1x2xf32> to vector<4x2xf32>
    %77 = arith.subf %73, %76 : vector<4x2xf32>
    %78 = math.exp %77 : vector<4x2xf32>
    %cst_33 = arith.constant dense<0.000000e+00> : vector<2xf32>
    %79 = vector.multi_reduction <add>, %78, %cst_33 [0] : vector<4x2xf32> to vector<2xf32>
    %80 = vector.shape_cast %79 : vector<2xf32> to vector<1x2xf32>
    %81 = vector.broadcast %80 : vector<1x2xf32> to vector<4x2xf32>
    %82 = arith.divf %78, %81 : vector<4x2xf32>
    %83 = vector.extract_strided_slice %49 {offsets = [16, 0], sizes = [64, 2], strides = [1, 1]} : vector<80x2xf32> to vector<64x2xf32>
    %84 = arith.negf %83 : vector<64x2xf32>
    %85 = math.exp %84 : vector<64x2xf32>
    %cst_34 = arith.constant 1.000000e+00 : f32
    %86 = vector.broadcast %cst_34 : f32 to vector<64x2xf32>
    %87 = arith.addf %86, %85 : vector<64x2xf32>
    %88 = arith.divf %86, %87 : vector<64x2xf32>
    %cst_35 = arith.constant 2.000000e+00 : f32
    %89 = vector.broadcast %cst_35 : f32 to vector<64x2xf32>
    %90 = arith.mulf %89, %88 : vector<64x2xf32>
    %cst_36 = arith.constant 1.000000e+00 : f32
    %91 = vector.broadcast %cst_36 : f32 to vector<64x2xf32>
    %92 = arith.subf %90, %91 : vector<64x2xf32>
    %93 = vector.extract_strided_slice %92 {offsets = [0, 0], sizes = [16, 2], strides = [1, 1]} : vector<64x2xf32> to vector<16x2xf32>
    %94 = vector.extract_strided_slice %93 {offsets = [0, 0], sizes = [16, 1], strides = [1, 1]} : vector<16x2xf32> to vector<16x1xf32>
    %95 = vector.extract_strided_slice %93 {offsets = [0, 1], sizes = [16, 1], strides = [1, 1]} : vector<16x2xf32> to vector<16x1xf32>
    %96 = tpu.concatenate %94, %95 in 0 : vector<16x1xf32>, vector<16x1xf32> -> vector<32x1xf32>
    %cst_37 = arith.constant 1.000000e+00 : f32
    %97 = vector.broadcast %cst_37 : f32 to vector<32x1xf32>
    %98 = arith.addf %96, %97 : vector<32x1xf32>
    %99 = vector.extract_strided_slice %92 {offsets = [16, 0], sizes = [16, 2], strides = [1, 1]} : vector<64x2xf32> to vector<16x2xf32>
    %100 = vector.extract_strided_slice %99 {offsets = [0, 0], sizes = [16, 1], strides = [1, 1]} : vector<16x2xf32> to vector<16x1xf32>
    %101 = vector.extract_strided_slice %99 {offsets = [0, 1], sizes = [16, 1], strides = [1, 1]} : vector<16x2xf32> to vector<16x1xf32>
    %102 = tpu.concatenate %100, %101 in 0 : vector<16x1xf32>, vector<16x1xf32> -> vector<32x1xf32>
    %103 = vector.extract_strided_slice %92 {offsets = [32, 0], sizes = [16, 2], strides = [1, 1]} : vector<64x2xf32> to vector<16x2xf32>
    %104 = vector.extract_strided_slice %103 {offsets = [0, 0], sizes = [16, 1], strides = [1, 1]} : vector<16x2xf32> to vector<16x1xf32>
    %105 = vector.extract_strided_slice %103 {offsets = [0, 1], sizes = [16, 1], strides = [1, 1]} : vector<16x2xf32> to vector<16x1xf32>
    %106 = tpu.concatenate %104, %105 in 0 : vector<16x1xf32>, vector<16x1xf32> -> vector<32x1xf32>
    %cst_38 = arith.constant 5.000000e-01 : f32
    %107 = vector.broadcast %cst_38 : f32 to vector<32x1xf32>
    %108 = arith.mulf %107, %106 : vector<32x1xf32>
    %109 = vector.extract_strided_slice %92 {offsets = [48, 0], sizes = [16, 2], strides = [1, 1]} : vector<64x2xf32> to vector<16x2xf32>
    %110 = vector.extract_strided_slice %109 {offsets = [0, 0], sizes = [16, 1], strides = [1, 1]} : vector<16x2xf32> to vector<16x1xf32>
    %111 = vector.extract_strided_slice %109 {offsets = [0, 1], sizes = [16, 1], strides = [1, 1]} : vector<16x2xf32> to vector<16x1xf32>
    %112 = tpu.concatenate %110, %111 in 0 : vector<16x1xf32>, vector<16x1xf32> -> vector<32x1xf32>
    %cst_39 = arith.constant 5.000000e-01 : f32
    %113 = vector.broadcast %cst_39 : f32 to vector<32x1xf32>
    %114 = arith.mulf %113, %112 : vector<32x1xf32>
    %c208 = arith.constant 208 : index
    %c0_40 = arith.constant 0 : index
    %115 = vector.load %arg3[%c208, %c0_40] : memref<264x1xf32, #tpu.memory_space<vmem>>, vector<16x1xf32>
    %116 = vector.extract_strided_slice %62 {offsets = [0, 0], sizes = [4, 1], strides = [1, 1]} : vector<4x2xf32> to vector<4x1xf32>
    %c208_41 = arith.constant 208 : index
    %c0_42 = arith.constant 0 : index
    %117 = vector.load %arg2[%c208_41, %c0_42] : memref<368x64xf32, #tpu.memory_space<vmem>>, vector<64x8xf32>
    %118 = vector.extract_strided_slice %116 {offsets = [0, 0], sizes = [1, 1], strides = [1, 1]} : vector<4x1xf32> to vector<1x1xf32>
    %119 = vector.extract_strided_slice %117 {offsets = [0, 0], sizes = [16, 8], strides = [1, 1]} : vector<64x8xf32> to vector<16x8xf32>
    %120 = vector.broadcast %118 : vector<1x1xf32> to vector<16x8xf32>
    %121 = arith.mulf %120, %119 : vector<16x8xf32>
    %122 = vector.extract_strided_slice %116 {offsets = [1, 0], sizes = [1, 1], strides = [1, 1]} : vector<4x1xf32> to vector<1x1xf32>
    %123 = vector.extract_strided_slice %117 {offsets = [16, 0], sizes = [16, 8], strides = [1, 1]} : vector<64x8xf32> to vector<16x8xf32>
    %124 = vector.broadcast %122 : vector<1x1xf32> to vector<16x8xf32>
    %125 = arith.mulf %124, %123 : vector<16x8xf32>
    %126 = arith.addf %121, %125 : vector<16x8xf32>
    %127 = vector.extract_strided_slice %116 {offsets = [2, 0], sizes = [1, 1], strides = [1, 1]} : vector<4x1xf32> to vector<1x1xf32>
    %128 = vector.extract_strided_slice %117 {offsets = [32, 0], sizes = [16, 8], strides = [1, 1]} : vector<64x8xf32> to vector<16x8xf32>
    %129 = vector.broadcast %127 : vector<1x1xf32> to vector<16x8xf32>
    %130 = arith.mulf %129, %128 : vector<16x8xf32>
    %131 = arith.addf %126, %130 : vector<16x8xf32>
    %132 = vector.extract_strided_slice %116 {offsets = [3, 0], sizes = [1, 1], strides = [1, 1]} : vector<4x1xf32> to vector<1x1xf32>
    %133 = vector.extract_strided_slice %117 {offsets = [48, 0], sizes = [16, 8], strides = [1, 1]} : vector<64x8xf32> to vector<16x8xf32>
    %134 = vector.broadcast %132 : vector<1x1xf32> to vector<16x8xf32>
    %135 = arith.mulf %134, %133 : vector<16x8xf32>
    %136 = arith.addf %131, %135 : vector<16x8xf32>
    %137 = vector.extract_strided_slice %0 {offsets = [0, 0], sizes = [8, 256], strides = [1, 1]} : vector<16x256xf32> to vector<8x256xf32>
    %cst_43 = arith.constant dense<0.000000e+00> : vector<16x256xf32>
    %138 = tpu.matmul %136, %137, %cst_43 {dimension_numbers = #tpu.dot_dimension_numbers<[1], [0], [0], [1], [0, 0, 1, 1], [], []>} : vector<16x8xf32>, vector<8x256xf32>, vector<16x256xf32> -> vector<16x256xf32>
    %139 = vector.broadcast %115 : vector<16x1xf32> to vector<16x256xf32>
    %140 = arith.addf %138, %139 : vector<16x256xf32>
    %cst_44 = arith.constant 3.000000e+00 : f32
    %141 = vector.broadcast %cst_44 : f32 to vector<16x256xf32>
    %142 = arith.addf %140, %141 : vector<16x256xf32>
    %cst_45 = arith.constant 0.000000e+00 : f32
    %cst_46 = arith.constant 6.000000e+00 : f32
    %143 = vector.broadcast %cst_45 : f32 to vector<16x256xf32>
    %144 = arith.maximumf %143, %142 : vector<16x256xf32>
    %145 = vector.broadcast %cst_46 : f32 to vector<16x256xf32>
    %146 = arith.minimumf %145, %144 : vector<16x256xf32>
    %147 = arith.mulf %140, %146 : vector<16x256xf32>
    %cst_47 = arith.constant 0.166666672 : f32
    %148 = vector.broadcast %cst_47 : f32 to vector<16x256xf32>
    %149 = arith.mulf %147, %148 : vector<16x256xf32>
    %150 = vector.extract_strided_slice %72 {offsets = [0, 0], sizes = [4, 1], strides = [1, 1]} : vector<4x2xf32> to vector<4x1xf32>
    %c272 = arith.constant 272 : index
    %c0_48 = arith.constant 0 : index
    %151 = vector.load %arg2[%c272, %c0_48] : memref<368x64xf32, #tpu.memory_space<vmem>>, vector<64x9xf32>
    %152 = vector.extract_strided_slice %150 {offsets = [0, 0], sizes = [1, 1], strides = [1, 1]} : vector<4x1xf32> to vector<1x1xf32>
    %153 = vector.extract_strided_slice %151 {offsets = [0, 0], sizes = [16, 9], strides = [1, 1]} : vector<64x9xf32> to vector<16x9xf32>
    %154 = vector.broadcast %152 : vector<1x1xf32> to vector<16x9xf32>
    %155 = arith.mulf %154, %153 : vector<16x9xf32>
    %156 = vector.extract_strided_slice %150 {offsets = [1, 0], sizes = [1, 1], strides = [1, 1]} : vector<4x1xf32> to vector<1x1xf32>
    %157 = vector.extract_strided_slice %151 {offsets = [16, 0], sizes = [16, 9], strides = [1, 1]} : vector<64x9xf32> to vector<16x9xf32>
    %158 = vector.broadcast %156 : vector<1x1xf32> to vector<16x9xf32>
    %159 = arith.mulf %158, %157 : vector<16x9xf32>
    %160 = arith.addf %155, %159 : vector<16x9xf32>
    %161 = vector.extract_strided_slice %150 {offsets = [2, 0], sizes = [1, 1], strides = [1, 1]} : vector<4x1xf32> to vector<1x1xf32>
    %162 = vector.extract_strided_slice %151 {offsets = [32, 0], sizes = [16, 9], strides = [1, 1]} : vector<64x9xf32> to vector<16x9xf32>
    %163 = vector.broadcast %161 : vector<1x1xf32> to vector<16x9xf32>
    %164 = arith.mulf %163, %162 : vector<16x9xf32>
    %165 = arith.addf %160, %164 : vector<16x9xf32>
    %166 = vector.extract_strided_slice %150 {offsets = [3, 0], sizes = [1, 1], strides = [1, 1]} : vector<4x1xf32> to vector<1x1xf32>
    %167 = vector.extract_strided_slice %151 {offsets = [48, 0], sizes = [16, 9], strides = [1, 1]} : vector<64x9xf32> to vector<16x9xf32>
    %168 = vector.broadcast %166 : vector<1x1xf32> to vector<16x9xf32>
    %169 = arith.mulf %168, %167 : vector<16x9xf32>
    %170 = arith.addf %165, %169 : vector<16x9xf32>
    %171 = vector.extract_strided_slice %62 {offsets = [0, 1], sizes = [4, 1], strides = [1, 1]} : vector<4x2xf32> to vector<4x1xf32>
    %c208_49 = arith.constant 208 : index
    %c0_50 = arith.constant 0 : index
    %172 = vector.load %arg2[%c208_49, %c0_50] : memref<368x64xf32, #tpu.memory_space<vmem>>, vector<64x8xf32>
    %173 = vector.extract_strided_slice %171 {offsets = [0, 0], sizes = [1, 1], strides = [1, 1]} : vector<4x1xf32> to vector<1x1xf32>
    %174 = vector.extract_strided_slice %172 {offsets = [0, 0], sizes = [16, 8], strides = [1, 1]} : vector<64x8xf32> to vector<16x8xf32>
    %175 = vector.broadcast %173 : vector<1x1xf32> to vector<16x8xf32>
    %176 = arith.mulf %175, %174 : vector<16x8xf32>
    %177 = vector.extract_strided_slice %171 {offsets = [1, 0], sizes = [1, 1], strides = [1, 1]} : vector<4x1xf32> to vector<1x1xf32>
    %178 = vector.extract_strided_slice %172 {offsets = [16, 0], sizes = [16, 8], strides = [1, 1]} : vector<64x8xf32> to vector<16x8xf32>
    %179 = vector.broadcast %177 : vector<1x1xf32> to vector<16x8xf32>
    %180 = arith.mulf %179, %178 : vector<16x8xf32>
    %181 = arith.addf %176, %180 : vector<16x8xf32>
    %182 = vector.extract_strided_slice %171 {offsets = [2, 0], sizes = [1, 1], strides = [1, 1]} : vector<4x1xf32> to vector<1x1xf32>
    %183 = vector.extract_strided_slice %172 {offsets = [32, 0], sizes = [16, 8], strides = [1, 1]} : vector<64x8xf32> to vector<16x8xf32>
    %184 = vector.broadcast %182 : vector<1x1xf32> to vector<16x8xf32>
    %185 = arith.mulf %184, %183 : vector<16x8xf32>
    %186 = arith.addf %181, %185 : vector<16x8xf32>
    %187 = vector.extract_strided_slice %171 {offsets = [3, 0], sizes = [1, 1], strides = [1, 1]} : vector<4x1xf32> to vector<1x1xf32>
    %188 = vector.extract_strided_slice %172 {offsets = [48, 0], sizes = [16, 8], strides = [1, 1]} : vector<64x8xf32> to vector<16x8xf32>
    %189 = vector.broadcast %187 : vector<1x1xf32> to vector<16x8xf32>
    %190 = arith.mulf %189, %188 : vector<16x8xf32>
    %191 = arith.addf %186, %190 : vector<16x8xf32>
    %192 = vector.extract_strided_slice %0 {offsets = [8, 0], sizes = [8, 256], strides = [1, 1]} : vector<16x256xf32> to vector<8x256xf32>
    %cst_51 = arith.constant dense<0.000000e+00> : vector<16x256xf32>
    %193 = tpu.matmul %191, %192, %cst_51 {dimension_numbers = #tpu.dot_dimension_numbers<[1], [0], [0], [1], [0, 0, 1, 1], [], []>} : vector<16x8xf32>, vector<8x256xf32>, vector<16x256xf32> -> vector<16x256xf32>
    %194 = vector.broadcast %115 : vector<16x1xf32> to vector<16x256xf32>
    %195 = arith.addf %193, %194 : vector<16x256xf32>
    %cst_52 = arith.constant 3.000000e+00 : f32
    %196 = vector.broadcast %cst_52 : f32 to vector<16x256xf32>
    %197 = arith.addf %195, %196 : vector<16x256xf32>
    %cst_53 = arith.constant 0.000000e+00 : f32
    %cst_54 = arith.constant 6.000000e+00 : f32
    %198 = vector.broadcast %cst_53 : f32 to vector<16x256xf32>
    %199 = arith.maximumf %198, %197 : vector<16x256xf32>
    %200 = vector.broadcast %cst_54 : f32 to vector<16x256xf32>
    %201 = arith.minimumf %200, %199 : vector<16x256xf32>
    %202 = arith.mulf %195, %201 : vector<16x256xf32>
    %cst_55 = arith.constant 0.166666672 : f32
    %203 = vector.broadcast %cst_55 : f32 to vector<16x256xf32>
    %204 = arith.mulf %202, %203 : vector<16x256xf32>
    %205 = vector.extract_strided_slice %72 {offsets = [0, 1], sizes = [4, 1], strides = [1, 1]} : vector<4x2xf32> to vector<4x1xf32>
    %c272_56 = arith.constant 272 : index
    %c0_57 = arith.constant 0 : index
    %206 = vector.load %arg2[%c272_56, %c0_57] : memref<368x64xf32, #tpu.memory_space<vmem>>, vector<64x9xf32>
    %207 = vector.extract_strided_slice %205 {offsets = [0, 0], sizes = [1, 1], strides = [1, 1]} : vector<4x1xf32> to vector<1x1xf32>
    %208 = vector.extract_strided_slice %206 {offsets = [0, 0], sizes = [16, 9], strides = [1, 1]} : vector<64x9xf32> to vector<16x9xf32>
    %209 = vector.broadcast %207 : vector<1x1xf32> to vector<16x9xf32>
    %210 = arith.mulf %209, %208 : vector<16x9xf32>
    %211 = vector.extract_strided_slice %205 {offsets = [1, 0], sizes = [1, 1], strides = [1, 1]} : vector<4x1xf32> to vector<1x1xf32>
    %212 = vector.extract_strided_slice %206 {offsets = [16, 0], sizes = [16, 9], strides = [1, 1]} : vector<64x9xf32> to vector<16x9xf32>
    %213 = vector.broadcast %211 : vector<1x1xf32> to vector<16x9xf32>
    %214 = arith.mulf %213, %212 : vector<16x9xf32>
    %215 = arith.addf %210, %214 : vector<16x9xf32>
    %216 = vector.extract_strided_slice %205 {offsets = [2, 0], sizes = [1, 1], strides = [1, 1]} : vector<4x1xf32> to vector<1x1xf32>
    %217 = vector.extract_strided_slice %206 {offsets = [32, 0], sizes = [16, 9], strides = [1, 1]} : vector<64x9xf32> to vector<16x9xf32>
    %218 = vector.broadcast %216 : vector<1x1xf32> to vector<16x9xf32>
    %219 = arith.mulf %218, %217 : vector<16x9xf32>
    %220 = arith.addf %215, %219 : vector<16x9xf32>
    %221 = vector.extract_strided_slice %205 {offsets = [3, 0], sizes = [1, 1], strides = [1, 1]} : vector<4x1xf32> to vector<1x1xf32>
    %222 = vector.extract_strided_slice %206 {offsets = [48, 0], sizes = [16, 9], strides = [1, 1]} : vector<64x9xf32> to vector<16x9xf32>
    %223 = vector.broadcast %221 : vector<1x1xf32> to vector<16x9xf32>
    %224 = arith.mulf %223, %222 : vector<16x9xf32>
    %225 = arith.addf %220, %224 : vector<16x9xf32>
    %226 = tpu.concatenate %149, %204 in 0 : vector<16x256xf32>, vector<16x256xf32> -> vector<32x256xf32>
    %227 = tpu.concatenate %170, %225 in 0 : vector<16x9xf32>, vector<16x9xf32> -> vector<32x9xf32>
    %228 = vector.extract_strided_slice %227 {offsets = [0, 4], sizes = [32, 1], strides = [1, 1]} : vector<32x9xf32> to vector<32x1xf32>
    %229 = vector.broadcast %228 : vector<32x1xf32> to vector<32x256xf32>
    %230 = arith.mulf %229, %226 : vector<32x256xf32>
    %c17_i32 = arith.constant 17 : i32
    %231 = tpu.dynamic_rotate %226 by %c17_i32 dim 1 : vector<32x256xf32>, i32 -> vector<32x256xf32>
    %c64_58 = arith.constant 64 : index
    %c0_59 = arith.constant 0 : index
    %232 = vector.load %arg1[%c64_58, %c0_59] : memref<80x256xf32, #tpu.memory_space<vmem>>, vector<1x256xf32>
    %233 = vector.extract_strided_slice %227 {offsets = [0, 0], sizes = [32, 1], strides = [1, 1]} : vector<32x9xf32> to vector<32x1xf32>
    %234 = vector.broadcast %233 : vector<32x1xf32> to vector<32x256xf32>
    %235 = vector.broadcast %232 : vector<1x256xf32> to vector<32x256xf32>
    %236 = arith.mulf %234, %235 : vector<32x256xf32>
    %237 = arith.mulf %236, %231 : vector<32x256xf32>
    %238 = arith.addf %230, %237 : vector<32x256xf32>
    %c16_i32 = arith.constant 16 : i32
    %239 = tpu.dynamic_rotate %226 by %c16_i32 dim 1 : vector<32x256xf32>, i32 -> vector<32x256xf32>
    %c65 = arith.constant 65 : index
    %c0_60 = arith.constant 0 : index
    %240 = vector.load %arg1[%c65, %c0_60] : memref<80x256xf32, #tpu.memory_space<vmem>>, vector<1x256xf32>
    %241 = vector.extract_strided_slice %227 {offsets = [0, 1], sizes = [32, 1], strides = [1, 1]} : vector<32x9xf32> to vector<32x1xf32>
    %242 = vector.broadcast %241 : vector<32x1xf32> to vector<32x256xf32>
    %243 = vector.broadcast %240 : vector<1x256xf32> to vector<32x256xf32>
    %244 = arith.mulf %242, %243 : vector<32x256xf32>
    %245 = arith.mulf %244, %239 : vector<32x256xf32>
    %246 = arith.addf %238, %245 : vector<32x256xf32>
    %c15_i32 = arith.constant 15 : i32
    %247 = tpu.dynamic_rotate %226 by %c15_i32 dim 1 : vector<32x256xf32>, i32 -> vector<32x256xf32>
    %c66 = arith.constant 66 : index
    %c0_61 = arith.constant 0 : index
    %248 = vector.load %arg1[%c66, %c0_61] : memref<80x256xf32, #tpu.memory_space<vmem>>, vector<1x256xf32>
    %249 = vector.extract_strided_slice %227 {offsets = [0, 2], sizes = [32, 1], strides = [1, 1]} : vector<32x9xf32> to vector<32x1xf32>
    %250 = vector.broadcast %249 : vector<32x1xf32> to vector<32x256xf32>
    %251 = vector.broadcast %248 : vector<1x256xf32> to vector<32x256xf32>
    %252 = arith.mulf %250, %251 : vector<32x256xf32>
    %253 = arith.mulf %252, %247 : vector<32x256xf32>
    %254 = arith.addf %246, %253 : vector<32x256xf32>
    %c1_i32 = arith.constant 1 : i32
    %255 = tpu.dynamic_rotate %226 by %c1_i32 dim 1 : vector<32x256xf32>, i32 -> vector<32x256xf32>
    %c67 = arith.constant 67 : index
    %c0_62 = arith.constant 0 : index
    %256 = vector.load %arg1[%c67, %c0_62] : memref<80x256xf32, #tpu.memory_space<vmem>>, vector<1x256xf32>
    %257 = vector.extract_strided_slice %227 {offsets = [0, 3], sizes = [32, 1], strides = [1, 1]} : vector<32x9xf32> to vector<32x1xf32>
    %258 = vector.broadcast %257 : vector<32x1xf32> to vector<32x256xf32>
    %259 = vector.broadcast %256 : vector<1x256xf32> to vector<32x256xf32>
    %260 = arith.mulf %258, %259 : vector<32x256xf32>
    %261 = arith.mulf %260, %255 : vector<32x256xf32>
    %262 = arith.addf %254, %261 : vector<32x256xf32>
    %c255_i32 = arith.constant 255 : i32
    %263 = tpu.dynamic_rotate %226 by %c255_i32 dim 1 : vector<32x256xf32>, i32 -> vector<32x256xf32>
    %c69 = arith.constant 69 : index
    %c0_63 = arith.constant 0 : index
    %264 = vector.load %arg1[%c69, %c0_63] : memref<80x256xf32, #tpu.memory_space<vmem>>, vector<1x256xf32>
    %265 = vector.extract_strided_slice %227 {offsets = [0, 5], sizes = [32, 1], strides = [1, 1]} : vector<32x9xf32> to vector<32x1xf32>
    %266 = vector.broadcast %265 : vector<32x1xf32> to vector<32x256xf32>
    %267 = vector.broadcast %264 : vector<1x256xf32> to vector<32x256xf32>
    %268 = arith.mulf %266, %267 : vector<32x256xf32>
    %269 = arith.mulf %268, %263 : vector<32x256xf32>
    %270 = arith.addf %262, %269 : vector<32x256xf32>
    %c241_i32 = arith.constant 241 : i32
    %271 = tpu.dynamic_rotate %226 by %c241_i32 dim 1 : vector<32x256xf32>, i32 -> vector<32x256xf32>
    %c70 = arith.constant 70 : index
    %c0_64 = arith.constant 0 : index
    %272 = vector.load %arg1[%c70, %c0_64] : memref<80x256xf32, #tpu.memory_space<vmem>>, vector<1x256xf32>
    %273 = vector.extract_strided_slice %227 {offsets = [0, 6], sizes = [32, 1], strides = [1, 1]} : vector<32x9xf32> to vector<32x1xf32>
    %274 = vector.broadcast %273 : vector<32x1xf32> to vector<32x256xf32>
    %275 = vector.broadcast %272 : vector<1x256xf32> to vector<32x256xf32>
    %276 = arith.mulf %274, %275 : vector<32x256xf32>
    %277 = arith.mulf %276, %271 : vector<32x256xf32>
    %278 = arith.addf %270, %277 : vector<32x256xf32>
    %c240_i32 = arith.constant 240 : i32
    %279 = tpu.dynamic_rotate %226 by %c240_i32 dim 1 : vector<32x256xf32>, i32 -> vector<32x256xf32>
    %c71 = arith.constant 71 : index
    %c0_65 = arith.constant 0 : index
    %280 = vector.load %arg1[%c71, %c0_65] : memref<80x256xf32, #tpu.memory_space<vmem>>, vector<1x256xf32>
    %281 = vector.extract_strided_slice %227 {offsets = [0, 7], sizes = [32, 1], strides = [1, 1]} : vector<32x9xf32> to vector<32x1xf32>
    %282 = vector.broadcast %281 : vector<32x1xf32> to vector<32x256xf32>
    %283 = vector.broadcast %280 : vector<1x256xf32> to vector<32x256xf32>
    %284 = arith.mulf %282, %283 : vector<32x256xf32>
    %285 = arith.mulf %284, %279 : vector<32x256xf32>
    %286 = arith.addf %278, %285 : vector<32x256xf32>
    %c239_i32 = arith.constant 239 : i32
    %287 = tpu.dynamic_rotate %226 by %c239_i32 dim 1 : vector<32x256xf32>, i32 -> vector<32x256xf32>
    %c72 = arith.constant 72 : index
    %c0_66 = arith.constant 0 : index
    %288 = vector.load %arg1[%c72, %c0_66] : memref<80x256xf32, #tpu.memory_space<vmem>>, vector<1x256xf32>
    %289 = vector.extract_strided_slice %227 {offsets = [0, 8], sizes = [32, 1], strides = [1, 1]} : vector<32x9xf32> to vector<32x1xf32>
    %290 = vector.broadcast %289 : vector<32x1xf32> to vector<32x256xf32>
    %291 = vector.broadcast %288 : vector<1x256xf32> to vector<32x256xf32>
    %292 = arith.mulf %290, %291 : vector<32x256xf32>
    %293 = arith.mulf %292, %287 : vector<32x256xf32>
    %294 = arith.addf %286, %293 : vector<32x256xf32>
    %c224 = arith.constant 224 : index
    %c0_67 = arith.constant 0 : index
    %295 = vector.load %arg3[%c224, %c0_67] : memref<264x1xf32, #tpu.memory_space<vmem>>, vector<32x1xf32>
    %296 = vector.broadcast %295 : vector<32x1xf32> to vector<32x256xf32>
    %297 = arith.addf %294, %296 : vector<32x256xf32>
    %298 = vector.broadcast %98 : vector<32x1xf32> to vector<32x256xf32>
    %299 = arith.mulf %297, %298 : vector<32x256xf32>
    %300 = vector.broadcast %108 : vector<32x1xf32> to vector<32x256xf32>
    %301 = arith.addf %299, %300 : vector<32x256xf32>
    %302 = vector.broadcast %102 : vector<32x1xf32> to vector<32x256xf32>
    %303 = arith.mulf %297, %302 : vector<32x256xf32>
    %304 = vector.broadcast %114 : vector<32x1xf32> to vector<32x256xf32>
    %305 = arith.addf %303, %304 : vector<32x256xf32>
    %306 = arith.maximumf %301, %305 : vector<32x256xf32>
    %307 = arith.mulf %306, %37 : vector<32x256xf32>
    %c256 = arith.constant 256 : index
    %c0_68 = arith.constant 0 : index
    %308 = vector.load %arg3[%c256, %c0_68] : memref<264x1xf32, #tpu.memory_space<vmem>>, vector<8x1xf32>
    %309 = vector.extract_strided_slice %82 {offsets = [0, 0], sizes = [4, 1], strides = [1, 1]} : vector<4x2xf32> to vector<4x1xf32>
    %c336 = arith.constant 336 : index
    %c0_69 = arith.constant 0 : index
    %310 = vector.load %arg2[%c336, %c0_69] : memref<368x64xf32, #tpu.memory_space<vmem>>, vector<32x16xf32>
    %311 = vector.extract_strided_slice %309 {offsets = [0, 0], sizes = [1, 1], strides = [1, 1]} : vector<4x1xf32> to vector<1x1xf32>
    %312 = vector.extract_strided_slice %310 {offsets = [0, 0], sizes = [8, 16], strides = [1, 1]} : vector<32x16xf32> to vector<8x16xf32>
    %313 = vector.broadcast %311 : vector<1x1xf32> to vector<8x16xf32>
    %314 = arith.mulf %313, %312 : vector<8x16xf32>
    %315 = vector.extract_strided_slice %309 {offsets = [1, 0], sizes = [1, 1], strides = [1, 1]} : vector<4x1xf32> to vector<1x1xf32>
    %316 = vector.extract_strided_slice %310 {offsets = [8, 0], sizes = [8, 16], strides = [1, 1]} : vector<32x16xf32> to vector<8x16xf32>
    %317 = vector.broadcast %315 : vector<1x1xf32> to vector<8x16xf32>
    %318 = arith.mulf %317, %316 : vector<8x16xf32>
    %319 = arith.addf %314, %318 : vector<8x16xf32>
    %320 = vector.extract_strided_slice %309 {offsets = [2, 0], sizes = [1, 1], strides = [1, 1]} : vector<4x1xf32> to vector<1x1xf32>
    %321 = vector.extract_strided_slice %310 {offsets = [16, 0], sizes = [8, 16], strides = [1, 1]} : vector<32x16xf32> to vector<8x16xf32>
    %322 = vector.broadcast %320 : vector<1x1xf32> to vector<8x16xf32>
    %323 = arith.mulf %322, %321 : vector<8x16xf32>
    %324 = arith.addf %319, %323 : vector<8x16xf32>
    %325 = vector.extract_strided_slice %309 {offsets = [3, 0], sizes = [1, 1], strides = [1, 1]} : vector<4x1xf32> to vector<1x1xf32>
    %326 = vector.extract_strided_slice %310 {offsets = [24, 0], sizes = [8, 16], strides = [1, 1]} : vector<32x16xf32> to vector<8x16xf32>
    %327 = vector.broadcast %325 : vector<1x1xf32> to vector<8x16xf32>
    %328 = arith.mulf %327, %326 : vector<8x16xf32>
    %329 = arith.addf %324, %328 : vector<8x16xf32>
    %330 = vector.extract_strided_slice %307 {offsets = [0, 0], sizes = [16, 256], strides = [1, 1]} : vector<32x256xf32> to vector<16x256xf32>
    %cst_70 = arith.constant dense<0.000000e+00> : vector<8x256xf32>
    %331 = tpu.matmul %329, %330, %cst_70 {dimension_numbers = #tpu.dot_dimension_numbers<[1], [0], [0], [1], [0, 0, 1, 1], [], []>} : vector<8x16xf32>, vector<16x256xf32>, vector<8x256xf32> -> vector<8x256xf32>
    %332 = vector.broadcast %308 : vector<8x1xf32> to vector<8x256xf32>
    %333 = arith.addf %331, %332 : vector<8x256xf32>
    %334 = vector.extract_strided_slice %0 {offsets = [0, 0], sizes = [8, 256], strides = [1, 1]} : vector<16x256xf32> to vector<8x256xf32>
    %335 = arith.addf %333, %334 : vector<8x256xf32>
    %336 = vector.extract_strided_slice %82 {offsets = [0, 1], sizes = [4, 1], strides = [1, 1]} : vector<4x2xf32> to vector<4x1xf32>
    %c336_71 = arith.constant 336 : index
    %c0_72 = arith.constant 0 : index
    %337 = vector.load %arg2[%c336_71, %c0_72] : memref<368x64xf32, #tpu.memory_space<vmem>>, vector<32x16xf32>
    %338 = vector.extract_strided_slice %336 {offsets = [0, 0], sizes = [1, 1], strides = [1, 1]} : vector<4x1xf32> to vector<1x1xf32>
    %339 = vector.extract_strided_slice %337 {offsets = [0, 0], sizes = [8, 16], strides = [1, 1]} : vector<32x16xf32> to vector<8x16xf32>
    %340 = vector.broadcast %338 : vector<1x1xf32> to vector<8x16xf32>
    %341 = arith.mulf %340, %339 : vector<8x16xf32>
    %342 = vector.extract_strided_slice %336 {offsets = [1, 0], sizes = [1, 1], strides = [1, 1]} : vector<4x1xf32> to vector<1x1xf32>
    %343 = vector.extract_strided_slice %337 {offsets = [8, 0], sizes = [8, 16], strides = [1, 1]} : vector<32x16xf32> to vector<8x16xf32>
    %344 = vector.broadcast %342 : vector<1x1xf32> to vector<8x16xf32>
    %345 = arith.mulf %344, %343 : vector<8x16xf32>
    %346 = arith.addf %341, %345 : vector<8x16xf32>
    %347 = vector.extract_strided_slice %336 {offsets = [2, 0], sizes = [1, 1], strides = [1, 1]} : vector<4x1xf32> to vector<1x1xf32>
    %348 = vector.extract_strided_slice %337 {offsets = [16, 0], sizes = [8, 16], strides = [1, 1]} : vector<32x16xf32> to vector<8x16xf32>
    %349 = vector.broadcast %347 : vector<1x1xf32> to vector<8x16xf32>
    %350 = arith.mulf %349, %348 : vector<8x16xf32>
    %351 = arith.addf %346, %350 : vector<8x16xf32>
    %352 = vector.extract_strided_slice %336 {offsets = [3, 0], sizes = [1, 1], strides = [1, 1]} : vector<4x1xf32> to vector<1x1xf32>
    %353 = vector.extract_strided_slice %337 {offsets = [24, 0], sizes = [8, 16], strides = [1, 1]} : vector<32x16xf32> to vector<8x16xf32>
    %354 = vector.broadcast %352 : vector<1x1xf32> to vector<8x16xf32>
    %355 = arith.mulf %354, %353 : vector<8x16xf32>
    %356 = arith.addf %351, %355 : vector<8x16xf32>
    %357 = vector.extract_strided_slice %307 {offsets = [16, 0], sizes = [16, 256], strides = [1, 1]} : vector<32x256xf32> to vector<16x256xf32>
    %cst_73 = arith.constant dense<0.000000e+00> : vector<8x256xf32>
    %358 = tpu.matmul %356, %357, %cst_73 {dimension_numbers = #tpu.dot_dimension_numbers<[1], [0], [0], [1], [0, 0, 1, 1], [], []>} : vector<8x16xf32>, vector<16x256xf32>, vector<8x256xf32> -> vector<8x256xf32>
    %359 = vector.broadcast %308 : vector<8x1xf32> to vector<8x256xf32>
    %360 = arith.addf %358, %359 : vector<8x256xf32>
    %361 = vector.extract_strided_slice %0 {offsets = [8, 0], sizes = [8, 256], strides = [1, 1]} : vector<16x256xf32> to vector<8x256xf32>
    %362 = arith.addf %360, %361 : vector<8x256xf32>
    %363 = tpu.concatenate %335, %362 in 0 : vector<8x256xf32>, vector<8x256xf32> -> vector<16x256xf32>
    %c0_74 = arith.constant 0 : index
    %c0_75 = arith.constant 0 : index
    %364 = vector.load %arg4[%c0_74, %c0_75] : memref<16x256xf32, #tpu.memory_space<vmem>>, vector<16x256xf32>
    tpu.vector_store %arg4[%c0_74, %c0_75], %363 {strides = array<i32>} : memref<16x256xf32, #tpu.memory_space<vmem>>, vector<16x256xf32>,
    return
  }
}

</mosaic_0001>

<llo_original>
// kernel: dy_block_forward.1
$region0: #{dy_block_forward.1}
  #allocation0 [shape = 'u32[]', space=smem, size = 0x4, offset = 0x4, fixed_abs, tag = 'smem constant byte address 0x4 - core index']
  #allocation1 [shape = 'u32[144,128]{1,0:T(1,128)}', space=vmem, size = 0x12000, scoped, tag = 'internal scratch']
  %s0 = inlined_call_operand.vmem [shape: f32[16,256], index: 0, kind: input, shape index: {}]
  %s1 = inlined_call_operand.vmem [shape: f32[80,256], index: 1, kind: input, shape index: {}]
  %s2 = inlined_call_operand.vmem [shape: f32[368,64], index: 2, kind: input, shape index: {}]
  %s3 = inlined_call_operand.vmem [shape: f32[264,1], index: 3, kind: input, shape index: {}]
  %s4 = inlined_call_operand.vmem [shape: f32[16,256], index: 4, kind: output, shape index: {}]
  %s5 = sld [smem:[#allocation0]]
  $region26: #{dy_block_forward.1} parent=0
    _
  %s7 = ssub.s32 1, %s5
  %s8 = scalar_select 0, %s7, %s5
  // Predicated region
  $region2: #{dy_block_forward.1} parent=0 // pred_check
    _
  $region3: #{dy_block_forward.1} parent=0 // pred_check_branch
    %10 = sbr.rel (0) target = $region5
  $region4: #{dy_block_forward.1} parent=0 // pred_region
    _
  $region5: #{dy_block_forward.1} parent=0 // pred_fallthru
    _
  // Predicated region
  $region6: #{dy_block_forward.1} parent=0 // pred_check
    _
  $region7: #{dy_block_forward.1} parent=0 // pred_check_branch
    %12 = sbr.rel (0) target = $region9
  $region8: #{dy_block_forward.1} parent=0 // pred_region
    _
  $region9: #{dy_block_forward.1} parent=0 // pred_fallthru
    _
  // Predicated region
  $region10: #{dy_block_forward.1} parent=0 // pred_check
    _
  $region11: #{dy_block_forward.1} parent=0 // pred_check_branch
    %14 = sbr.rel (0) target = $region13
  $region12: #{dy_block_forward.1} parent=0 // pred_region
    _
  $region13: #{dy_block_forward.1} parent=0 // pred_fallthru
    _
  // Predicated region
  $region14: #{dy_block_forward.1} parent=0 // pred_check
    _
  $region15: #{dy_block_forward.1} parent=0 // pred_check_branch
    %16 = sbr.rel (0) target = $region17
  $region16: #{dy_block_forward.1} parent=0 // pred_region
    _
  $region17: #{dy_block_forward.1} parent=0 // pred_fallthru
    _
  %v17 = vld [vmem:[%s0] sm:$0xff]
  %v18 = vld [vmem:[%s0 + $0x8] sm:$0xff]
  %v19 = vld [vmem:[%s0 + $0x10] sm:$0xff]
  %v20 = vld [vmem:[%s0 + $0x18] sm:$0xff]
  %v21 = vld [vmem:[%s1] sm:$0xff]
  %v22 = vld [vmem:[%s1 + $0x8] sm:$0xff]
  %v23 = vld [vmem:[%s1 + $0x10] sm:$0xff]
  %v24 = vld [vmem:[%s1 + $0x18] sm:$0xff]
  %v25 = vld [vmem:[%s1 + $0x20] sm:$0xff]
  %v26 = vld [vmem:[%s1 + $0x28] sm:$0xff]
  %v27 = vld [vmem:[%s1 + $0x30] sm:$0xff]
  %v28 = vld [vmem:[%s1 + $0x38] sm:$0xff]
  %29 = vmatprep.subr.mxu0 %v22
  %30 = vmatpush1.xpose.msra.mxu0 %v21
  %31 = vmatprep.subr.mxu0 %v24
  %32 = vmatpush1.xpose.msra.mxu0 %v23
  %33 = vmatprep.subr.mxu0 %v26
  %34 = vmatpush1.xpose.msra.mxu0 %v25
  %35 = vmatprep.subr.mxu0 %v28
  %36 = vmatpush1.xpose.msra.mxu0 %v27
  %37 = vmatprep.subr.mxu0 0.0
  %38 = vmatpush1.xpose.msra.mxu0 0.0
  %39 = vmatprep.subr.mxu0 0.0
  %40 = vmatpush1.xpose.msra.mxu0 0.0
  %41 = vmatprep.subr.mxu0 0.0
  %42 = vmatpush1.xpose.msra.mxu0 0.0
  %43 = vmatprep.subr.mxu0 0.0
  %44 = vmatpush1.xpose.msra.mxu0 0.0
  %45 = vmatprep.subr.mxu0 0.0
  %46 = vmatpush1.xpose.msra.mxu0 0.0
  %47 = vmatprep.subr.mxu0 0.0
  %48 = vmatpush1.xpose.msra.mxu0 0.0
  %49 = vmatprep.subr.mxu0 0.0
  %50 = vmatpush1.xpose.msra.mxu0 0.0
  %51 = vmatprep.subr.mxu0 0.0
  %52 = vmatpush1.xpose.msra.mxu0 0.0
  %53 = vmatprep.subr.mxu0 0.0
  %54 = vmatpush1.xpose.msra.mxu0 0.0
  %55 = vmatprep.subr.mxu0 0.0
  %56 = vmatpush1.xpose.msra.mxu0 0.0
  %57 = vmatprep.subr.mxu0 0.0
  %58 = vmatpush1.xpose.msra.mxu0 0.0
  %59 = vmatprep.subr.mxu0 0.0
  %60 = vmatpush1.xpose.msra.mxu0 0.0
  %61 = vmatprep.subr.mxu0 0.0
  %62 = vmatpush1.xpose.msra.mxu0 0.0
  %63 = vmatprep.subr.mxu0 0.0
  %64 = vmatpush1.xpose.msra.mxu0 0.0
  %65 = vmatprep.subr.mxu0 0.0
  %66 = vmatpush1.xpose.msra.mxu0 0.0
  %67 = vmatprep.subr.mxu0 0.0
  %68 = vmatpush1.xpose.msra.mxu0 0.0
  %69 = vmatprep.subr.mxu0 0.0
  %70 = vmatpush1.xpose.msra.mxu0 0.0
  %71 = vmatprep.subr.mxu0 0.0
  %72 = vmatpush1.xpose.msra.mxu0 0.0
  %73 = vmatprep.subr.mxu0 0.0
  %74 = vmatpush1.xpose.msra.mxu0 0.0
  %75 = vmatprep.subr.mxu0 0.0
  %76 = vmatpush1.xpose.msra.mxu0 0.0
  %77 = vmatprep.subr.mxu0 0.0
  %78 = vmatpush1.xpose.msra.mxu0 0.0
  %79 = vmatprep.subr.mxu0 0.0
  %80 = vmatpush1.xpose.msra.mxu0 0.0
  %81 = vmatprep.subr.mxu0 0.0
  %82 = vmatpush1.xpose.msra.mxu0 0.0
  %83 = vmatprep.subr.mxu0 0.0
  %84 = vmatpush1.xpose.msra.mxu0 0.0
  %85 = vmatprep.subr.mxu0 0.0
  %86 = vmatpush1.xpose.msra.mxu0 0.0
  %87 = vmatprep.subr.mxu0 0.0
  %88 = vmatpush1.xpose.msra.mxu0 0.0
  %89 = vmatprep.subr.mxu0 0.0
  %90 = vmatpush1.xpose.msra.mxu0 0.0
  %91 = vmatprep.subr.mxu0 0.0
  %92 = vmatpush1.xpose.msra.mxu0 0.0
  %93 = vmatprep.mubr.f32.mxu0 %v18
  %94 = vmatmul.mubr.f32.gmra.mrb[0].mxu0 %v17
  %v95 = vpop.f32.mrb[0].mxu0
  %v96 = vadd.f32 0.0, %v95
  %v97 = vpop.f32.mrb[0].mxu0
  %98 = vmatprep.mubr.f32.mxu0 %v20
  %99 = vmatmul.mubr.f32.gmra.mrb[0].mxu0 %v19
  %v100 = vpop.f32.mrb[0].mxu0
  %v101 = vadd.f32 0.0, %v100
  %v102 = vpop.f32.mrb[0].mxu0
  %103 = vdwg.mxu0
  %v104 = vld [vmem:[%s2] sm:$0xff]
  %v105 = vld [vmem:[%s2 + $0x8] sm:$0xff]
  %v106 = vld [vmem:[%s2 + $0x10] sm:$0xff]
  %v107 = vld [vmem:[%s2 + $0x18] sm:$0xff]
  %v108 = vld [vmem:[%s2 + $0x20] sm:$0xff]
  %v109 = vld [vmem:[%s2 + $0x28] sm:$0xff]
  %v110 = vld [vmem:[%s2 + $0x30] sm:$0xff]
  %v111 = vld [vmem:[%s2 + $0x38] sm:$0xff]
  %v112 = vld [vmem:[%s3] sm:$0xff]
  %v113 = vld [vmem:[%s3 + $0x8] sm:$0xff]
  %v114 = vld [vmem:[%s3 + $0x10] sm:$0xff]
  %v115 = vld [vmem:[%s3 + $0x18] sm:$0xff]
  %v116 = vld [vmem:[%s3 + $0x20] sm:$0xff]
  %v117 = vld [vmem:[%s3 + $0x28] sm:$0xff]
  %v118 = vld [vmem:[%s3 + $0x30] sm:$0xff]
  %v119 = vld [vmem:[%s3 + $0x38] sm:$0xff]
  %121 = vset.pattern.permute.xlu0 0
  %122 = vperm.xlu0 %121, %v112
  %v123 = vpop.permute.xlu0 %122
  %126 = vset.pattern.permute.xlu0 0
  %127 = vperm.xlu0 %126, %v113
  %v128 = vpop.permute.xlu0 %127
  %131 = vset.pattern.permute.xlu0 0
  %132 = vperm.xlu0 %131, %v114
  %v133 = vpop.permute.xlu0 %132
  %136 = vset.pattern.permute.xlu0 0
  %137 = vperm.xlu0 %136, %v115
  %v138 = vpop.permute.xlu0 %137
  %141 = vset.pattern.permute.xlu0 0
  %142 = vperm.xlu0 %141, %v116
  %v143 = vpop.permute.xlu0 %142
  %146 = vset.pattern.permute.xlu0 0
  %147 = vperm.xlu0 %146, %v117
  %v148 = vpop.permute.xlu0 %147
  %151 = vset.pattern.permute.xlu0 0
  %152 = vperm.xlu0 %151, %v118
  %v153 = vpop.permute.xlu0 %152
  %156 = vset.pattern.permute.xlu0 0
  %157 = vperm.xlu0 %156, %v119
  %v158 = vpop.permute.xlu0 %157
  %vm160 = vcmask 130048
  %v162 = vsel %vm160, %v104, 0
  %v165 = vsel %vm160, %v105, 0
  %v168 = vsel %vm160, %v106, 0
  %v171 = vsel %vm160, %v107, 0
  %v174 = vsel %vm160, %v108, 0
  %v177 = vsel %vm160, %v109, 0
  %v180 = vsel %vm160, %v110, 0
  %v183 = vsel %vm160, %v111, 0
  %185 = vmatprep.subr.mxu0 0.0
  %186 = vmatpush1.msra.mxu0 %v96
  %187 = vmatprep.subr.mxu0 0.0
  %188 = vmatpush1.msra.mxu0 %v101
  %189 = vmatprep.subr.mxu0 0.0
  %190 = vmatpush1.msra.mxu0 0.0
  %191 = vmatprep.subr.mxu0 0.0
  %192 = vmatpush1.msra.mxu0 0.0
  %193 = vmatprep.subr.mxu0 0.0
  %194 = vmatpush1.msra.mxu0 0.0
  %195 = vmatprep.subr.mxu0 0.0
  %196 = vmatpush1.msra.mxu0 0.0
  %197 = vmatprep.subr.mxu0 0.0
  %198 = vmatpush1.msra.mxu0 0.0
  %199 = vmatprep.subr.mxu0 0.0
  %200 = vmatpush1.msra.mxu0 0.0
  %201 = vmatprep.subr.mxu0 0.0
  %202 = vmatpush1.msra.mxu0 0.0
  %203 = vmatprep.subr.mxu0 0.0
  %204 = vmatpush1.msra.mxu0 0.0
  %205 = vmatprep.subr.mxu0 0.0
  %206 = vmatpush1.msra.mxu0 0.0
  %207 = vmatprep.subr.mxu0 0.0
  %208 = vmatpush1.msra.mxu0 0.0
  %209 = vmatprep.subr.mxu0 0.0
  %210 = vmatpush1.msra.mxu0 0.0
  %211 = vmatprep.subr.mxu0 0.0
  %212 = vmatpush1.msra.mxu0 0.0
  %213 = vmatprep.subr.mxu0 0.0
  %214 = vmatpush1.msra.mxu0 0.0
  %215 = vmatprep.subr.mxu0 0.0
  %216 = vmatpush1.msra.mxu0 0.0
  %217 = vmatprep.subr.mxu0 0.0
  %218 = vmatpush1.msra.mxu0 0.0
  %219 = vmatprep.subr.mxu0 0.0
  %220 = vmatpush1.msra.mxu0 0.0
  %221 = vmatprep.subr.mxu0 0.0
  %222 = vmatpush1.msra.mxu0 0.0
  %223 = vmatprep.subr.mxu0 0.0
  %224 = vmatpush1.msra.mxu0 0.0
  %225 = vmatprep.subr.mxu0 0.0
  %226 = vmatpush1.msra.mxu0 0.0
  %227 = vmatprep.subr.mxu0 0.0
  %228 = vmatpush1.msra.mxu0 0.0
  %229 = vmatprep.subr.mxu0 0.0
  %230 = vmatpush1.msra.mxu0 0.0
  %231 = vmatprep.subr.mxu0 0.0
  %232 = vmatpush1.msra.mxu0 0.0
  %233 = vmatprep.subr.mxu0 0.0
  %234 = vmatpush1.msra.mxu0 0.0
  %235 = vmatprep.subr.mxu0 0.0
  %236 = vmatpush1.msra.mxu0 0.0
  %237 = vmatprep.subr.mxu0 0.0
  %238 = vmatpush1.msra.mxu0 0.0
  %239 = vmatprep.subr.mxu0 0.0
  %240 = vmatpush1.msra.mxu0 0.0
  %241 = vmatprep.subr.mxu0 0.0
  %242 = vmatpush1.msra.mxu0 0.0
  %243 = vmatprep.subr.mxu0 0.0
  %244 = vmatpush1.msra.mxu0 0.0
  %245 = vmatprep.subr.mxu0 0.0
  %246 = vmatpush1.msra.mxu0 0.0
  %247 = vmatprep.subr.mxu0 0.0
  %248 = vmatpush1.msra.mxu0 0.0
  %249 = vmatprep.mubr.f32.mxu0 0.0
  %250 = vmatmul.mubr.f32.gmra.mrb[0].mxu0 %v162
  %v251 = vpop.f32.mrb[0].mxu0
  %v252 = vadd.f32 %v123, %v251
  %v253 = vpop.f32.mrb[0].mxu0
  %254 = vmatprep.mubr.f32.mxu0 0.0
  %255 = vmatmul.mubr.f32.gmra.mrb[0].mxu0 %v165
  %v256 = vpop.f32.mrb[0].mxu0
  %v257 = vadd.f32 %v128, %v256
  %v258 = vpop.f32.mrb[0].mxu0
  %259 = vmatprep.mubr.f32.mxu0 0.0
  %260 = vmatmul.mubr.f32.gmra.mrb[0].mxu0 %v168
  %v261 = vpop.f32.mrb[0].mxu0
  %v262 = vadd.f32 %v133, %v261
  %v263 = vpop.f32.mrb[0].mxu0
  %264 = vmatprep.mubr.f32.mxu0 0.0
  %265 = vmatmul.mubr.f32.gmra.mrb[0].mxu0 %v171
  %v266 = vpop.f32.mrb[0].mxu0
  %v267 = vadd.f32 %v138, %v266
  %v268 = vpop.f32.mrb[0].mxu0
  %269 = vmatprep.mubr.f32.mxu0 0.0
  %270 = vmatmul.mubr.f32.gmra.mrb[0].mxu0 %v174
  %v271 = vpop.f32.mrb[0].mxu0
  %v272 = vadd.f32 %v143, %v271
  %v273 = vpop.f32.mrb[0].mxu0
  %274 = vmatprep.mubr.f32.mxu0 0.0
  %275 = vmatmul.mubr.f32.gmra.mrb[0].mxu0 %v177
  %v276 = vpop.f32.mrb[0].mxu0
  %v277 = vadd.f32 %v148, %v276
  %v278 = vpop.f32.mrb[0].mxu0
  %279 = vmatprep.mubr.f32.mxu0 0.0
  %280 = vmatmul.mubr.f32.gmra.mrb[0].mxu0 %v180
  %v281 = vpop.f32.mrb[0].mxu0
  %v282 = vadd.f32 %v153, %v281
  %v283 = vpop.f32.mrb[0].mxu0
  %284 = vmatprep.mubr.f32.mxu0 0.0
  %285 = vmatmul.mubr.f32.gmra.mrb[0].mxu0 %v183
  %v286 = vpop.f32.mrb[0].mxu0
  %v287 = vadd.f32 %v158, %v286
  %v288 = vpop.f32.mrb[0].mxu0
  %289 = vdwg.mxu0
  %v290 = vadd.f32 %v252, 3.0
  %v291 = vadd.f32 %v257, 3.0
  %v292 = vadd.f32 %v262, 3.0
  %v293 = vadd.f32 %v267, 3.0
  %v294 = vadd.f32 %v272, 3.0
  %v295 = vadd.f32 %v277, 3.0
  %v296 = vadd.f32 %v282, 3.0
  %v297 = vadd.f32 %v287, 3.0
  %v298 = vmax.f32 %v290, 0.0
  %v299 = vmax.f32 %v291, 0.0
  %v300 = vmax.f32 %v292, 0.0
  %v301 = vmax.f32 %v293, 0.0
  %v302 = vmax.f32 %v294, 0.0
  %v303 = vmax.f32 %v295, 0.0
  %v304 = vmax.f32 %v296, 0.0
  %v305 = vmax.f32 %v297, 0.0
  %v306 = vmin.f32 %v298, 6.0
  %v307 = vmin.f32 %v299, 6.0
  %v308 = vmin.f32 %v300, 6.0
  %v309 = vmin.f32 %v301, 6.0
  %v310 = vmin.f32 %v302, 6.0
  %v311 = vmin.f32 %v303, 6.0
  %v312 = vmin.f32 %v304, 6.0
  %v313 = vmin.f32 %v305, 6.0
  %v314 = vmul.f32 %v252, %v306
  %v315 = vmul.f32 %v257, %v307
  %v316 = vmul.f32 %v262, %v308
  %v317 = vmul.f32 %v267, %v309
  %v318 = vmul.f32 %v272, %v310
  %v319 = vmul.f32 %v277, %v311
  %v320 = vmul.f32 %v282, %v312
  %v321 = vmul.f32 %v287, %v313
  %v322 = vmul.f32 %v314, 0.16666667
  %v323 = vmul.f32 %v315, 0.16666667
  %v324 = vmul.f32 %v316, 0.16666667
  %v325 = vmul.f32 %v317, 0.16666667
  %v326 = vmul.f32 %v318, 0.16666667
  %v327 = vmul.f32 %v319, 0.16666667
  %v328 = vmul.f32 %v320, 0.16666667
  %v329 = vmul.f32 %v321, 0.16666667
  %v330 = vld [vmem:[%s2 + $0x40] sm:$0xff]
  %v331 = vld [vmem:[%s2 + $0x48] sm:$0xff]
  %v332 = vld [vmem:[%s2 + $0x50] sm:$0xff]
  %v333 = vld [vmem:[%s2 + $0x58] sm:$0xff]
  %v334 = vld [vmem:[%s2 + $0x60] sm:$0xff]
  %v335 = vld [vmem:[%s2 + $0x68] sm:$0xff]
  %v336 = vld [vmem:[%s2 + $0x70] sm:$0xff]
  %v337 = vld [vmem:[%s2 + $0x78] sm:$0xff]
  %v338 = vld [vmem:[%s3 + $0x40] sm:$0xff]
  %v339 = vld [vmem:[%s3 + $0x48] sm:$0xff]
  %v340 = vld [vmem:[%s3 + $0x50] sm:$0xff]
  %v341 = vld [vmem:[%s3 + $0x58] sm:$0xff]
  %v342 = vld [vmem:[%s3 + $0x60] sm:$0xff]
  %v343 = vld [vmem:[%s3 + $0x68] sm:$0xff]
  %v344 = vld [vmem:[%s3 + $0x70] sm:$0xff]
  %v345 = vld [vmem:[%s3 + $0x78] sm:$0xff]
  %347 = vset.pattern.permute.xlu0 0
  %348 = vperm.xlu0 %347, %v338
  %v349 = vpop.permute.xlu0 %348
  %352 = vset.pattern.permute.xlu0 0
  %353 = vperm.xlu0 %352, %v339
  %v354 = vpop.permute.xlu0 %353
  %357 = vset.pattern.permute.xlu0 0
  %358 = vperm.xlu0 %357, %v340
  %v359 = vpop.permute.xlu0 %358
  %362 = vset.pattern.permute.xlu0 0
  %363 = vperm.xlu0 %362, %v341
  %v364 = vpop.permute.xlu0 %363
  %367 = vset.pattern.permute.xlu0 0
  %368 = vperm.xlu0 %367, %v342
  %v369 = vpop.permute.xlu0 %368
  %372 = vset.pattern.permute.xlu0 0
  %373 = vperm.xlu0 %372, %v343
  %v374 = vpop.permute.xlu0 %373
  %377 = vset.pattern.permute.xlu0 0
  %378 = vperm.xlu0 %377, %v344
  %v379 = vpop.permute.xlu0 %378
  %382 = vset.pattern.permute.xlu0 0
  %383 = vperm.xlu0 %382, %v345
  %v384 = vpop.permute.xlu0 %383
  %vm386 = vcmask 523264
  %v388 = vsel %vm386, %v330, 0
  %v391 = vsel %vm386, %v331, 0
  %v394 = vsel %vm386, %v332, 0
  %v397 = vsel %vm386, %v333, 0
  %v400 = vsel %vm386, %v334, 0
  %v403 = vsel %vm386, %v335, 0
  %v406 = vsel %vm386, %v336, 0
  %v409 = vsel %vm386, %v337, 0
  %411 = vmatprep.subr.mxu0 0.0
  %412 = vmatpush1.msra.mxu0 %v322
  %413 = vmatprep.subr.mxu0 0.0
  %414 = vmatpush1.msra.mxu0 %v323
  %415 = vmatprep.subr.mxu0 0.0
  %416 = vmatpush1.msra.mxu0 %v324
  %417 = vmatprep.subr.mxu0 0.0
  %418 = vmatpush1.msra.mxu0 %v325
  %419 = vmatprep.subr.mxu0 0.0
  %420 = vmatpush1.msra.mxu0 %v326
  %421 = vmatprep.subr.mxu0 0.0
  %422 = vmatpush1.msra.mxu0 %v327
  %423 = vmatprep.subr.mxu0 0.0
  %424 = vmatpush1.msra.mxu0 %v328
  %425 = vmatprep.subr.mxu0 0.0
  %426 = vmatpush1.msra.mxu0 %v329
  %427 = vmatprep.subr.mxu0 0.0
  %428 = vmatpush1.msra.mxu0 0.0
  %429 = vmatprep.subr.mxu0 0.0
  %430 = vmatpush1.msra.mxu0 0.0
  %431 = vmatprep.subr.mxu0 0.0
  %432 = vmatpush1.msra.mxu0 0.0
  %433 = vmatprep.subr.mxu0 0.0
  %434 = vmatpush1.msra.mxu0 0.0
  %435 = vmatprep.subr.mxu0 0.0
  %436 = vmatpush1.msra.mxu0 0.0
  %437 = vmatprep.subr.mxu0 0.0
  %438 = vmatpush1.msra.mxu0 0.0
  %439 = vmatprep.subr.mxu0 0.0
  %440 = vmatpush1.msra.mxu0 0.0
  %441 = vmatprep.subr.mxu0 0.0
  %442 = vmatpush1.msra.mxu0 0.0
  %443 = vmatprep.subr.mxu0 0.0
  %444 = vmatpush1.msra.mxu0 0.0
  %445 = vmatprep.subr.mxu0 0.0
  %446 = vmatpush1.msra.mxu0 0.0
  %447 = vmatprep.subr.mxu0 0.0
  %448 = vmatpush1.msra.mxu0 0.0
  %449 = vmatprep.subr.mxu0 0.0
  %450 = vmatpush1.msra.mxu0 0.0
  %451 = vmatprep.subr.mxu0 0.0
  %452 = vmatpush1.msra.mxu0 0.0
  %453 = vmatprep.subr.mxu0 0.0
  %454 = vmatpush1.msra.mxu0 0.0
  %455 = vmatprep.subr.mxu0 0.0
  %456 = vmatpush1.msra.mxu0 0.0
  %457 = vmatprep.subr.mxu0 0.0
  %458 = vmatpush1.msra.mxu0 0.0
  %459 = vmatprep.subr.mxu0 0.0
  %460 = vmatpush1.msra.mxu0 0.0
  %461 = vmatprep.subr.mxu0 0.0
  %462 = vmatpush1.msra.mxu0 0.0
  %463 = vmatprep.subr.mxu0 0.0
  %464 = vmatpush1.msra.mxu0 0.0
  %465 = vmatprep.subr.mxu0 0.0
  %466 = vmatpush1.msra.mxu0 0.0
  %467 = vmatprep.subr.mxu0 0.0
  %468 = vmatpush1.msra.mxu0 0.0
  %469 = vmatprep.subr.mxu0 0.0
  %470 = vmatpush1.msra.mxu0 0.0
  %471 = vmatprep.subr.mxu0 0.0
  %472 = vmatpush1.msra.mxu0 0.0
  %473 = vmatprep.subr.mxu0 0.0
  %474 = vmatpush1.msra.mxu0 0.0
  %475 = vmatprep.mubr.f32.mxu0 0.0
  %476 = vmatmul.mubr.f32.gmra.mrb[0].mxu0 %v388
  %v477 = vpop.f32.mrb[0].mxu0
  %v478 = vadd.f32 %v349, %v477
  %v479 = vpop.f32.mrb[0].mxu0
  %480 = vmatprep.mubr.f32.mxu0 0.0
  %481 = vmatmul.mubr.f32.gmra.mrb[0].mxu0 %v391
  %v482 = vpop.f32.mrb[0].mxu0
  %v483 = vadd.f32 %v354, %v482
  %v484 = vpop.f32.mrb[0].mxu0
  %485 = vmatprep.mubr.f32.mxu0 0.0
  %486 = vmatmul.mubr.f32.gmra.mrb[0].mxu0 %v394
  %v487 = vpop.f32.mrb[0].mxu0
  %v488 = vadd.f32 %v359, %v487
  %v489 = vpop.f32.mrb[0].mxu0
  %490 = vmatprep.mubr.f32.mxu0 0.0
  %491 = vmatmul.mubr.f32.gmra.mrb[0].mxu0 %v397
  %v492 = vpop.f32.mrb[0].mxu0
  %v493 = vadd.f32 %v364, %v492
  %v494 = vpop.f32.mrb[0].mxu0
  %495 = vmatprep.mubr.f32.mxu0 0.0
  %496 = vmatmul.mubr.f32.gmra.mrb[0].mxu0 %v400
  %v497 = vpop.f32.mrb[0].mxu0
  %v498 = vadd.f32 %v369, %v497
  %v499 = vpop.f32.mrb[0].mxu0
  %500 = vmatprep.mubr.f32.mxu0 0.0
  %501 = vmatmul.mubr.f32.gmra.mrb[0].mxu0 %v403
  %v502 = vpop.f32.mrb[0].mxu0
  %v503 = vadd.f32 %v374, %v502
  %v504 = vpop.f32.mrb[0].mxu0
  %505 = vmatprep.mubr.f32.mxu0 0.0
  %506 = vmatmul.mubr.f32.gmra.mrb[0].mxu0 %v406
  %v507 = vpop.f32.mrb[0].mxu0
  %v508 = vadd.f32 %v379, %v507
  %v509 = vpop.f32.mrb[0].mxu0
  %510 = vmatprep.mubr.f32.mxu0 0.0
  %511 = vmatmul.mubr.f32.gmra.mrb[0].mxu0 %v409
  %v512 = vpop.f32.mrb[0].mxu0
  %v513 = vadd.f32 %v384, %v512
  %v514 = vpop.f32.mrb[0].mxu0
  %515 = vdwg.mxu0
  %v516 = vxor.u32 %v478, 2147483648
  %v517 = vxor.u32 %v483, 2147483648
  %v518 = vxor.u32 %v488, 2147483648
  %v519 = vxor.u32 %v493, 2147483648
  %v520 = vxor.u32 %v498, 2147483648
  %v521 = vxor.u32 %v503, 2147483648
  %v522 = vxor.u32 %v508, 2147483648
  %v523 = vxor.u32 %v513, 2147483648
  %v524 = vmul.f32 %v516, 1.442695
  %v525 = vpow.pop %v524
  %v526 = vmul.f32 %v517, 1.442695
  %v527 = vpow.pop %v526
  %v528 = vmul.f32 %v518, 1.442695
  %v529 = vpow.pop %v528
  %v530 = vmul.f32 %v519, 1.442695
  %v531 = vpow.pop %v530
  %v532 = vmul.f32 %v520, 1.442695
  %v533 = vpow.pop %v532
  %v534 = vmul.f32 %v521, 1.442695
  %v535 = vpow.pop %v534
  %v536 = vmul.f32 %v522, 1.442695
  %v537 = vpow.pop %v536
  %v538 = vmul.f32 %v523, 1.442695
  %v539 = vpow.pop %v538
  %v540 = vadd.f32 %v525, 1.0
  %v541 = vadd.f32 %v527, 1.0
  %v542 = vadd.f32 %v529, 1.0
  %v543 = vadd.f32 %v531, 1.0
  %v544 = vadd.f32 %v533, 1.0
  %v545 = vadd.f32 %v535, 1.0
  %v546 = vadd.f32 %v537, 1.0
  %v547 = vadd.f32 %v539, 1.0
  %v548 = vrcp.pop %v540
  %v549 = vmul.f32 1.0, %v548
  %v550 = vrcp.pop %v541
  %v551 = vmul.f32 1.0, %v550
  %v552 = vrcp.pop %v542
  %v553 = vmul.f32 1.0, %v552
  %v554 = vrcp.pop %v543
  %v555 = vmul.f32 1.0, %v554
  %v556 = vrcp.pop %v544
  %v557 = vmul.f32 1.0, %v556
  %v558 = vrcp.pop %v545
  %v559 = vmul.f32 1.0, %v558
  %v560 = vrcp.pop %v546
  %v561 = vmul.f32 1.0, %v560
  %v562 = vrcp.pop %v547
  %v563 = vmul.f32 1.0, %v562
  %v564 = vld [vmem:[%s1 + $0x40] sm:$0xff]
  %v565 = vld [vmem:[%s1 + $0x48] sm:$0xff]
  %v566 = vld [vmem:[%s1 + $0x50] sm:$0xff]
  %v567 = vld [vmem:[%s1 + $0x58] sm:$0xff]
  %v569 = vsel %vm160, %v549, 0
  %v572 = vsel %vm160, %v551, 0
  %v575 = vsel %vm160, %v557, 0
  %v578 = vsel %vm160, %v559, 0
  %580 = vmatprep.subr.mxu0 %v565
  %581 = vmatpush1.msra.mxu0 %v564
  %582 = vmatprep.subr.mxu0 %v567
  %583 = vmatpush1.msra.mxu0 %v566
  %584 = vmatprep.subr.mxu0 0.0
  %585 = vmatpush1.msra.mxu0 0.0
  %586 = vmatprep.subr.mxu0 0.0
  %587 = vmatpush1.msra.mxu0 0.0
  %588 = vmatprep.subr.mxu0 0.0
  %589 = vmatpush1.msra.mxu0 0.0
  %590 = vmatprep.subr.mxu0 0.0
  %591 = vmatpush1.msra.mxu0 0.0
  %592 = vmatprep.subr.mxu0 0.0
  %593 = vmatpush1.msra.mxu0 0.0
  %594 = vmatprep.subr.mxu0 0.0
  %595 = vmatpush1.msra.mxu0 0.0
  %596 = vmatprep.subr.mxu0 0.0
  %597 = vmatpush1.msra.mxu0 0.0
  %598 = vmatprep.subr.mxu0 0.0
  %599 = vmatpush1.msra.mxu0 0.0
  %600 = vmatprep.subr.mxu0 0.0
  %601 = vmatpush1.msra.mxu0 0.0
  %602 = vmatprep.subr.mxu0 0.0
  %603 = vmatpush1.msra.mxu0 0.0
  %604 = vmatprep.subr.mxu0 0.0
  %605 = vmatpush1.msra.mxu0 0.0
  %606 = vmatprep.subr.mxu0 0.0
  %607 = vmatpush1.msra.mxu0 0.0
  %608 = vmatprep.subr.mxu0 0.0
  %609 = vmatpush1.msra.mxu0 0.0
  %610 = vmatprep.subr.mxu0 0.0
  %611 = vmatpush1.msra.mxu0 0.0
  %612 = vmatprep.subr.mxu0 0.0
  %613 = vmatpush1.msra.mxu0 0.0
  %614 = vmatprep.subr.mxu0 0.0
  %615 = vmatpush1.msra.mxu0 0.0
  %616 = vmatprep.subr.mxu0 0.0
  %617 = vmatpush1.msra.mxu0 0.0
  %618 = vmatprep.subr.mxu0 0.0
  %619 = vmatpush1.msra.mxu0 0.0
  %620 = vmatprep.subr.mxu0 0.0
  %621 = vmatpush1.msra.mxu0 0.0
  %622 = vmatprep.subr.mxu0 0.0
  %623 = vmatpush1.msra.mxu0 0.0
  %624 = vmatprep.subr.mxu0 0.0
  %625 = vmatpush1.msra.mxu0 0.0
  %626 = vmatprep.subr.mxu0 0.0
  %627 = vmatpush1.msra.mxu0 0.0
  %628 = vmatprep.subr.mxu0 0.0
  %629 = vmatpush1.msra.mxu0 0.0
  %630 = vmatprep.subr.mxu0 0.0
  %631 = vmatpush1.msra.mxu0 0.0
  %632 = vmatprep.subr.mxu0 0.0
  %633 = vmatpush1.msra.mxu0 0.0
  %634 = vmatprep.subr.mxu0 0.0
  %635 = vmatpush1.msra.mxu0 0.0
  %636 = vmatprep.subr.mxu0 0.0
  %637 = vmatpush1.msra.mxu0 0.0
  %638 = vmatprep.subr.mxu0 0.0
  %639 = vmatpush1.msra.mxu0 0.0
  %640 = vmatprep.subr.mxu0 0.0
  %641 = vmatpush1.msra.mxu0 0.0
  %642 = vmatprep.subr.mxu0 0.0
  %643 = vmatpush1.msra.mxu0 0.0
  %644 = vmatprep.mubr.f32.mxu0 0.0
  %645 = vmatmul.mubr.f32.gmra.mrb[0].mxu0 %v569
  %v646 = vpop.f32.mrb[0].mxu0
  %v647 = vadd.f32 0.0, %v646
  %v648 = vpop.f32.mrb[0].mxu0
  %v649 = vadd.f32 0.0, %v648
  %650 = vmatprep.mubr.f32.mxu0 0.0
  %651 = vmatmul.mubr.f32.gmra.mrb[0].mxu0 %v572
  %v652 = vpop.f32.mrb[0].mxu0
  %v653 = vadd.f32 0.0, %v652
  %v654 = vpop.f32.mrb[0].mxu0
  %v655 = vadd.f32 0.0, %v654
  %656 = vmatprep.mubr.f32.mxu0 0.0
  %657 = vmatmul.mubr.f32.gmra.mrb[0].mxu0 %v575
  %v658 = vpop.f32.mrb[0].mxu0
  %v659 = vadd.f32 0.0, %v658
  %v660 = vpop.f32.mrb[0].mxu0
  %v661 = vadd.f32 0.0, %v660
  %662 = vmatprep.mubr.f32.mxu0 0.0
  %663 = vmatmul.mubr.f32.gmra.mrb[0].mxu0 %v578
  %v664 = vpop.f32.mrb[0].mxu0
  %v665 = vadd.f32 0.0, %v664
  %v666 = vpop.f32.mrb[0].mxu0
  %v667 = vadd.f32 0.0, %v666
  %668 = vdwg.mxu0
  %v669 = vld [vmem:[%s1 + $0x60] sm:$0xff]
  %v670 = vld [vmem:[%s1 + $0x68] sm:$0xff]
  %v671 = vld [vmem:[%s1 + $0x70] sm:$0xff]
  %v672 = vld [vmem:[%s1 + $0x78] sm:$0xff]
  %677 = vrot.lane.b32.xlu0 %v553, 112
  %v678 = vpop.permute.xlu0 %677
  %679 = vrot.lane.b32.xlu0 %v555, 112
  %v680 = vpop.permute.xlu0 %679
  %681 = vrot.lane.b32.xlu0 %v561, 112
  %v682 = vpop.permute.xlu0 %681
  %683 = vrot.lane.b32.xlu0 %v563, 112
  %v684 = vpop.permute.xlu0 %683
  %v685 = vsel %vm160, %v678, 0
  %v687 = vsel %vm160, %v680, 0
  %v689 = vsel %vm160, %v682, 0
  %v691 = vsel %vm160, %v684, 0
  %693 = vmatprep.subr.mxu0 %v670
  %694 = vmatpush1.msra.mxu0 %v669
  %695 = vmatprep.subr.mxu0 %v672
  %696 = vmatpush1.msra.mxu0 %v671
  %697 = vmatprep.subr.mxu0 0.0
  %698 = vmatpush1.msra.mxu0 0.0
  %699 = vmatprep.subr.mxu0 0.0
  %700 = vmatpush1.msra.mxu0 0.0
  %701 = vmatprep.subr.mxu0 0.0
  %702 = vmatpush1.msra.mxu0 0.0
  %703 = vmatprep.subr.mxu0 0.0
  %704 = vmatpush1.msra.mxu0 0.0
  %705 = vmatprep.subr.mxu0 0.0
  %706 = vmatpush1.msra.mxu0 0.0
  %707 = vmatprep.subr.mxu0 0.0
  %708 = vmatpush1.msra.mxu0 0.0
  %709 = vmatprep.subr.mxu0 0.0
  %710 = vmatpush1.msra.mxu0 0.0
  %711 = vmatprep.subr.mxu0 0.0
  %712 = vmatpush1.msra.mxu0 0.0
  %713 = vmatprep.subr.mxu0 0.0
  %714 = vmatpush1.msra.mxu0 0.0
  %715 = vmatprep.subr.mxu0 0.0
  %716 = vmatpush1.msra.mxu0 0.0
  %717 = vmatprep.subr.mxu0 0.0
  %718 = vmatpush1.msra.mxu0 0.0
  %719 = vmatprep.subr.mxu0 0.0
  %720 = vmatpush1.msra.mxu0 0.0
  %721 = vmatprep.subr.mxu0 0.0
  %722 = vmatpush1.msra.mxu0 0.0
  %723 = vmatprep.subr.mxu0 0.0
  %724 = vmatpush1.msra.mxu0 0.0
  %725 = vmatprep.subr.mxu0 0.0
  %726 = vmatpush1.msra.mxu0 0.0
  %727 = vmatprep.subr.mxu0 0.0
  %728 = vmatpush1.msra.mxu0 0.0
  %729 = vmatprep.subr.mxu0 0.0
  %730 = vmatpush1.msra.mxu0 0.0
  %731 = vmatprep.subr.mxu0 0.0
  %732 = vmatpush1.msra.mxu0 0.0
  %733 = vmatprep.subr.mxu0 0.0
  %734 = vmatpush1.msra.mxu0 0.0
  %735 = vmatprep.subr.mxu0 0.0
  %736 = vmatpush1.msra.mxu0 0.0
  %737 = vmatprep.subr.mxu0 0.0
  %738 = vmatpush1.msra.mxu0 0.0
  %739 = vmatprep.subr.mxu0 0.0
  %740 = vmatpush1.msra.mxu0 0.0
  %741 = vmatprep.subr.mxu0 0.0
  %742 = vmatpush1.msra.mxu0 0.0
  %743 = vmatprep.subr.mxu0 0.0
  %744 = vmatpush1.msra.mxu0 0.0
  %745 = vmatprep.subr.mxu0 0.0
  %746 = vmatpush1.msra.mxu0 0.0
  %747 = vmatprep.subr.mxu0 0.0
  %748 = vmatpush1.msra.mxu0 0.0
  %749 = vmatprep.subr.mxu0 0.0
  %750 = vmatpush1.msra.mxu0 0.0
  %751 = vmatprep.subr.mxu0 0.0
  %752 = vmatpush1.msra.mxu0 0.0
  %753 = vmatprep.subr.mxu0 0.0
  %754 = vmatpush1.msra.mxu0 0.0
  %755 = vmatprep.subr.mxu0 0.0
  %756 = vmatpush1.msra.mxu0 0.0
  %757 = vmatprep.mubr.f32.mxu0 0.0
  %758 = vmatmul.mubr.f32.gmra.mrb[0].mxu0 %v685
  %v759 = vpop.f32.mrb[0].mxu0
  %v760 = vadd.f32 0.0, %v759
  %v761 = vpop.f32.mrb[0].mxu0
  %v762 = vadd.f32 0.0, %v761
  %763 = vmatprep.mubr.f32.mxu0 0.0
  %764 = vmatmul.mubr.f32.gmra.mrb[0].mxu0 %v687
  %v765 = vpop.f32.mrb[0].mxu0
  %v766 = vadd.f32 0.0, %v765
  %v767 = vpop.f32.mrb[0].mxu0
  %v768 = vadd.f32 0.0, %v767
  %769 = vmatprep.mubr.f32.mxu0 0.0
  %770 = vmatmul.mubr.f32.gmra.mrb[0].mxu0 %v689
  %v771 = vpop.f32.mrb[0].mxu0
  %v772 = vadd.f32 0.0, %v771
  %v773 = vpop.f32.mrb[0].mxu0
  %v774 = vadd.f32 0.0, %v773
  %775 = vmatprep.mubr.f32.mxu0 0.0
  %776 = vmatmul.mubr.f32.gmra.mrb[0].mxu0 %v691
  %v777 = vpop.f32.mrb[0].mxu0
  %v778 = vadd.f32 0.0, %v777
  %v779 = vpop.f32.mrb[0].mxu0
  %v780 = vadd.f32 0.0, %v779
  %781 = vdwg.mxu0
  %v782 = vmul.f32 %v647, %v760
  %v783 = vmul.f32 %v649, %v762
  %v784 = vmul.f32 %v653, %v766
  %v785 = vmul.f32 %v655, %v768
  %v786 = vmul.f32 %v659, %v772
  %v787 = vmul.f32 %v661, %v774
  %v788 = vmul.f32 %v665, %v778
  %v789 = vmul.f32 %v667, %v780
  %vm790 = vcmask 261120
  %v791 = vsel %vm790, %v322, 0.0
  %792 = vadd.xlane.f32.xlu0 %v791
  %v793 = vpop.xlane.xlu0 %792
  %v794 = vsel %vm790, %v323, 0.0
  %795 = vadd.xlane.f32.xlu0 %v794
  %v796 = vpop.xlane.xlu0 %795
  %v797 = vsel %vm790, %v324, 0.0
  %798 = vadd.xlane.f32.xlu0 %v797
  %v799 = vpop.xlane.xlu0 %798
  %v800 = vsel %vm790, %v325, 0.0
  %801 = vadd.xlane.f32.xlu0 %v800
  %v802 = vpop.xlane.xlu0 %801
  %v803 = vsel %vm790, %v326, 0.0
  %804 = vadd.xlane.f32.xlu0 %v803
  %v805 = vpop.xlane.xlu0 %804
  %v806 = vsel %vm790, %v327, 0.0
  %807 = vadd.xlane.f32.xlu0 %v806
  %v808 = vpop.xlane.xlu0 %807
  %v809 = vsel %vm790, %v328, 0.0
  %810 = vadd.xlane.f32.xlu0 %v809
  %v811 = vpop.xlane.xlu0 %810
  %v812 = vsel %vm790, %v329, 0.0
  %813 = vadd.xlane.f32.xlu0 %v812
  %v814 = vpop.xlane.xlu0 %813
  %v815 = vrcp.pop 32.0
  %v816 = vmul.f32 %v793, %v815
  %v817 = vmul.f32 %v796, %v815
  %v818 = vmul.f32 %v799, %v815
  %v819 = vmul.f32 %v802, %v815
  %v820 = vmul.f32 %v805, %v815
  %v821 = vmul.f32 %v808, %v815
  %v822 = vmul.f32 %v811, %v815
  %v823 = vmul.f32 %v814, %v815
  %vm824 = vcmask 7168
  %v825 = vsel %vm824, %v816, %v820
  %v826 = vsel %vm824, %v817, %v821
  %v827 = vsel %vm824, %v818, %v822
  %v828 = vsel %vm824, %v819, %v823
  %v829 = vld [vmem:[%s2 + $0x80] sm:$0xff]
  %v830 = vld [vmem:[%s2 + $0x88] sm:$0xff]
  %v831 = vld [vmem:[%s2 + $0x90] sm:$0xff]
  %v832 = vld [vmem:[%s2 + $0x98] sm:$0xff]
  %v833 = vld [vmem:[%s2 + $0xa0] sm:$0xff]
  %v834 = vld [vmem:[%s2 + $0xa8] sm:$0xff]
  %v835 = vld [vmem:[%s2 + $0xb0] sm:$0xff]
  %v836 = vld [vmem:[%s2 + $0xb8] sm:$0xff]
  %v837 = vld [vmem:[%s2 + $0xc0] sm:$0xff]
  %v838 = vld [vmem:[%s2 + $0xc8] sm:$0xff]
  %v839 = vld [vmem:[%s3 + $0x80] sm:$0xff]
  %v840 = vld [vmem:[%s3 + $0x88] sm:$0xff]
  %v841 = vld [vmem:[%s3 + $0x90] sm:$0xff]
  %v842 = vld [vmem:[%s3 + $0x98] sm:$0xff]
  %v843 = vld [vmem:[%s3 + $0xa0] sm:$0xff]
  %v844 = vld [vmem:[%s3 + $0xa8] sm:$0xff]
  %v845 = vld [vmem:[%s3 + $0xb0] sm:$0xff]
  %v846 = vld [vmem:[%s3 + $0xb8] sm:$0xff]
  %v847 = vld [vmem:[%s3 + $0xc0] sm:$0xff]
  %v848 = vld [vmem:[%s3 + $0xc8] sm:$0xff]
  %850 = vset.pattern.permute.xlu0 0
  %851 = vperm.xlu0 %850, %v839
  %v852 = vpop.permute.xlu0 %851
  %855 = vset.pattern.permute.xlu0 0
  %856 = vperm.xlu0 %855, %v840
  %v857 = vpop.permute.xlu0 %856
  %860 = vset.pattern.permute.xlu0 0
  %861 = vperm.xlu0 %860, %v841
  %v862 = vpop.permute.xlu0 %861
  %865 = vset.pattern.permute.xlu0 0
  %866 = vperm.xlu0 %865, %v842
  %v867 = vpop.permute.xlu0 %866
  %870 = vset.pattern.permute.xlu0 0
  %871 = vperm.xlu0 %870, %v843
  %v872 = vpop.permute.xlu0 %871
  %875 = vset.pattern.permute.xlu0 0
  %876 = vperm.xlu0 %875, %v844
  %v877 = vpop.permute.xlu0 %876
  %880 = vset.pattern.permute.xlu0 0
  %881 = vperm.xlu0 %880, %v845
  %v882 = vpop.permute.xlu0 %881
  %885 = vset.pattern.permute.xlu0 0
  %886 = vperm.xlu0 %885, %v846
  %v887 = vpop.permute.xlu0 %886
  %890 = vset.pattern.permute.xlu0 0
  %891 = vperm.xlu0 %890, %v847
  %v892 = vpop.permute.xlu0 %891
  %895 = vset.pattern.permute.xlu0 0
  %896 = vperm.xlu0 %895, %v848
  %v897 = vpop.permute.xlu0 %896
  %v900 = vsel %vm790, %v829, 0
  %v903 = vsel %vm790, %v830, 0
  %v906 = vsel %vm790, %v831, 0
  %v909 = vsel %vm790, %v832, 0
  %v912 = vsel %vm790, %v833, 0
  %v915 = vsel %vm790, %v834, 0
  %v918 = vsel %vm790, %v835, 0
  %v921 = vsel %vm790, %v836, 0
  %v924 = vsel %vm790, %v837, 0
  %v927 = vsel %vm790, %v838, 0
  %929 = vmatprep.subr.mxu0 0.0
  %930 = vmatpush1.msra.mxu0 %v825
  %931 = vmatprep.subr.mxu0 0.0
  %932 = vmatpush1.msra.mxu0 %v826
  %933 = vmatprep.subr.mxu0 0.0
  %934 = vmatpush1.msra.mxu0 %v827
  %935 = vmatprep.subr.mxu0 0.0
  %936 = vmatpush1.msra.mxu0 %v828
  %937 = vmatprep.subr.mxu0 0.0
  %938 = vmatpush1.msra.mxu0 0.0
  %939 = vmatprep.subr.mxu0 0.0
  %940 = vmatpush1.msra.mxu0 0.0
  %941 = vmatprep.subr.mxu0 0.0
  %942 = vmatpush1.msra.mxu0 0.0
  %943 = vmatprep.subr.mxu0 0.0
  %944 = vmatpush1.msra.mxu0 0.0
  %945 = vmatprep.subr.mxu0 0.0
  %946 = vmatpush1.msra.mxu0 0.0
  %947 = vmatprep.subr.mxu0 0.0
  %948 = vmatpush1.msra.mxu0 0.0
  %949 = vmatprep.subr.mxu0 0.0
  %950 = vmatpush1.msra.mxu0 0.0
  %951 = vmatprep.subr.mxu0 0.0
  %952 = vmatpush1.msra.mxu0 0.0
  %953 = vmatprep.subr.mxu0 0.0
  %954 = vmatpush1.msra.mxu0 0.0
  %955 = vmatprep.subr.mxu0 0.0
  %956 = vmatpush1.msra.mxu0 0.0
  %957 = vmatprep.subr.mxu0 0.0
  %958 = vmatpush1.msra.mxu0 0.0
  %959 = vmatprep.subr.mxu0 0.0
  %960 = vmatpush1.msra.mxu0 0.0
  %961 = vmatprep.subr.mxu0 0.0
  %962 = vmatpush1.msra.mxu0 0.0
  %963 = vmatprep.subr.mxu0 0.0
  %964 = vmatpush1.msra.mxu0 0.0
  %965 = vmatprep.subr.mxu0 0.0
  %966 = vmatpush1.msra.mxu0 0.0
  %967 = vmatprep.subr.mxu0 0.0
  %968 = vmatpush1.msra.mxu0 0.0
  %969 = vmatprep.subr.mxu0 0.0
  %970 = vmatpush1.msra.mxu0 0.0
  %971 = vmatprep.subr.mxu0 0.0
  %972 = vmatpush1.msra.mxu0 0.0
  %973 = vmatprep.subr.mxu0 0.0
  %974 = vmatpush1.msra.mxu0 0.0
  %975 = vmatprep.subr.mxu0 0.0
  %976 = vmatpush1.msra.mxu0 0.0
  %977 = vmatprep.subr.mxu0 0.0
  %978 = vmatpush1.msra.mxu0 0.0
  %979 = vmatprep.subr.mxu0 0.0
  %980 = vmatpush1.msra.mxu0 0.0
  %981 = vmatprep.subr.mxu0 0.0
  %982 = vmatpush1.msra.mxu0 0.0
  %983 = vmatprep.subr.mxu0 0.0
  %984 = vmatpush1.msra.mxu0 0.0
  %985 = vmatprep.subr.mxu0 0.0
  %986 = vmatpush1.msra.mxu0 0.0
  %987 = vmatprep.subr.mxu0 0.0
  %988 = vmatpush1.msra.mxu0 0.0
  %989 = vmatprep.subr.mxu0 0.0
  %990 = vmatpush1.msra.mxu0 0.0
  %991 = vmatprep.subr.mxu0 0.0
  %992 = vmatpush1.msra.mxu0 0.0
  %993 = vmatprep.mubr.f32.mxu0 0.0
  %994 = vmatmul.mubr.f32.gmra.mrb[0].mxu0 %v900
  %v995 = vpop.f32.mrb[0].mxu0
  %v996 = vadd.f32 %v852, %v995
  %v997 = vpop.f32.mrb[0].mxu0
  %998 = vmatprep.mubr.f32.mxu0 0.0
  %999 = vmatmul.mubr.f32.gmra.mrb[0].mxu0 %v903
  %v1000 = vpop.f32.mrb[0].mxu0
  %v1001 = vadd.f32 %v857, %v1000
  %v1002 = vpop.f32.mrb[0].mxu0
  %1003 = vmatprep.mubr.f32.mxu0 0.0
  %1004 = vmatmul.mubr.f32.gmra.mrb[0].mxu0 %v906
  %v1005 = vpop.f32.mrb[0].mxu0
  %v1006 = vadd.f32 %v862, %v1005
  %v1007 = vpop.f32.mrb[0].mxu0
  %1008 = vmatprep.mubr.f32.mxu0 0.0
  %1009 = vmatmul.mubr.f32.gmra.mrb[0].mxu0 %v909
  %v1010 = vpop.f32.mrb[0].mxu0
  %v1011 = vadd.f32 %v867, %v1010
  %v1012 = vpop.f32.mrb[0].mxu0
  %1013 = vmatprep.mubr.f32.mxu0 0.0
  %1014 = vmatmul.mubr.f32.gmra.mrb[0].mxu0 %v912
  %v1015 = vpop.f32.mrb[0].mxu0
  %v1016 = vadd.f32 %v872, %v1015
  %v1017 = vpop.f32.mrb[0].mxu0
  %1018 = vmatprep.mubr.f32.mxu0 0.0
  %1019 = vmatmul.mubr.f32.gmra.mrb[0].mxu0 %v915
  %v1020 = vpop.f32.mrb[0].mxu0
  %v1021 = vadd.f32 %v877, %v1020
  %v1022 = vpop.f32.mrb[0].mxu0
  %1023 = vmatprep.mubr.f32.mxu0 0.0
  %1024 = vmatmul.mubr.f32.gmra.mrb[0].mxu0 %v918
  %v1025 = vpop.f32.mrb[0].mxu0
  %v1026 = vadd.f32 %v882, %v1025
  %v1027 = vpop.f32.mrb[0].mxu0
  %1028 = vmatprep.mubr.f32.mxu0 0.0
  %1029 = vmatmul.mubr.f32.gmra.mrb[0].mxu0 %v921
  %v1030 = vpop.f32.mrb[0].mxu0
  %v1031 = vadd.f32 %v887, %v1030
  %v1032 = vpop.f32.mrb[0].mxu0
  %1033 = vmatprep.mubr.f32.mxu0 0.0
  %1034 = vmatmul.mubr.f32.gmra.mrb[0].mxu0 %v924
  %v1035 = vpop.f32.mrb[0].mxu0
  %v1036 = vadd.f32 %v892, %v1035
  %v1037 = vpop.f32.mrb[0].mxu0
  %1038 = vmatprep.mubr.f32.mxu0 0.0
  %1039 = vmatmul.mubr.f32.gmra.mrb[0].mxu0 %v927
  %v1040 = vpop.f32.mrb[0].mxu0
  %v1041 = vadd.f32 %v897, %v1040
  %v1042 = vpop.f32.mrb[0].mxu0
  %1043 = vdwg.mxu0
  %v1044 = vmul.f32 %v996, 0.033333335
  %v1045 = vmul.f32 %v1001, 0.033333335
  %vm1046 = vcmask 11264
  %v1047 = vsel %vm1046, %v1044, -inf
  %v1048 = vrot.slane %v1047, 4
  %v1049 = vmax.f32 %v1047, %v1048
  %v1050 = vrot.slane %v1049, 2
  %v1051 = vmax.f32 %v1049, %v1050
  %v1052 = vrot.slane %v1051, 1
  %v1053 = vmax.f32 %v1051, %v1052
  %v1054 = vsub.f32 %v1044, %v1053
  %v1055 = vmul.f32 %v1054, 1.442695
  %v1056 = vpow.pop %v1055
  %v1057 = vsel %vm1046, %v1056, 0.0
  %v1058 = vrot.slane %v1057, 4
  %v1059 = vadd.f32 %v1057, %v1058
  %v1060 = vrot.slane %v1059, 2
  %v1061 = vadd.f32 %v1059, %v1060
  %v1062 = vrot.slane %v1061, 1
  %v1063 = vadd.f32 %v1061, %v1062
  %v1064 = vrcp.pop %v1063
  %v1065 = vmul.f32 %v1056, %v1064
  %vm1066 = vcmask 15364
  %v1067 = vsel %vm1066, %v1044, -inf
  %v1068 = vrot.slane %v1067, 4
  %v1069 = vmax.f32 %v1067, %v1068
  %v1070 = vrot.slane %v1069, 2
  %v1071 = vmax.f32 %v1069, %v1070
  %v1072 = vrot.slane %v1071, 1
  %v1073 = vmax.f32 %v1071, %v1072
  %v1074 = vsub.f32 %v1044, %v1073
  %v1075 = vmul.f32 %v1074, 1.442695
  %v1076 = vpow.pop %v1075
  %v1078 = vrot.slane %v1076, 4
  %v1080 = vsel %vm1046, %v1078, 0.0
  %v1081 = vrot.slane %v1080, 4
  %v1082 = vadd.f32 %v1080, %v1081
  %v1083 = vrot.slane %v1082, 2
  %v1084 = vadd.f32 %v1082, %v1083
  %v1085 = vrot.slane %v1084, 1
  %v1086 = vadd.f32 %v1084, %v1085
  %v1087 = vrcp.pop %v1086
  %v1088 = vmul.f32 %v1076, %v1087
  %v1089 = vsel %vm1046, %v1045, -inf
  %v1090 = vrot.slane %v1089, 4
  %v1091 = vmax.f32 %v1089, %v1090
  %v1092 = vrot.slane %v1091, 2
  %v1093 = vmax.f32 %v1091, %v1092
  %v1094 = vrot.slane %v1093, 1
  %v1095 = vmax.f32 %v1093, %v1094
  %v1096 = vsub.f32 %v1045, %v1095
  %v1097 = vmul.f32 %v1096, 1.442695
  %v1098 = vpow.pop %v1097
  %v1099 = vsel %vm1046, %v1098, 0.0
  %v1100 = vrot.slane %v1099, 4
  %v1101 = vadd.f32 %v1099, %v1100
  %v1102 = vrot.slane %v1101, 2
  %v1103 = vadd.f32 %v1101, %v1102
  %v1104 = vrot.slane %v1103, 1
  %v1105 = vadd.f32 %v1103, %v1104
  %v1106 = vrcp.pop %v1105
  %v1107 = vmul.f32 %v1098, %v1106
  %v1108 = vxor.u32 %v1006, 2147483648
  %v1109 = vxor.u32 %v1011, 2147483648
  %v1110 = vxor.u32 %v1016, 2147483648
  %v1111 = vxor.u32 %v1021, 2147483648
  %v1112 = vxor.u32 %v1026, 2147483648
  %v1113 = vxor.u32 %v1031, 2147483648
  %v1114 = vxor.u32 %v1036, 2147483648
  %v1115 = vxor.u32 %v1041, 2147483648
  %v1116 = vmul.f32 %v1108, 1.442695
  %v1117 = vpow.pop %v1116
  %v1118 = vmul.f32 %v1109, 1.442695
  %v1119 = vpow.pop %v1118
  %v1120 = vmul.f32 %v1110, 1.442695
  %v1121 = vpow.pop %v1120
  %v1122 = vmul.f32 %v1111, 1.442695
  %v1123 = vpow.pop %v1122
  %v1124 = vmul.f32 %v1112, 1.442695
  %v1125 = vpow.pop %v1124
  %v1126 = vmul.f32 %v1113, 1.442695
  %v1127 = vpow.pop %v1126
  %v1128 = vmul.f32 %v1114, 1.442695
  %v1129 = vpow.pop %v1128
  %v1130 = vmul.f32 %v1115, 1.442695
  %v1131 = vpow.pop %v1130
  %v1132 = vadd.f32 %v1117, 1.0
  %v1133 = vadd.f32 %v1119, 1.0
  %v1134 = vadd.f32 %v1121, 1.0
  %v1135 = vadd.f32 %v1123, 1.0
  %v1136 = vadd.f32 %v1125, 1.0
  %v1137 = vadd.f32 %v1127, 1.0
  %v1138 = vadd.f32 %v1129, 1.0
  %v1139 = vadd.f32 %v1131, 1.0
  %v1140 = vrcp.pop %v1132
  %v1141 = vmul.f32 1.0, %v1140
  %v1142 = vrcp.pop %v1133
  %v1143 = vmul.f32 1.0, %v1142
  %v1144 = vrcp.pop %v1134
  %v1145 = vmul.f32 1.0, %v1144
  %v1146 = vrcp.pop %v1135
  %v1147 = vmul.f32 1.0, %v1146
  %v1148 = vrcp.pop %v1136
  %v1149 = vmul.f32 1.0, %v1148
  %v1150 = vrcp.pop %v1137
  %v1151 = vmul.f32 1.0, %v1150
  %v1152 = vrcp.pop %v1138
  %v1153 = vmul.f32 1.0, %v1152
  %v1154 = vrcp.pop %v1139
  %v1155 = vmul.f32 1.0, %v1154
  %v1156 = vmul.f32 %v1141, 2.0
  %v1157 = vmul.f32 %v1143, 2.0
  %v1158 = vmul.f32 %v1145, 2.0
  %v1159 = vmul.f32 %v1147, 2.0
  %v1160 = vmul.f32 %v1149, 2.0
  %v1161 = vmul.f32 %v1151, 2.0
  %v1162 = vmul.f32 %v1153, 2.0
  %v1163 = vmul.f32 %v1155, 2.0
  %v1164 = vsub.f32 %v1156, 1.0
  %v1165 = vsub.f32 %v1157, 1.0
  %v1166 = vsub.f32 %v1158, 1.0
  %v1167 = vsub.f32 %v1159, 1.0
  %v1168 = vsub.f32 %v1160, 1.0
  %v1169 = vsub.f32 %v1161, 1.0
  %v1170 = vsub.f32 %v1162, 1.0
  %v1171 = vsub.f32 %v1163, 1.0
  %1174 = vrot.lane.b32.xlu0 %v1164, 127
  %v1175 = vpop.permute.xlu0 %1174
  %1176 = vrot.lane.b32.xlu0 %v1165, 127
  %v1177 = vpop.permute.xlu0 %1176
  %v1180 = vadd.f32 %v1164, 1.0
  %v1181 = vadd.f32 %v1165, 1.0
  %v1182 = vadd.f32 %v1175, 1.0
  %v1183 = vadd.f32 %v1177, 1.0
  %1186 = vrot.lane.b32.xlu0 %v1166, 127
  %v1187 = vpop.permute.xlu0 %1186
  %1188 = vrot.lane.b32.xlu0 %v1167, 127
  %v1189 = vpop.permute.xlu0 %1188
  %1192 = vrot.lane.b32.xlu0 %v1168, 127
  %v1193 = vpop.permute.xlu0 %1192
  %1194 = vrot.lane.b32.xlu0 %v1169, 127
  %v1195 = vpop.permute.xlu0 %1194
  %v1198 = vmul.f32 %v1168, 0.5
  %v1199 = vmul.f32 %v1169, 0.5
  %v1200 = vmul.f32 %v1193, 0.5
  %v1201 = vmul.f32 %v1195, 0.5
  %1204 = vrot.lane.b32.xlu0 %v1170, 127
  %v1205 = vpop.permute.xlu0 %1204
  %1206 = vrot.lane.b32.xlu0 %v1171, 127
  %v1207 = vpop.permute.xlu0 %1206
  %v1210 = vmul.f32 %v1170, 0.5
  %v1211 = vmul.f32 %v1171, 0.5
  %v1212 = vmul.f32 %v1205, 0.5
  %v1213 = vmul.f32 %v1207, 0.5
  %v1214 = vld [vmem:[%s3 + $0xd0] sm:$0xff]
  %v1215 = vld [vmem:[%s3 + $0xd8] sm:$0xff]
  %v1216 = vld [vmem:[%s2 + $0xd0] sm:$0xff]
  %v1217 = vld [vmem:[%s2 + $0xd8] sm:$0xff]
  %v1218 = vld [vmem:[%s2 + $0xe0] sm:$0xff]
  %v1219 = vld [vmem:[%s2 + $0xe8] sm:$0xff]
  %v1220 = vld [vmem:[%s2 + $0xf0] sm:$0xff]
  %v1221 = vld [vmem:[%s2 + $0xf8] sm:$0xff]
  %v1222 = vld [vmem:[%s2 + $0x100] sm:$0xff]
  %v1223 = vld [vmem:[%s2 + $0x108] sm:$0xff]
  %s1225 = vtos %v1065
  %v1226 = vstv %s1225
  %v1228 = vmul.f32 %v1226, %v1216
  %v1229 = vmul.f32 %v1226, %v1217
  %v1230 = vrot.slane %v1065, 1
  %s1231 = vtos %v1230
  %v1232 = vstv %s1231
  %v1234 = vmul.f32 %v1232, %v1218
  %v1235 = vmul.f32 %v1232, %v1219
  %v1236 = vadd.f32 %v1228, %v1234
  %v1237 = vadd.f32 %v1229, %v1235
  %v1238 = vrot.slane %v1065, 2
  %s1239 = vtos %v1238
  %v1240 = vstv %s1239
  %v1242 = vmul.f32 %v1240, %v1220
  %v1243 = vmul.f32 %v1240, %v1221
  %v1244 = vadd.f32 %v1236, %v1242
  %v1245 = vadd.f32 %v1237, %v1243
  %v1246 = vrot.slane %v1065, 3
  %s1247 = vtos %v1246
  %v1248 = vstv %s1247
  %v1250 = vmul.f32 %v1248, %v1222
  %v1251 = vmul.f32 %v1248, %v1223
  %v1252 = vadd.f32 %v1244, %v1250
  %v1253 = vadd.f32 %v1245, %v1251
  %1255 = vset.pattern.permute.xlu0 0
  %1256 = vperm.xlu0 %1255, %v1214
  %v1257 = vpop.permute.xlu0 %1256
  %1260 = vset.pattern.permute.xlu0 0
  %1261 = vperm.xlu0 %1260, %v1215
  %v1262 = vpop.permute.xlu0 %1261
  %vm1264 = vcmask 64512
  %v1266 = vsel %vm1264, %v1252, 0
  %v1269 = vsel %vm1264, %v1253, 0
  %1271 = vmatprep.subr.mxu0 %v18
  %1272 = vmatpush1.msra.mxu0 %v17
  %1273 = vmatprep.subr.mxu0 0.0
  %1274 = vmatpush1.msra.mxu0 0.0
  %1275 = vmatprep.subr.mxu0 0.0
  %1276 = vmatpush1.msra.mxu0 0.0
  %1277 = vmatprep.subr.mxu0 0.0
  %1278 = vmatpush1.msra.mxu0 0.0
  %1279 = vmatprep.subr.mxu0 0.0
  %1280 = vmatpush1.msra.mxu0 0.0
  %1281 = vmatprep.subr.mxu0 0.0
  %1282 = vmatpush1.msra.mxu0 0.0
  %1283 = vmatprep.subr.mxu0 0.0
  %1284 = vmatpush1.msra.mxu0 0.0
  %1285 = vmatprep.subr.mxu0 0.0
  %1286 = vmatpush1.msra.mxu0 0.0
  %1287 = vmatprep.subr.mxu0 0.0
  %1288 = vmatpush1.msra.mxu0 0.0
  %1289 = vmatprep.subr.mxu0 0.0
  %1290 = vmatpush1.msra.mxu0 0.0
  %1291 = vmatprep.subr.mxu0 0.0
  %1292 = vmatpush1.msra.mxu0 0.0
  %1293 = vmatprep.subr.mxu0 0.0
  %1294 = vmatpush1.msra.mxu0 0.0
  %1295 = vmatprep.subr.mxu0 0.0
  %1296 = vmatpush1.msra.mxu0 0.0
  %1297 = vmatprep.subr.mxu0 0.0
  %1298 = vmatpush1.msra.mxu0 0.0
  %1299 = vmatprep.subr.mxu0 0.0
  %1300 = vmatpush1.msra.mxu0 0.0
  %1301 = vmatprep.subr.mxu0 0.0
  %1302 = vmatpush1.msra.mxu0 0.0
  %1303 = vmatprep.subr.mxu0 0.0
  %1304 = vmatpush1.msra.mxu0 0.0
  %1305 = vmatprep.subr.mxu0 0.0
  %1306 = vmatpush1.msra.mxu0 0.0
  %1307 = vmatprep.subr.mxu0 0.0
  %1308 = vmatpush1.msra.mxu0 0.0
  %1309 = vmatprep.subr.mxu0 0.0
  %1310 = vmatpush1.msra.mxu0 0.0
  %1311 = vmatprep.subr.mxu0 0.0
  %1312 = vmatpush1.msra.mxu0 0.0
  %1313 = vmatprep.subr.mxu0 0.0
  %1314 = vmatpush1.msra.mxu0 0.0
  %1315 = vmatprep.subr.mxu0 0.0
  %1316 = vmatpush1.msra.mxu0 0.0
  %1317 = vmatprep.subr.mxu0 0.0
  %1318 = vmatpush1.msra.mxu0 0.0
  %1319 = vmatprep.subr.mxu0 0.0
  %1320 = vmatpush1.msra.mxu0 0.0
  %1321 = vmatprep.subr.mxu0 0.0
  %1322 = vmatpush1.msra.mxu0 0.0
  %1323 = vmatprep.subr.mxu0 0.0
  %1324 = vmatpush1.msra.mxu0 0.0
  %1325 = vmatprep.subr.mxu0 0.0
  %1326 = vmatpush1.msra.mxu0 0.0
  %1327 = vmatprep.subr.mxu0 0.0
  %1328 = vmatpush1.msra.mxu0 0.0
  %1329 = vmatprep.subr.mxu0 0.0
  %1330 = vmatpush1.msra.mxu0 0.0
  %1331 = vmatprep.subr.mxu0 0.0
  %1332 = vmatpush1.msra.mxu0 0.0
  %1333 = vmatprep.subr.mxu0 0.0
  %1334 = vmatpush1.msra.mxu0 0.0
  %1335 = vmatprep.mubr.f32.mxu0 0.0
  %1336 = vmatmul.mubr.f32.gmra.mrb[0].mxu0 %v1266
  %v1337 = vpop.f32.mrb[0].mxu0
  %v1338 = vadd.f32 %v1257, %v1337
  %v1339 = vpop.f32.mrb[0].mxu0
  %v1340 = vadd.f32 %v1257, %v1339
  %1341 = vmatprep.mubr.f32.mxu0 0.0
  %1342 = vmatmul.mubr.f32.gmra.mrb[0].mxu0 %v1269
  %v1343 = vpop.f32.mrb[0].mxu0
  %v1344 = vadd.f32 %v1262, %v1343
  %v1345 = vpop.f32.mrb[0].mxu0
  %v1346 = vadd.f32 %v1262, %v1345
  %1347 = vdwg.mxu0
  %v1348 = vadd.f32 %v1338, 3.0
  %v1349 = vadd.f32 %v1340, 3.0
  %v1350 = vadd.f32 %v1344, 3.0
  %v1351 = vadd.f32 %v1346, 3.0
  %v1352 = vmax.f32 %v1348, 0.0
  %v1353 = vmax.f32 %v1349, 0.0
  %v1354 = vmax.f32 %v1350, 0.0
  %v1355 = vmax.f32 %v1351, 0.0
  %v1356 = vmin.f32 %v1352, 6.0
  %v1357 = vmin.f32 %v1353, 6.0
  %v1358 = vmin.f32 %v1354, 6.0
  %v1359 = vmin.f32 %v1355, 6.0
  %v1360 = vmul.f32 %v1338, %v1356
  %v1361 = vmul.f32 %v1340, %v1357
  %v1362 = vmul.f32 %v1344, %v1358
  %v1363 = vmul.f32 %v1346, %v1359
  %v1364 = vmul.f32 %v1360, 0.16666667
  %v1365 = vmul.f32 %v1361, 0.16666667
  %v1366 = vmul.f32 %v1362, 0.16666667
  %v1367 = vmul.f32 %v1363, 0.16666667
  %v1368 = vld [vmem:[%s2 + $0x110] sm:$0xff]
  %v1369 = vld [vmem:[%s2 + $0x118] sm:$0xff]
  %v1370 = vld [vmem:[%s2 + $0x120] sm:$0xff]
  %v1371 = vld [vmem:[%s2 + $0x128] sm:$0xff]
  %v1372 = vld [vmem:[%s2 + $0x130] sm:$0xff]
  %v1373 = vld [vmem:[%s2 + $0x138] sm:$0xff]
  %v1374 = vld [vmem:[%s2 + $0x140] sm:$0xff]
  %v1375 = vld [vmem:[%s2 + $0x148] sm:$0xff]
  %v1377 = vrot.slane %v1088, 4
  %s1378 = vtos %v1377
  %v1379 = vstv %s1378
  %v1381 = vmul.f32 %v1379, %v1368
  %v1382 = vmul.f32 %v1379, %v1369
  %v1383 = vrot.slane %v1088, 5
  %s1384 = vtos %v1383
  %v1385 = vstv %s1384
  %v1387 = vmul.f32 %v1385, %v1370
  %v1388 = vmul.f32 %v1385, %v1371
  %v1389 = vadd.f32 %v1381, %v1387
  %v1390 = vadd.f32 %v1382, %v1388
  %v1391 = vrot.slane %v1088, 6
  %s1392 = vtos %v1391
  %v1393 = vstv %s1392
  %v1395 = vmul.f32 %v1393, %v1372
  %v1396 = vmul.f32 %v1393, %v1373
  %v1397 = vadd.f32 %v1389, %v1395
  %v1398 = vadd.f32 %v1390, %v1396
  %v1399 = vrot.slane %v1088, 7
  %s1400 = vtos %v1399
  %v1401 = vstv %s1400
  %v1403 = vmul.f32 %v1401, %v1374
  %v1404 = vmul.f32 %v1401, %v1375
  %v1405 = vadd.f32 %v1397, %v1403
  %v1406 = vadd.f32 %v1398, %v1404
  %1407 = vrot.lane.b32.xlu0 %v1065, 127
  %v1408 = vpop.permute.xlu0 %1407
  %s1409 = vtos %v1408
  %v1410 = vstv %s1409
  %v1412 = vmul.f32 %v1410, %v1216
  %v1413 = vmul.f32 %v1410, %v1217
  %1414 = vrot.lane.b32.xlu0 %v1230, 127
  %v1415 = vpop.permute.xlu0 %1414
  %s1416 = vtos %v1415
  %v1417 = vstv %s1416
  %v1419 = vmul.f32 %v1417, %v1218
  %v1420 = vmul.f32 %v1417, %v1219
  %v1421 = vadd.f32 %v1412, %v1419
  %v1422 = vadd.f32 %v1413, %v1420
  %1423 = vrot.lane.b32.xlu0 %v1238, 127
  %v1424 = vpop.permute.xlu0 %1423
  %s1425 = vtos %v1424
  %v1426 = vstv %s1425
  %v1428 = vmul.f32 %v1426, %v1220
  %v1429 = vmul.f32 %v1426, %v1221
  %v1430 = vadd.f32 %v1421, %v1428
  %v1431 = vadd.f32 %v1422, %v1429
  %1432 = vrot.lane.b32.xlu0 %v1246, 127
  %v1433 = vpop.permute.xlu0 %1432
  %s1434 = vtos %v1433
  %v1435 = vstv %s1434
  %v1437 = vmul.f32 %v1435, %v1222
  %v1438 = vmul.f32 %v1435, %v1223
  %v1439 = vadd.f32 %v1430, %v1437
  %v1440 = vadd.f32 %v1431, %v1438
  %v1442 = vsel %vm1264, %v1439, 0
  %v1445 = vsel %vm1264, %v1440, 0
  %1447 = vmatprep.subr.mxu0 %v20
  %1448 = vmatpush1.msra.mxu0 %v19
  %1449 = vmatprep.subr.mxu0 0.0
  %1450 = vmatpush1.msra.mxu0 0.0
  %1451 = vmatprep.subr.mxu0 0.0
  %1452 = vmatpush1.msra.mxu0 0.0
  %1453 = vmatprep.subr.mxu0 0.0
  %1454 = vmatpush1.msra.mxu0 0.0
  %1455 = vmatprep.subr.mxu0 0.0
  %1456 = vmatpush1.msra.mxu0 0.0
  %1457 = vmatprep.subr.mxu0 0.0
  %1458 = vmatpush1.msra.mxu0 0.0
  %1459 = vmatprep.subr.mxu0 0.0
  %1460 = vmatpush1.msra.mxu0 0.0
  %1461 = vmatprep.subr.mxu0 0.0
  %1462 = vmatpush1.msra.mxu0 0.0
  %1463 = vmatprep.subr.mxu0 0.0
  %1464 = vmatpush1.msra.mxu0 0.0
  %1465 = vmatprep.subr.mxu0 0.0
  %1466 = vmatpush1.msra.mxu0 0.0
  %1467 = vmatprep.subr.mxu0 0.0
  %1468 = vmatpush1.msra.mxu0 0.0
  %1469 = vmatprep.subr.mxu0 0.0
  %1470 = vmatpush1.msra.mxu0 0.0
  %1471 = vmatprep.subr.mxu0 0.0
  %1472 = vmatpush1.msra.mxu0 0.0
  %1473 = vmatprep.subr.mxu0 0.0
  %1474 = vmatpush1.msra.mxu0 0.0
  %1475 = vmatprep.subr.mxu0 0.0
  %1476 = vmatpush1.msra.mxu0 0.0
  %1477 = vmatprep.subr.mxu0 0.0
  %1478 = vmatpush1.msra.mxu0 0.0
  %1479 = vmatprep.subr.mxu0 0.0
  %1480 = vmatpush1.msra.mxu0 0.0
  %1481 = vmatprep.subr.mxu0 0.0
  %1482 = vmatpush1.msra.mxu0 0.0
  %1483 = vmatprep.subr.mxu0 0.0
  %1484 = vmatpush1.msra.mxu0 0.0
  %1485 = vmatprep.subr.mxu0 0.0
  %1486 = vmatpush1.msra.mxu0 0.0
  %1487 = vmatprep.subr.mxu0 0.0
  %1488 = vmatpush1.msra.mxu0 0.0
  %1489 = vmatprep.subr.mxu0 0.0
  %1490 = vmatpush1.msra.mxu0 0.0
  %1491 = vmatprep.subr.mxu0 0.0
  %1492 = vmatpush1.msra.mxu0 0.0
  %1493 = vmatprep.subr.mxu0 0.0
  %1494 = vmatpush1.msra.mxu0 0.0
  %1495 = vmatprep.subr.mxu0 0.0
  %1496 = vmatpush1.msra.mxu0 0.0
  %1497 = vmatprep.subr.mxu0 0.0
  %1498 = vmatpush1.msra.mxu0 0.0
  %1499 = vmatprep.subr.mxu0 0.0
  %1500 = vmatpush1.msra.mxu0 0.0
  %1501 = vmatprep.subr.mxu0 0.0
  %1502 = vmatpush1.msra.mxu0 0.0
  %1503 = vmatprep.subr.mxu0 0.0
  %1504 = vmatpush1.msra.mxu0 0.0
  %1505 = vmatprep.subr.mxu0 0.0
  %1506 = vmatpush1.msra.mxu0 0.0
  %1507 = vmatprep.subr.mxu0 0.0
  %1508 = vmatpush1.msra.mxu0 0.0
  %1509 = vmatprep.subr.mxu0 0.0
  %1510 = vmatpush1.msra.mxu0 0.0
  %1511 = vmatprep.mubr.f32.mxu0 0.0
  %1512 = vmatmul.mubr.f32.gmra.mrb[0].mxu0 %v1442
  %v1513 = vpop.f32.mrb[0].mxu0
  %v1514 = vadd.f32 %v1257, %v1513
  %v1515 = vpop.f32.mrb[0].mxu0
  %v1516 = vadd.f32 %v1257, %v1515
  %1517 = vmatprep.mubr.f32.mxu0 0.0
  %1518 = vmatmul.mubr.f32.gmra.mrb[0].mxu0 %v1445
  %v1519 = vpop.f32.mrb[0].mxu0
  %v1520 = vadd.f32 %v1262, %v1519
  %v1521 = vpop.f32.mrb[0].mxu0
  %v1522 = vadd.f32 %v1262, %v1521
  %1523 = vdwg.mxu0
  %v1524 = vadd.f32 %v1514, 3.0
  %v1525 = vadd.f32 %v1516, 3.0
  %v1526 = vadd.f32 %v1520, 3.0
  %v1527 = vadd.f32 %v1522, 3.0
  %v1528 = vmax.f32 %v1524, 0.0
  %v1529 = vmax.f32 %v1525, 0.0
  %v1530 = vmax.f32 %v1526, 0.0
  %v1531 = vmax.f32 %v1527, 0.0
  %v1532 = vmin.f32 %v1528, 6.0
  %v1533 = vmin.f32 %v1529, 6.0
  %v1534 = vmin.f32 %v1530, 6.0
  %v1535 = vmin.f32 %v1531, 6.0
  %v1536 = vmul.f32 %v1514, %v1532
  %v1537 = vmul.f32 %v1516, %v1533
  %v1538 = vmul.f32 %v1520, %v1534
  %v1539 = vmul.f32 %v1522, %v1535
  %v1540 = vmul.f32 %v1536, 0.16666667
  %v1541 = vmul.f32 %v1537, 0.16666667
  %v1542 = vmul.f32 %v1538, 0.16666667
  %v1543 = vmul.f32 %v1539, 0.16666667
  %1544 = vrot.lane.b32.xlu0 %v1377, 127
  %v1545 = vpop.permute.xlu0 %1544
  %s1546 = vtos %v1545
  %v1547 = vstv %s1546
  %v1549 = vmul.f32 %v1547, %v1368
  %v1550 = vmul.f32 %v1547, %v1369
  %1551 = vrot.lane.b32.xlu0 %v1383, 127
  %v1552 = vpop.permute.xlu0 %1551
  %s1553 = vtos %v1552
  %v1554 = vstv %s1553
  %v1556 = vmul.f32 %v1554, %v1370
  %v1557 = vmul.f32 %v1554, %v1371
  %v1558 = vadd.f32 %v1549, %v1556
  %v1559 = vadd.f32 %v1550, %v1557
  %1560 = vrot.lane.b32.xlu0 %v1391, 127
  %v1561 = vpop.permute.xlu0 %1560
  %s1562 = vtos %v1561
  %v1563 = vstv %s1562
  %v1565 = vmul.f32 %v1563, %v1372
  %v1566 = vmul.f32 %v1563, %v1373
  %v1567 = vadd.f32 %v1558, %v1565
  %v1568 = vadd.f32 %v1559, %v1566
  %1569 = vrot.lane.b32.xlu0 %v1399, 127
  %v1570 = vpop.permute.xlu0 %1569
  %s1571 = vtos %v1570
  %v1572 = vstv %s1571
  %v1574 = vmul.f32 %v1572, %v1374
  %v1575 = vmul.f32 %v1572, %v1375
  %v1576 = vadd.f32 %v1567, %v1574
  %v1577 = vadd.f32 %v1568, %v1575
  %1579 = vset.pattern.permute.xlu0 4
  %1580 = vperm.xlu0 %1579, %v1405
  %v1581 = vpop.permute.xlu0 %1580
  %1584 = vset.pattern.permute.xlu0 4
  %1585 = vperm.xlu0 %1584, %v1406
  %v1586 = vpop.permute.xlu0 %1585
  %1589 = vset.pattern.permute.xlu0 4
  %1590 = vperm.xlu0 %1589, %v1576
  %v1591 = vpop.permute.xlu0 %1590
  %1594 = vset.pattern.permute.xlu0 4
  %1595 = vperm.xlu0 %1594, %v1577
  %v1596 = vpop.permute.xlu0 %1595
  %v1598 = vmul.f32 %v1581, %v1364
  %v1599 = vmul.f32 %v1581, %v1365
  %v1600 = vmul.f32 %v1586, %v1366
  %v1601 = vmul.f32 %v1586, %v1367
  %v1602 = vmul.f32 %v1591, %v1540
  %v1603 = vmul.f32 %v1591, %v1541
  %v1604 = vmul.f32 %v1596, %v1542
  %v1605 = vmul.f32 %v1596, %v1543
  %1606 = vrot.lane.b32.xlu0 %v1364, 17
  %v1607 = vpop.permute.xlu0 %1606
  %1608 = vrot.lane.b32.xlu0 %v1366, 17
  %v1609 = vpop.permute.xlu0 %1608
  %1610 = vrot.lane.b32.xlu0 %v1540, 17
  %v1611 = vpop.permute.xlu0 %1610
  %1612 = vrot.lane.b32.xlu0 %v1542, 17
  %v1613 = vpop.permute.xlu0 %1612
  %1614 = vrot.lane.b32.xlu0 %v1365, 17
  %v1615 = vpop.permute.xlu0 %1614
  %1616 = vrot.lane.b32.xlu0 %v1367, 17
  %v1617 = vpop.permute.xlu0 %1616
  %1618 = vrot.lane.b32.xlu0 %v1541, 17
  %v1619 = vpop.permute.xlu0 %1618
  %1620 = vrot.lane.b32.xlu0 %v1543, 17
  %v1621 = vpop.permute.xlu0 %1620
  %v1622 = vlaneseq
  %v1623 = vand.u32 %v1622, 127
  %vm1624 = vcmp.lt.s32.totalorder %v1623, 17
  %v1625 = vsel %vm1624, %v1607, %v1615
  %v1626 = vsel %vm1624, %v1609, %v1617
  %v1627 = vsel %vm1624, %v1611, %v1619
  %v1628 = vsel %vm1624, %v1613, %v1621
  %v1629 = vsel %vm1624, %v1615, %v1607
  %v1630 = vsel %vm1624, %v1617, %v1609
  %v1631 = vsel %vm1624, %v1619, %v1611
  %v1632 = vsel %vm1624, %v1621, %v1613
  %s1633 = scalar_lea.vmem %s1, 128
  %v1634 = vld [vmem:[%s1633] ss:$8 sm:$0x3]
  %1635 = vset.pattern.permute.xlu0 0
  %1636 = vperm.xlu0 %1635, %v1405
  %v1637 = vpop.permute.xlu0 %1636
  %1639 = vset.pattern.permute.xlu0 0
  %1640 = vperm.xlu0 %1639, %v1406
  %v1641 = vpop.permute.xlu0 %1640
  %1643 = vset.pattern.permute.xlu0 0
  %1644 = vperm.xlu0 %1643, %v1576
  %v1645 = vpop.permute.xlu0 %1644
  %1647 = vset.pattern.permute.xlu0 0
  %1648 = vperm.xlu0 %1647, %v1577
  %v1649 = vpop.permute.xlu0 %1648
  %v1652 = vlaneseq
  %v1653 = vshrl.u32 %v1652, 7
  %v1654 = vsub.s32 0, %v1653
  %v1655 = vrot.slane %v1634, %v1654
  %v1656 = vlaneseq
  %v1657 = vshrl.u32 %v1656, 7
  %v1658 = vsub.s32 1, %v1657
  %v1659 = vrot.slane %v1634, %v1658
  %v1662 = vmul.f32 %v1637, %v1655
  %v1663 = vmul.f32 %v1637, %v1659
  %v1664 = vmul.f32 %v1641, %v1655
  %v1665 = vmul.f32 %v1641, %v1659
  %v1666 = vmul.f32 %v1645, %v1655
  %v1667 = vmul.f32 %v1645, %v1659
  %v1668 = vmul.f32 %v1649, %v1655
  %v1669 = vmul.f32 %v1649, %v1659
  %v1670 = vmul.f32 %v1662, %v1629
  %v1671 = vmul.f32 %v1663, %v1625
  %v1672 = vmul.f32 %v1664, %v1630
  %v1673 = vmul.f32 %v1665, %v1626
  %v1674 = vmul.f32 %v1666, %v1631
  %v1675 = vmul.f32 %v1667, %v1627
  %v1676 = vmul.f32 %v1668, %v1632
  %v1677 = vmul.f32 %v1669, %v1628
  %v1678 = vadd.f32 %v1598, %v1670
  %v1679 = vadd.f32 %v1599, %v1671
  %v1680 = vadd.f32 %v1600, %v1672
  %v1681 = vadd.f32 %v1601, %v1673
  %v1682 = vadd.f32 %v1602, %v1674
  %v1683 = vadd.f32 %v1603, %v1675
  %v1684 = vadd.f32 %v1604, %v1676
  %v1685 = vadd.f32 %v1605, %v1677
  %1686 = vrot.lane.b32.xlu0 %v1364, 16
  %v1687 = vpop.permute.xlu0 %1686
  %1688 = vrot.lane.b32.xlu0 %v1366, 16
  %v1689 = vpop.permute.xlu0 %1688
  %1690 = vrot.lane.b32.xlu0 %v1540, 16
  %v1691 = vpop.permute.xlu0 %1690
  %1692 = vrot.lane.b32.xlu0 %v1542, 16
  %v1693 = vpop.permute.xlu0 %1692
  %1694 = vrot.lane.b32.xlu0 %v1365, 16
  %v1695 = vpop.permute.xlu0 %1694
  %1696 = vrot.lane.b32.xlu0 %v1367, 16
  %v1697 = vpop.permute.xlu0 %1696
  %1698 = vrot.lane.b32.xlu0 %v1541, 16
  %v1699 = vpop.permute.xlu0 %1698
  %1700 = vrot.lane.b32.xlu0 %v1543, 16
  %v1701 = vpop.permute.xlu0 %1700
  %vm1702 = vcmp.lt.s32.totalorder %v1623, 16
  %v1703 = vsel %vm1702, %v1687, %v1695
  %v1704 = vsel %vm1702, %v1689, %v1697
  %v1705 = vsel %vm1702, %v1691, %v1699
  %v1706 = vsel %vm1702, %v1693, %v1701
  %v1707 = vsel %vm1702, %v1695, %v1687
  %v1708 = vsel %vm1702, %v1697, %v1689
  %v1709 = vsel %vm1702, %v1699, %v1691
  %v1710 = vsel %vm1702, %v1701, %v1693
  %s1711 = scalar_lea.vmem %s1, 129
  %v1712 = vld [vmem:[%s1711] ss:$8 sm:$0x3]
  %1713 = vset.pattern.permute.xlu0 1
  %1714 = vperm.xlu0 %1713, %v1405
  %v1715 = vpop.permute.xlu0 %1714
  %1717 = vset.pattern.permute.xlu0 1
  %1718 = vperm.xlu0 %1717, %v1406
  %v1719 = vpop.permute.xlu0 %1718
  %1721 = vset.pattern.permute.xlu0 1
  %1722 = vperm.xlu0 %1721, %v1576
  %v1723 = vpop.permute.xlu0 %1722
  %1725 = vset.pattern.permute.xlu0 1
  %1726 = vperm.xlu0 %1725, %v1577
  %v1727 = vpop.permute.xlu0 %1726
  %v1730 = vlaneseq
  %v1731 = vshrl.u32 %v1730, 7
  %v1732 = vsub.s32 0, %v1731
  %v1733 = vrot.slane %v1712, %v1732
  %v1734 = vlaneseq
  %v1735 = vshrl.u32 %v1734, 7
  %v1736 = vsub.s32 1, %v1735
  %v1737 = vrot.slane %v1712, %v1736
  %v1740 = vmul.f32 %v1715, %v1733
  %v1741 = vmul.f32 %v1715, %v1737
  %v1742 = vmul.f32 %v1719, %v1733
  %v1743 = vmul.f32 %v1719, %v1737
  %v1744 = vmul.f32 %v1723, %v1733
  %v1745 = vmul.f32 %v1723, %v1737
  %v1746 = vmul.f32 %v1727, %v1733
  %v1747 = vmul.f32 %v1727, %v1737
  %v1748 = vmul.f32 %v1740, %v1707
  %v1749 = vmul.f32 %v1741, %v1703
  %v1750 = vmul.f32 %v1742, %v1708
  %v1751 = vmul.f32 %v1743, %v1704
  %v1752 = vmul.f32 %v1744, %v1709
  %v1753 = vmul.f32 %v1745, %v1705
  %v1754 = vmul.f32 %v1746, %v1710
  %v1755 = vmul.f32 %v1747, %v1706
  %v1756 = vadd.f32 %v1678, %v1748
  %v1757 = vadd.f32 %v1679, %v1749
  %v1758 = vadd.f32 %v1680, %v1750
  %v1759 = vadd.f32 %v1681, %v1751
  %v1760 = vadd.f32 %v1682, %v1752
  %v1761 = vadd.f32 %v1683, %v1753
  %v1762 = vadd.f32 %v1684, %v1754
  %v1763 = vadd.f32 %v1685, %v1755
  %1764 = vrot.lane.b32.xlu0 %v1364, 15
  %v1765 = vpop.permute.xlu0 %1764
  %1766 = vrot.lane.b32.xlu0 %v1366, 15
  %v1767 = vpop.permute.xlu0 %1766
  %1768 = vrot.lane.b32.xlu0 %v1540, 15
  %v1769 = vpop.permute.xlu0 %1768
  %1770 = vrot.lane.b32.xlu0 %v1542, 15
  %v1771 = vpop.permute.xlu0 %1770
  %1772 = vrot.lane.b32.xlu0 %v1365, 15
  %v1773 = vpop.permute.xlu0 %1772
  %1774 = vrot.lane.b32.xlu0 %v1367, 15
  %v1775 = vpop.permute.xlu0 %1774
  %1776 = vrot.lane.b32.xlu0 %v1541, 15
  %v1777 = vpop.permute.xlu0 %1776
  %1778 = vrot.lane.b32.xlu0 %v1543, 15
  %v1779 = vpop.permute.xlu0 %1778
  %vm1780 = vcmp.lt.s32.totalorder %v1623, 15
  %v1781 = vsel %vm1780, %v1765, %v1773
  %v1782 = vsel %vm1780, %v1767, %v1775
  %v1783 = vsel %vm1780, %v1769, %v1777
  %v1784 = vsel %vm1780, %v1771, %v1779
  %v1785 = vsel %vm1780, %v1773, %v1765
  %v1786 = vsel %vm1780, %v1775, %v1767
  %v1787 = vsel %vm1780, %v1777, %v1769
  %v1788 = vsel %vm1780, %v1779, %v1771
  %s1789 = scalar_lea.vmem %s1, 130
  %v1790 = vld [vmem:[%s1789] ss:$8 sm:$0x3]
  %1791 = vset.pattern.permute.xlu0 2
  %1792 = vperm.xlu0 %1791, %v1405
  %v1793 = vpop.permute.xlu0 %1792
  %1795 = vset.pattern.permute.xlu0 2
  %1796 = vperm.xlu0 %1795, %v1406
  %v1797 = vpop.permute.xlu0 %1796
  %1799 = vset.pattern.permute.xlu0 2
  %1800 = vperm.xlu0 %1799, %v1576
  %v1801 = vpop.permute.xlu0 %1800
  %1803 = vset.pattern.permute.xlu0 2
  %1804 = vperm.xlu0 %1803, %v1577
  %v1805 = vpop.permute.xlu0 %1804
  %v1808 = vlaneseq
  %v1809 = vshrl.u32 %v1808, 7
  %v1810 = vsub.s32 0, %v1809
  %v1811 = vrot.slane %v1790, %v1810
  %v1812 = vlaneseq
  %v1813 = vshrl.u32 %v1812, 7
  %v1814 = vsub.s32 1, %v1813
  %v1815 = vrot.slane %v1790, %v1814
  %v1818 = vmul.f32 %v1793, %v1811
  %v1819 = vmul.f32 %v1793, %v1815
  %v1820 = vmul.f32 %v1797, %v1811
  %v1821 = vmul.f32 %v1797, %v1815
  %v1822 = vmul.f32 %v1801, %v1811
  %v1823 = vmul.f32 %v1801, %v1815
  %v1824 = vmul.f32 %v1805, %v1811
  %v1825 = vmul.f32 %v1805, %v1815
  %v1826 = vmul.f32 %v1818, %v1785
  %v1827 = vmul.f32 %v1819, %v1781
  %v1828 = vmul.f32 %v1820, %v1786
  %v1829 = vmul.f32 %v1821, %v1782
  %v1830 = vmul.f32 %v1822, %v1787
  %v1831 = vmul.f32 %v1823, %v1783
  %v1832 = vmul.f32 %v1824, %v1788
  %v1833 = vmul.f32 %v1825, %v1784
  %v1834 = vadd.f32 %v1756, %v1826
  %v1835 = vadd.f32 %v1757, %v1827
  %v1836 = vadd.f32 %v1758, %v1828
  %v1837 = vadd.f32 %v1759, %v1829
  %v1838 = vadd.f32 %v1760, %v1830
  %v1839 = vadd.f32 %v1761, %v1831
  %v1840 = vadd.f32 %v1762, %v1832
  %v1841 = vadd.f32 %v1763, %v1833
  %1842 = vrot.lane.b32.xlu0 %v1364, 1
  %v1843 = vpop.permute.xlu0 %1842
  %1844 = vrot.lane.b32.xlu0 %v1366, 1
  %v1845 = vpop.permute.xlu0 %1844
  %1846 = vrot.lane.b32.xlu0 %v1540, 1
  %v1847 = vpop.permute.xlu0 %1846
  %1848 = vrot.lane.b32.xlu0 %v1542, 1
  %v1849 = vpop.permute.xlu0 %1848
  %1850 = vrot.lane.b32.xlu0 %v1365, 1
  %v1851 = vpop.permute.xlu0 %1850
  %1852 = vrot.lane.b32.xlu0 %v1367, 1
  %v1853 = vpop.permute.xlu0 %1852
  %1854 = vrot.lane.b32.xlu0 %v1541, 1
  %v1855 = vpop.permute.xlu0 %1854
  %1856 = vrot.lane.b32.xlu0 %v1543, 1
  %v1857 = vpop.permute.xlu0 %1856
  %vm1858 = vcmp.lt.s32.totalorder %v1623, 1
  %v1859 = vsel %vm1858, %v1843, %v1851
  %v1860 = vsel %vm1858, %v1845, %v1853
  %v1861 = vsel %vm1858, %v1847, %v1855
  %v1862 = vsel %vm1858, %v1849, %v1857
  %v1863 = vsel %vm1858, %v1851, %v1843
  %v1864 = vsel %vm1858, %v1853, %v1845
  %v1865 = vsel %vm1858, %v1855, %v1847
  %v1866 = vsel %vm1858, %v1857, %v1849
  %s1867 = scalar_lea.vmem %s1, 131
  %v1868 = vld [vmem:[%s1867] ss:$8 sm:$0x3]
  %1869 = vset.pattern.permute.xlu0 3
  %1870 = vperm.xlu0 %1869, %v1405
  %v1871 = vpop.permute.xlu0 %1870
  %1873 = vset.pattern.permute.xlu0 3
  %1874 = vperm.xlu0 %1873, %v1406
  %v1875 = vpop.permute.xlu0 %1874
  %1877 = vset.pattern.permute.xlu0 3
  %1878 = vperm.xlu0 %1877, %v1576
  %v1879 = vpop.permute.xlu0 %1878
  %1881 = vset.pattern.permute.xlu0 3
  %1882 = vperm.xlu0 %1881, %v1577
  %v1883 = vpop.permute.xlu0 %1882
  %v1886 = vlaneseq
  %v1887 = vshrl.u32 %v1886, 7
  %v1888 = vsub.s32 0, %v1887
  %v1889 = vrot.slane %v1868, %v1888
  %v1890 = vlaneseq
  %v1891 = vshrl.u32 %v1890, 7
  %v1892 = vsub.s32 1, %v1891
  %v1893 = vrot.slane %v1868, %v1892
  %v1896 = vmul.f32 %v1871, %v1889
  %v1897 = vmul.f32 %v1871, %v1893
  %v1898 = vmul.f32 %v1875, %v1889
  %v1899 = vmul.f32 %v1875, %v1893
  %v1900 = vmul.f32 %v1879, %v1889
  %v1901 = vmul.f32 %v1879, %v1893
  %v1902 = vmul.f32 %v1883, %v1889
  %v1903 = vmul.f32 %v1883, %v1893
  %v1904 = vmul.f32 %v1896, %v1863
  %v1905 = vmul.f32 %v1897, %v1859
  %v1906 = vmul.f32 %v1898, %v1864
  %v1907 = vmul.f32 %v1899, %v1860
  %v1908 = vmul.f32 %v1900, %v1865
  %v1909 = vmul.f32 %v1901, %v1861
  %v1910 = vmul.f32 %v1902, %v1866
  %v1911 = vmul.f32 %v1903, %v1862
  %v1912 = vadd.f32 %v1834, %v1904
  %v1913 = vadd.f32 %v1835, %v1905
  %v1914 = vadd.f32 %v1836, %v1906
  %v1915 = vadd.f32 %v1837, %v1907
  %v1916 = vadd.f32 %v1838, %v1908
  %v1917 = vadd.f32 %v1839, %v1909
  %v1918 = vadd.f32 %v1840, %v1910
  %v1919 = vadd.f32 %v1841, %v1911
  %1920 = vrot.lane.b32.xlu0 %v1364, 127
  %v1921 = vpop.permute.xlu0 %1920
  %1922 = vrot.lane.b32.xlu0 %v1366, 127
  %v1923 = vpop.permute.xlu0 %1922
  %1924 = vrot.lane.b32.xlu0 %v1540, 127
  %v1925 = vpop.permute.xlu0 %1924
  %1926 = vrot.lane.b32.xlu0 %v1542, 127
  %v1927 = vpop.permute.xlu0 %1926
  %1928 = vrot.lane.b32.xlu0 %v1365, 127
  %v1929 = vpop.permute.xlu0 %1928
  %1930 = vrot.lane.b32.xlu0 %v1367, 127
  %v1931 = vpop.permute.xlu0 %1930
  %1932 = vrot.lane.b32.xlu0 %v1541, 127
  %v1933 = vpop.permute.xlu0 %1932
  %1934 = vrot.lane.b32.xlu0 %v1543, 127
  %v1935 = vpop.permute.xlu0 %1934
  %vm1936 = vcmp.lt.s32.totalorder %v1623, 127
  %v1937 = vsel %vm1936, %v1921, %v1929
  %v1938 = vsel %vm1936, %v1923, %v1931
  %v1939 = vsel %vm1936, %v1925, %v1933
  %v1940 = vsel %vm1936, %v1927, %v1935
  %v1941 = vsel %vm1936, %v1929, %v1921
  %v1942 = vsel %vm1936, %v1931, %v1923
  %v1943 = vsel %vm1936, %v1933, %v1925
  %v1944 = vsel %vm1936, %v1935, %v1927
  %s1945 = scalar_lea.vmem %s1, 133
  %v1946 = vld [vmem:[%s1945] ss:$8 sm:$0x3]
  %1947 = vset.pattern.permute.xlu0 5
  %1948 = vperm.xlu0 %1947, %v1405
  %v1949 = vpop.permute.xlu0 %1948
  %1951 = vset.pattern.permute.xlu0 5
  %1952 = vperm.xlu0 %1951, %v1406
  %v1953 = vpop.permute.xlu0 %1952
  %1955 = vset.pattern.permute.xlu0 5
  %1956 = vperm.xlu0 %1955, %v1576
  %v1957 = vpop.permute.xlu0 %1956
  %1959 = vset.pattern.permute.xlu0 5
  %1960 = vperm.xlu0 %1959, %v1577
  %v1961 = vpop.permute.xlu0 %1960
  %v1964 = vlaneseq
  %v1965 = vshrl.u32 %v1964, 7
  %v1966 = vsub.s32 0, %v1965
  %v1967 = vrot.slane %v1946, %v1966
  %v1968 = vlaneseq
  %v1969 = vshrl.u32 %v1968, 7
  %v1970 = vsub.s32 1, %v1969
  %v1971 = vrot.slane %v1946, %v1970
  %v1974 = vmul.f32 %v1949, %v1967
  %v1975 = vmul.f32 %v1949, %v1971
  %v1976 = vmul.f32 %v1953, %v1967
  %v1977 = vmul.f32 %v1953, %v1971
  %v1978 = vmul.f32 %v1957, %v1967
  %v1979 = vmul.f32 %v1957, %v1971
  %v1980 = vmul.f32 %v1961, %v1967
  %v1981 = vmul.f32 %v1961, %v1971
  %v1982 = vmul.f32 %v1974, %v1937
  %v1983 = vmul.f32 %v1975, %v1941
  %v1984 = vmul.f32 %v1976, %v1938
  %v1985 = vmul.f32 %v1977, %v1942
  %v1986 = vmul.f32 %v1978, %v1939
  %v1987 = vmul.f32 %v1979, %v1943
  %v1988 = vmul.f32 %v1980, %v1940
  %v1989 = vmul.f32 %v1981, %v1944
  %v1990 = vadd.f32 %v1912, %v1982
  %v1991 = vadd.f32 %v1913, %v1983
  %v1992 = vadd.f32 %v1914, %v1984
  %v1993 = vadd.f32 %v1915, %v1985
  %v1994 = vadd.f32 %v1916, %v1986
  %v1995 = vadd.f32 %v1917, %v1987
  %v1996 = vadd.f32 %v1918, %v1988
  %v1997 = vadd.f32 %v1919, %v1989
  %1998 = vrot.lane.b32.xlu0 %v1364, 113
  %v1999 = vpop.permute.xlu0 %1998
  %2000 = vrot.lane.b32.xlu0 %v1366, 113
  %v2001 = vpop.permute.xlu0 %2000
  %2002 = vrot.lane.b32.xlu0 %v1540, 113
  %v2003 = vpop.permute.xlu0 %2002
  %2004 = vrot.lane.b32.xlu0 %v1542, 113
  %v2005 = vpop.permute.xlu0 %2004
  %2006 = vrot.lane.b32.xlu0 %v1365, 113
  %v2007 = vpop.permute.xlu0 %2006
  %2008 = vrot.lane.b32.xlu0 %v1367, 113
  %v2009 = vpop.permute.xlu0 %2008
  %2010 = vrot.lane.b32.xlu0 %v1541, 113
  %v2011 = vpop.permute.xlu0 %2010
  %2012 = vrot.lane.b32.xlu0 %v1543, 113
  %v2013 = vpop.permute.xlu0 %2012
  %vm2014 = vcmp.lt.s32.totalorder %v1623, 113
  %v2015 = vsel %vm2014, %v1999, %v2007
  %v2016 = vsel %vm2014, %v2001, %v2009
  %v2017 = vsel %vm2014, %v2003, %v2011
  %v2018 = vsel %vm2014, %v2005, %v2013
  %v2019 = vsel %vm2014, %v2007, %v1999
  %v2020 = vsel %vm2014, %v2009, %v2001
  %v2021 = vsel %vm2014, %v2011, %v2003
  %v2022 = vsel %vm2014, %v2013, %v2005
  %s2023 = scalar_lea.vmem %s1, 134
  %v2024 = vld [vmem:[%s2023] ss:$8 sm:$0x3]
  %2025 = vset.pattern.permute.xlu0 6
  %2026 = vperm.xlu0 %2025, %v1405
  %v2027 = vpop.permute.xlu0 %2026
  %2029 = vset.pattern.permute.xlu0 6
  %2030 = vperm.xlu0 %2029, %v1406
  %v2031 = vpop.permute.xlu0 %2030
  %2033 = vset.pattern.permute.xlu0 6
  %2034 = vperm.xlu0 %2033, %v1576
  %v2035 = vpop.permute.xlu0 %2034
  %2037 = vset.pattern.permute.xlu0 6
  %2038 = vperm.xlu0 %2037, %v1577
  %v2039 = vpop.permute.xlu0 %2038
  %v2042 = vlaneseq
  %v2043 = vshrl.u32 %v2042, 7
  %v2044 = vsub.s32 0, %v2043
  %v2045 = vrot.slane %v2024, %v2044
  %v2046 = vlaneseq
  %v2047 = vshrl.u32 %v2046, 7
  %v2048 = vsub.s32 1, %v2047
  %v2049 = vrot.slane %v2024, %v2048
  %v2052 = vmul.f32 %v2027, %v2045
  %v2053 = vmul.f32 %v2027, %v2049
  %v2054 = vmul.f32 %v2031, %v2045
  %v2055 = vmul.f32 %v2031, %v2049
  %v2056 = vmul.f32 %v2035, %v2045
  %v2057 = vmul.f32 %v2035, %v2049
  %v2058 = vmul.f32 %v2039, %v2045
  %v2059 = vmul.f32 %v2039, %v2049
  %v2060 = vmul.f32 %v2052, %v2015
  %v2061 = vmul.f32 %v2053, %v2019
  %v2062 = vmul.f32 %v2054, %v2016
  %v2063 = vmul.f32 %v2055, %v2020
  %v2064 = vmul.f32 %v2056, %v2017
  %v2065 = vmul.f32 %v2057, %v2021
  %v2066 = vmul.f32 %v2058, %v2018
  %v2067 = vmul.f32 %v2059, %v2022
  %v2068 = vadd.f32 %v1990, %v2060
  %v2069 = vadd.f32 %v1991, %v2061
  %v2070 = vadd.f32 %v1992, %v2062
  %v2071 = vadd.f32 %v1993, %v2063
  %v2072 = vadd.f32 %v1994, %v2064
  %v2073 = vadd.f32 %v1995, %v2065
  %v2074 = vadd.f32 %v1996, %v2066
  %v2075 = vadd.f32 %v1997, %v2067
  %2076 = vrot.lane.b32.xlu0 %v1364, 112
  %v2077 = vpop.permute.xlu0 %2076
  %2078 = vrot.lane.b32.xlu0 %v1366, 112
  %v2079 = vpop.permute.xlu0 %2078
  %2080 = vrot.lane.b32.xlu0 %v1540, 112
  %v2081 = vpop.permute.xlu0 %2080
  %2082 = vrot.lane.b32.xlu0 %v1542, 112
  %v2083 = vpop.permute.xlu0 %2082
  %2084 = vrot.lane.b32.xlu0 %v1365, 112
  %v2085 = vpop.permute.xlu0 %2084
  %2086 = vrot.lane.b32.xlu0 %v1367, 112
  %v2087 = vpop.permute.xlu0 %2086
  %2088 = vrot.lane.b32.xlu0 %v1541, 112
  %v2089 = vpop.permute.xlu0 %2088
  %2090 = vrot.lane.b32.xlu0 %v1543, 112
  %v2091 = vpop.permute.xlu0 %2090
  %vm2092 = vcmp.lt.s32.totalorder %v1623, 112
  %v2093 = vsel %vm2092, %v2077, %v2085
  %v2094 = vsel %vm2092, %v2079, %v2087
  %v2095 = vsel %vm2092, %v2081, %v2089
  %v2096 = vsel %vm2092, %v2083, %v2091
  %v2097 = vsel %vm2092, %v2085, %v2077
  %v2098 = vsel %vm2092, %v2087, %v2079
  %v2099 = vsel %vm2092, %v2089, %v2081
  %v2100 = vsel %vm2092, %v2091, %v2083
  %s2101 = scalar_lea.vmem %s1, 135
  %v2102 = vld [vmem:[%s2101] ss:$8 sm:$0x3]
  %2103 = vset.pattern.permute.xlu0 7
  %2104 = vperm.xlu0 %2103, %v1405
  %v2105 = vpop.permute.xlu0 %2104
  %2107 = vset.pattern.permute.xlu0 7
  %2108 = vperm.xlu0 %2107, %v1406
  %v2109 = vpop.permute.xlu0 %2108
  %2111 = vset.pattern.permute.xlu0 7
  %2112 = vperm.xlu0 %2111, %v1576
  %v2113 = vpop.permute.xlu0 %2112
  %2115 = vset.pattern.permute.xlu0 7
  %2116 = vperm.xlu0 %2115, %v1577
  %v2117 = vpop.permute.xlu0 %2116
  %v2120 = vlaneseq
  %v2121 = vshrl.u32 %v2120, 7
  %v2122 = vsub.s32 0, %v2121
  %v2123 = vrot.slane %v2102, %v2122
  %v2124 = vlaneseq
  %v2125 = vshrl.u32 %v2124, 7
  %v2126 = vsub.s32 1, %v2125
  %v2127 = vrot.slane %v2102, %v2126
  %v2130 = vmul.f32 %v2105, %v2123
  %v2131 = vmul.f32 %v2105, %v2127
  %v2132 = vmul.f32 %v2109, %v2123
  %v2133 = vmul.f32 %v2109, %v2127
  %v2134 = vmul.f32 %v2113, %v2123
  %v2135 = vmul.f32 %v2113, %v2127
  %v2136 = vmul.f32 %v2117, %v2123
  %v2137 = vmul.f32 %v2117, %v2127
  %v2138 = vmul.f32 %v2130, %v2093
  %v2139 = vmul.f32 %v2131, %v2097
  %v2140 = vmul.f32 %v2132, %v2094
  %v2141 = vmul.f32 %v2133, %v2098
  %v2142 = vmul.f32 %v2134, %v2095
  %v2143 = vmul.f32 %v2135, %v2099
  %v2144 = vmul.f32 %v2136, %v2096
  %v2145 = vmul.f32 %v2137, %v2100
  %v2146 = vadd.f32 %v2068, %v2138
  %v2147 = vadd.f32 %v2069, %v2139
  %v2148 = vadd.f32 %v2070, %v2140
  %v2149 = vadd.f32 %v2071, %v2141
  %v2150 = vadd.f32 %v2072, %v2142
  %v2151 = vadd.f32 %v2073, %v2143
  %v2152 = vadd.f32 %v2074, %v2144
  %v2153 = vadd.f32 %v2075, %v2145
  %2154 = vrot.lane.b32.xlu0 %v1364, 111
  %v2155 = vpop.permute.xlu0 %2154
  %2156 = vrot.lane.b32.xlu0 %v1366, 111
  %v2157 = vpop.permute.xlu0 %2156
  %2158 = vrot.lane.b32.xlu0 %v1540, 111
  %v2159 = vpop.permute.xlu0 %2158
  %2160 = vrot.lane.b32.xlu0 %v1542, 111
  %v2161 = vpop.permute.xlu0 %2160
  %2162 = vrot.lane.b32.xlu0 %v1365, 111
  %v2163 = vpop.permute.xlu0 %2162
  %2164 = vrot.lane.b32.xlu0 %v1367, 111
  %v2165 = vpop.permute.xlu0 %2164
  %2166 = vrot.lane.b32.xlu0 %v1541, 111
  %v2167 = vpop.permute.xlu0 %2166
  %2168 = vrot.lane.b32.xlu0 %v1543, 111
  %v2169 = vpop.permute.xlu0 %2168
  %vm2170 = vcmp.lt.s32.totalorder %v1623, 111
  %v2171 = vsel %vm2170, %v2155, %v2163
  %v2172 = vsel %vm2170, %v2157, %v2165
  %v2173 = vsel %vm2170, %v2159, %v2167
  %v2174 = vsel %vm2170, %v2161, %v2169
  %v2175 = vsel %vm2170, %v2163, %v2155
  %v2176 = vsel %vm2170, %v2165, %v2157
  %v2177 = vsel %vm2170, %v2167, %v2159
  %v2178 = vsel %vm2170, %v2169, %v2161
  %s2179 = scalar_lea.vmem %s1, 144
  %v2180 = vld [vmem:[%s2179] ss:$8 sm:$0x3]
  %2181 = vset.pattern.permute.xlu0 8
  %2182 = vperm.xlu0 %2181, %v1405
  %v2183 = vpop.permute.xlu0 %2182
  %2185 = vset.pattern.permute.xlu0 8
  %2186 = vperm.xlu0 %2185, %v1406
  %v2187 = vpop.permute.xlu0 %2186
  %2189 = vset.pattern.permute.xlu0 8
  %2190 = vperm.xlu0 %2189, %v1576
  %v2191 = vpop.permute.xlu0 %2190
  %2193 = vset.pattern.permute.xlu0 8
  %2194 = vperm.xlu0 %2193, %v1577
  %v2195 = vpop.permute.xlu0 %2194
  %v2198 = vlaneseq
  %v2199 = vshrl.u32 %v2198, 7
  %v2200 = vsub.s32 0, %v2199
  %v2201 = vrot.slane %v2180, %v2200
  %v2202 = vlaneseq
  %v2203 = vshrl.u32 %v2202, 7
  %v2204 = vsub.s32 1, %v2203
  %v2205 = vrot.slane %v2180, %v2204
  %v2208 = vmul.f32 %v2183, %v2201
  %v2209 = vmul.f32 %v2183, %v2205
  %v2210 = vmul.f32 %v2187, %v2201
  %v2211 = vmul.f32 %v2187, %v2205
  %v2212 = vmul.f32 %v2191, %v2201
  %v2213 = vmul.f32 %v2191, %v2205
  %v2214 = vmul.f32 %v2195, %v2201
  %v2215 = vmul.f32 %v2195, %v2205
  %v2216 = vmul.f32 %v2208, %v2171
  %v2217 = vmul.f32 %v2209, %v2175
  %v2218 = vmul.f32 %v2210, %v2172
  %v2219 = vmul.f32 %v2211, %v2176
  %v2220 = vmul.f32 %v2212, %v2173
  %v2221 = vmul.f32 %v2213, %v2177
  %v2222 = vmul.f32 %v2214, %v2174
  %v2223 = vmul.f32 %v2215, %v2178
  %v2224 = vadd.f32 %v2146, %v2216
  %v2225 = vadd.f32 %v2147, %v2217
  %v2226 = vadd.f32 %v2148, %v2218
  %v2227 = vadd.f32 %v2149, %v2219
  %v2228 = vadd.f32 %v2150, %v2220
  %v2229 = vadd.f32 %v2151, %v2221
  %v2230 = vadd.f32 %v2152, %v2222
  %v2231 = vadd.f32 %v2153, %v2223
  %v2232 = vld [vmem:[%s3 + $0xe0] sm:$0xff]
  %v2233 = vld [vmem:[%s3 + $0xe8] sm:$0xff]
  %v2234 = vld [vmem:[%s3 + $0xf0] sm:$0xff]
  %v2235 = vld [vmem:[%s3 + $0xf8] sm:$0xff]
  %2237 = vset.pattern.permute.xlu0 0
  %2238 = vperm.xlu0 %2237, %v2232
  %v2239 = vpop.permute.xlu0 %2238
  %2242 = vset.pattern.permute.xlu0 0
  %2243 = vperm.xlu0 %2242, %v2233
  %v2244 = vpop.permute.xlu0 %2243
  %2247 = vset.pattern.permute.xlu0 0
  %2248 = vperm.xlu0 %2247, %v2234
  %v2249 = vpop.permute.xlu0 %2248
  %2252 = vset.pattern.permute.xlu0 0
  %2253 = vperm.xlu0 %2252, %v2235
  %v2254 = vpop.permute.xlu0 %2253
  %v2256 = vadd.f32 %v2224, %v2239
  %v2257 = vadd.f32 %v2225, %v2239
  %v2258 = vadd.f32 %v2226, %v2244
  %v2259 = vadd.f32 %v2227, %v2244
  %v2260 = vadd.f32 %v2228, %v2249
  %v2261 = vadd.f32 %v2229, %v2249
  %v2262 = vadd.f32 %v2230, %v2254
  %v2263 = vadd.f32 %v2231, %v2254
  %2265 = vset.pattern.permute.xlu0 0
  %2266 = vperm.xlu0 %2265, %v1180
  %v2267 = vpop.permute.xlu0 %2266
  %2270 = vset.pattern.permute.xlu0 0
  %2271 = vperm.xlu0 %2270, %v1181
  %v2272 = vpop.permute.xlu0 %2271
  %2275 = vset.pattern.permute.xlu0 0
  %2276 = vperm.xlu0 %2275, %v1182
  %v2277 = vpop.permute.xlu0 %2276
  %2280 = vset.pattern.permute.xlu0 0
  %2281 = vperm.xlu0 %2280, %v1183
  %v2282 = vpop.permute.xlu0 %2281
  %v2284 = vmul.f32 %v2256, %v2267
  %v2285 = vmul.f32 %v2257, %v2267
  %v2286 = vmul.f32 %v2258, %v2272
  %v2287 = vmul.f32 %v2259, %v2272
  %v2288 = vmul.f32 %v2260, %v2277
  %v2289 = vmul.f32 %v2261, %v2277
  %v2290 = vmul.f32 %v2262, %v2282
  %v2291 = vmul.f32 %v2263, %v2282
  %2293 = vset.pattern.permute.xlu0 0
  %2294 = vperm.xlu0 %2293, %v1198
  %v2295 = vpop.permute.xlu0 %2294
  %2298 = vset.pattern.permute.xlu0 0
  %2299 = vperm.xlu0 %2298, %v1199
  %v2300 = vpop.permute.xlu0 %2299
  %2303 = vset.pattern.permute.xlu0 0
  %2304 = vperm.xlu0 %2303, %v1200
  %v2305 = vpop.permute.xlu0 %2304
  %2308 = vset.pattern.permute.xlu0 0
  %2309 = vperm.xlu0 %2308, %v1201
  %v2310 = vpop.permute.xlu0 %2309
  %v2312 = vadd.f32 %v2284, %v2295
  %v2313 = vadd.f32 %v2285, %v2295
  %v2314 = vadd.f32 %v2286, %v2300
  %v2315 = vadd.f32 %v2287, %v2300
  %v2316 = vadd.f32 %v2288, %v2305
  %v2317 = vadd.f32 %v2289, %v2305
  %v2318 = vadd.f32 %v2290, %v2310
  %v2319 = vadd.f32 %v2291, %v2310
  %2320 = vset.pattern.permute.xlu0 0
  %2321 = vperm.xlu0 %2320, %v1166
  %v2322 = vpop.permute.xlu0 %2321
  %2324 = vset.pattern.permute.xlu0 0
  %2325 = vperm.xlu0 %2324, %v1167
  %v2326 = vpop.permute.xlu0 %2325
  %2328 = vset.pattern.permute.xlu0 0
  %2329 = vperm.xlu0 %2328, %v1187
  %v2330 = vpop.permute.xlu0 %2329
  %2332 = vset.pattern.permute.xlu0 0
  %2333 = vperm.xlu0 %2332, %v1189
  %v2334 = vpop.permute.xlu0 %2333
  %v2336 = vmul.f32 %v2256, %v2322
  %v2337 = vmul.f32 %v2257, %v2322
  %v2338 = vmul.f32 %v2258, %v2326
  %v2339 = vmul.f32 %v2259, %v2326
  %v2340 = vmul.f32 %v2260, %v2330
  %v2341 = vmul.f32 %v2261, %v2330
  %v2342 = vmul.f32 %v2262, %v2334
  %v2343 = vmul.f32 %v2263, %v2334
  %2345 = vset.pattern.permute.xlu0 0
  %2346 = vperm.xlu0 %2345, %v1210
  %v2347 = vpop.permute.xlu0 %2346
  %2350 = vset.pattern.permute.xlu0 0
  %2351 = vperm.xlu0 %2350, %v1211
  %v2352 = vpop.permute.xlu0 %2351
  %2355 = vset.pattern.permute.xlu0 0
  %2356 = vperm.xlu0 %2355, %v1212
  %v2357 = vpop.permute.xlu0 %2356
  %2360 = vset.pattern.permute.xlu0 0
  %2361 = vperm.xlu0 %2360, %v1213
  %v2362 = vpop.permute.xlu0 %2361
  %v2364 = vadd.f32 %v2336, %v2347
  %v2365 = vadd.f32 %v2337, %v2347
  %v2366 = vadd.f32 %v2338, %v2352
  %v2367 = vadd.f32 %v2339, %v2352
  %v2368 = vadd.f32 %v2340, %v2357
  %v2369 = vadd.f32 %v2341, %v2357
  %v2370 = vadd.f32 %v2342, %v2362
  %v2371 = vadd.f32 %v2343, %v2362
  %v2372 = vmax.f32 %v2312, %v2364
  %v2373 = vmax.f32 %v2313, %v2365
  %v2374 = vmax.f32 %v2314, %v2366
  %v2375 = vmax.f32 %v2315, %v2367
  %v2376 = vmax.f32 %v2316, %v2368
  %v2377 = vmax.f32 %v2317, %v2369
  %v2378 = vmax.f32 %v2318, %v2370
  %v2379 = vmax.f32 %v2319, %v2371
  %v2380 = vmul.f32 %v2372, %v782
  %v2381 = vmul.f32 %v2373, %v783
  %v2382 = vmul.f32 %v2374, %v784
  %v2383 = vmul.f32 %v2375, %v785
  %v2384 = vmul.f32 %v2376, %v786
  %v2385 = vmul.f32 %v2377, %v787
  %v2386 = vmul.f32 %v2378, %v788
  %v2387 = vmul.f32 %v2379, %v789
  %v2388 = vld [vmem:[%s3 + $0x100] sm:$0xff]
  %v2389 = vld [vmem:[%s2 + $0x150] sm:$0xff]
  %v2390 = vld [vmem:[%s2 + $0x158] sm:$0xff]
  %v2391 = vld [vmem:[%s2 + $0x160] sm:$0xff]
  %v2392 = vld [vmem:[%s2 + $0x168] sm:$0xff]
  %s2394 = vtos %v1107
  %v2395 = vstv %s2394
  %v2397 = vmul.f32 %v2395, %v2389
  %v2398 = vrot.slane %v1107, 1
  %s2399 = vtos %v2398
  %v2400 = vstv %s2399
  %v2402 = vmul.f32 %v2400, %v2390
  %v2403 = vadd.f32 %v2397, %v2402
  %v2404 = vrot.slane %v1107, 2
  %s2405 = vtos %v2404
  %v2406 = vstv %s2405
  %v2408 = vmul.f32 %v2406, %v2391
  %v2409 = vadd.f32 %v2403, %v2408
  %v2410 = vrot.slane %v1107, 3
  %s2411 = vtos %v2410
  %v2412 = vstv %s2411
  %v2414 = vmul.f32 %v2412, %v2392
  %v2415 = vadd.f32 %v2409, %v2414
  %2417 = vset.pattern.permute.xlu0 0
  %2418 = vperm.xlu0 %2417, %v2388
  %v2419 = vpop.permute.xlu0 %2418
  %v2422 = vsel %vm160, %v2415, 0
  %2424 = vmatprep.subr.mxu0 %v2381
  %2425 = vmatpush1.msra.mxu0 %v2380
  %2426 = vmatprep.subr.mxu0 %v2383
  %2427 = vmatpush1.msra.mxu0 %v2382
  %2428 = vmatprep.subr.mxu0 0.0
  %2429 = vmatpush1.msra.mxu0 0.0
  %2430 = vmatprep.subr.mxu0 0.0
  %2431 = vmatpush1.msra.mxu0 0.0
  %2432 = vmatprep.subr.mxu0 0.0
  %2433 = vmatpush1.msra.mxu0 0.0
  %2434 = vmatprep.subr.mxu0 0.0
  %2435 = vmatpush1.msra.mxu0 0.0
  %2436 = vmatprep.subr.mxu0 0.0
  %2437 = vmatpush1.msra.mxu0 0.0
  %2438 = vmatprep.subr.mxu0 0.0
  %2439 = vmatpush1.msra.mxu0 0.0
  %2440 = vmatprep.subr.mxu0 0.0
  %2441 = vmatpush1.msra.mxu0 0.0
  %2442 = vmatprep.subr.mxu0 0.0
  %2443 = vmatpush1.msra.mxu0 0.0
  %2444 = vmatprep.subr.mxu0 0.0
  %2445 = vmatpush1.msra.mxu0 0.0
  %2446 = vmatprep.subr.mxu0 0.0
  %2447 = vmatpush1.msra.mxu0 0.0
  %2448 = vmatprep.subr.mxu0 0.0
  %2449 = vmatpush1.msra.mxu0 0.0
  %2450 = vmatprep.subr.mxu0 0.0
  %2451 = vmatpush1.msra.mxu0 0.0
  %2452 = vmatprep.subr.mxu0 0.0
  %2453 = vmatpush1.msra.mxu0 0.0
  %2454 = vmatprep.subr.mxu0 0.0
  %2455 = vmatpush1.msra.mxu0 0.0
  %2456 = vmatprep.subr.mxu0 0.0
  %2457 = vmatpush1.msra.mxu0 0.0
  %2458 = vmatprep.subr.mxu0 0.0
  %2459 = vmatpush1.msra.mxu0 0.0
  %2460 = vmatprep.subr.mxu0 0.0
  %2461 = vmatpush1.msra.mxu0 0.0
  %2462 = vmatprep.subr.mxu0 0.0
  %2463 = vmatpush1.msra.mxu0 0.0
  %2464 = vmatprep.subr.mxu0 0.0
  %2465 = vmatpush1.msra.mxu0 0.0
  %2466 = vmatprep.subr.mxu0 0.0
  %2467 = vmatpush1.msra.mxu0 0.0
  %2468 = vmatprep.subr.mxu0 0.0
  %2469 = vmatpush1.msra.mxu0 0.0
  %2470 = vmatprep.subr.mxu0 0.0
  %2471 = vmatpush1.msra.mxu0 0.0
  %2472 = vmatprep.subr.mxu0 0.0
  %2473 = vmatpush1.msra.mxu0 0.0
  %2474 = vmatprep.subr.mxu0 0.0
  %2475 = vmatpush1.msra.mxu0 0.0
  %2476 = vmatprep.subr.mxu0 0.0
  %2477 = vmatpush1.msra.mxu0 0.0
  %2478 = vmatprep.subr.mxu0 0.0
  %2479 = vmatpush1.msra.mxu0 0.0
  %2480 = vmatprep.subr.mxu0 0.0
  %2481 = vmatpush1.msra.mxu0 0.0
  %2482 = vmatprep.subr.mxu0 0.0
  %2483 = vmatpush1.msra.mxu0 0.0
  %2484 = vmatprep.subr.mxu0 0.0
  %2485 = vmatpush1.msra.mxu0 0.0
  %2486 = vmatprep.subr.mxu0 0.0
  %2487 = vmatpush1.msra.mxu0 0.0
  %2488 = vmatprep.mubr.f32.mxu0 0.0
  %2489 = vmatmul.mubr.f32.gmra.mrb[0].mxu0 %v2422
  %v2490 = vpop.f32.mrb[0].mxu0
  %v2491 = vadd.f32 %v2419, %v2490
  %v2492 = vpop.f32.mrb[0].mxu0
  %v2493 = vadd.f32 %v2419, %v2492
  %2494 = vdwg.mxu0
  %v2495 = vadd.f32 %v2491, %v17
  %v2496 = vadd.f32 %v2493, %v18
  %2497 = vrot.lane.b32.xlu0 %v1107, 127
  %v2498 = vpop.permute.xlu0 %2497
  %s2499 = vtos %v2498
  %v2500 = vstv %s2499
  %v2502 = vmul.f32 %v2500, %v2389
  %2503 = vrot.lane.b32.xlu0 %v2398, 127
  %v2504 = vpop.permute.xlu0 %2503
  %s2505 = vtos %v2504
  %v2506 = vstv %s2505
  %v2508 = vmul.f32 %v2506, %v2390
  %v2509 = vadd.f32 %v2502, %v2508
  %2510 = vrot.lane.b32.xlu0 %v2404, 127
  %v2511 = vpop.permute.xlu0 %2510
  %s2512 = vtos %v2511
  %v2513 = vstv %s2512
  %v2515 = vmul.f32 %v2513, %v2391
  %v2516 = vadd.f32 %v2509, %v2515
  %2517 = vrot.lane.b32.xlu0 %v2410, 127
  %v2518 = vpop.permute.xlu0 %2517
  %s2519 = vtos %v2518
  %v2520 = vstv %s2519
  %v2522 = vmul.f32 %v2520, %v2392
  %v2523 = vadd.f32 %v2516, %v2522
  %v2525 = vsel %vm160, %v2523, 0
  %2527 = vmatprep.subr.mxu0 %v2385
  %2528 = vmatpush1.msra.mxu0 %v2384
  %2529 = vmatprep.subr.mxu0 %v2387
  %2530 = vmatpush1.msra.mxu0 %v2386
  %2531 = vmatprep.subr.mxu0 0.0
  %2532 = vmatpush1.msra.mxu0 0.0
  %2533 = vmatprep.subr.mxu0 0.0
  %2534 = vmatpush1.msra.mxu0 0.0
  %2535 = vmatprep.subr.mxu0 0.0
  %2536 = vmatpush1.msra.mxu0 0.0
  %2537 = vmatprep.subr.mxu0 0.0
  %2538 = vmatpush1.msra.mxu0 0.0
  %2539 = vmatprep.subr.mxu0 0.0
  %2540 = vmatpush1.msra.mxu0 0.0
  %2541 = vmatprep.subr.mxu0 0.0
  %2542 = vmatpush1.msra.mxu0 0.0
  %2543 = vmatprep.subr.mxu0 0.0
  %2544 = vmatpush1.msra.mxu0 0.0
  %2545 = vmatprep.subr.mxu0 0.0
  %2546 = vmatpush1.msra.mxu0 0.0
  %2547 = vmatprep.subr.mxu0 0.0
  %2548 = vmatpush1.msra.mxu0 0.0
  %2549 = vmatprep.subr.mxu0 0.0
  %2550 = vmatpush1.msra.mxu0 0.0
  %2551 = vmatprep.subr.mxu0 0.0
  %2552 = vmatpush1.msra.mxu0 0.0
  %2553 = vmatprep.subr.mxu0 0.0
  %2554 = vmatpush1.msra.mxu0 0.0
  %2555 = vmatprep.subr.mxu0 0.0
  %2556 = vmatpush1.msra.mxu0 0.0
  %2557 = vmatprep.subr.mxu0 0.0
  %2558 = vmatpush1.msra.mxu0 0.0
  %2559 = vmatprep.subr.mxu0 0.0
  %2560 = vmatpush1.msra.mxu0 0.0
  %2561 = vmatprep.subr.mxu0 0.0
  %2562 = vmatpush1.msra.mxu0 0.0
  %2563 = vmatprep.subr.mxu0 0.0
  %2564 = vmatpush1.msra.mxu0 0.0
  %2565 = vmatprep.subr.mxu0 0.0
  %2566 = vmatpush1.msra.mxu0 0.0
  %2567 = vmatprep.subr.mxu0 0.0
  %2568 = vmatpush1.msra.mxu0 0.0
  %2569 = vmatprep.subr.mxu0 0.0
  %2570 = vmatpush1.msra.mxu0 0.0
  %2571 = vmatprep.subr.mxu0 0.0
  %2572 = vmatpush1.msra.mxu0 0.0
  %2573 = vmatprep.subr.mxu0 0.0
  %2574 = vmatpush1.msra.mxu0 0.0
  %2575 = vmatprep.subr.mxu0 0.0
  %2576 = vmatpush1.msra.mxu0 0.0
  %2577 = vmatprep.subr.mxu0 0.0
  %2578 = vmatpush1.msra.mxu0 0.0
  %2579 = vmatprep.subr.mxu0 0.0
  %2580 = vmatpush1.msra.mxu0 0.0
  %2581 = vmatprep.subr.mxu0 0.0
  %2582 = vmatpush1.msra.mxu0 0.0
  %2583 = vmatprep.subr.mxu0 0.0
  %2584 = vmatpush1.msra.mxu0 0.0
  %2585 = vmatprep.subr.mxu0 0.0
  %2586 = vmatpush1.msra.mxu0 0.0
  %2587 = vmatprep.subr.mxu0 0.0
  %2588 = vmatpush1.msra.mxu0 0.0
  %2589 = vmatprep.subr.mxu0 0.0
  %2590 = vmatpush1.msra.mxu0 0.0
  %2591 = vmatprep.mubr.f32.mxu0 0.0
  %2592 = vmatmul.mubr.f32.gmra.mrb[0].mxu0 %v2525
  %v2593 = vpop.f32.mrb[0].mxu0
  %v2594 = vadd.f32 %v2419, %v2593
  %v2595 = vpop.f32.mrb[0].mxu0
  %v2596 = vadd.f32 %v2419, %v2595
  %2597 = vdwg.mxu0
  %v2598 = vadd.f32 %v2594, %v19
  %v2599 = vadd.f32 %v2596, %v20
  %2600 = vst [vmem:[%s4] sm:$0xff] %v2495
  %2601 = vst [vmem:[%s4 + $0x8] sm:$0xff] %v2496
  %2602 = vst [vmem:[%s4 + $0x10] sm:$0xff] %v2598
  %2603 = vst [vmem:[%s4 + $0x18] sm:$0xff] %v2599
  // Predicated region
  $region18: #{dy_block_forward.1} parent=0 // pred_check
    _
  $region19: #{dy_block_forward.1} parent=0 // pred_check_branch
    %2605 = sbr.rel (0) target = $region21
  $region20: #{dy_block_forward.1} parent=0 // pred_region
    _
  $region21: #{dy_block_forward.1} parent=0 // pred_fallthru
    _
  // Predicated region
  $region22: #{dy_block_forward.1} parent=0 // pred_check
    _
  $region23: #{dy_block_forward.1} parent=0 // pred_check_branch
    %2607 = sbr.rel (0) target = $region25
  $region24: #{dy_block_forward.1} parent=0 // pred_region
    _
  $region25: #{dy_block_forward.1} parent=0 // pred_fallthru
    _

</llo_original>
